<compile_context>
chip_gen: v7x
topology: tpu7x:2x2x1
jax: 0.10.0
libtpu: 0.0.40
codegen_flags: <defaults>
</compile_context>

<pallas_src>
import numpy as np
import jax
import jax.numpy as jnp
from jax.experimental import pallas as pl
from jax.experimental.pallas import tpu as pltpu


def _decode_all_kernel(code_ref, w_ref, o_ref):
    # Single-step path: whole problem resident in VMEM.
    # code_ref: (B, L, D)   w_ref: (L, D, HW)   o_ref: (B, L, HW)
    o_ref[...] = jnp.einsum(
        "bld,ldh->blh",
        code_ref[...],
        w_ref[...],
        preferred_element_type=jnp.float32,
    ).astype(o_ref.dtype)


def _decode_one_filter_kernel(code_ref, w_ref, o_ref):
    # Gridded path (one filter per grid step, for large production shapes).
    # code_ref: (B, D)   w_ref: (D, HW)   o_ref: (B, HW)  (lane-dense, HW % 128 == 0)
    o_ref[...] = jnp.dot(
        code_ref[...], w_ref[...], preferred_element_type=jnp.float32
    ).astype(o_ref.dtype)


def grouped_linear_decoder(code, weights, size, *, vmem_budget_bytes=8 * 1024 * 1024):
    """Forward pass of groupedLinearDecoder.

    code:    (B, L, D)     -- code[:, l, :] fed to filter l
    weights: (L, D, H*W)   -- stack of weights[l].weight (out=D, in=H*W)
    size:    (L, H, W)
    returns: (B, L, H, W)
    """
    L, H, W = size
    B, L2, D = code.shape
    HW = H * W
    assert L2 == L and weights.shape == (L, D, HW)

    code = code.astype(jnp.float32)
    weights = weights.astype(jnp.float32)

    cost = pl.CostEstimate(
        flops=2 * B * L * D * HW,
        transcendentals=0,
        bytes_accessed=4 * (L * D * HW + B * L * D + B * L * HW),
    )

    itemsize = 4
    footprint = itemsize * (B * L * D + L * D * HW + B * L * HW)

    if footprint <= vmem_budget_bytes:
        # Collapsed single-step kernel: one DMA in per operand, one batched
        # MXU contraction, one unmasked lane-dense store out.
        out_blhw = pl.pallas_call(
            _decode_all_kernel,
            out_shape=jax.ShapeDtypeStruct((B, L, HW), jnp.float32),
            in_specs=[
                pl.BlockSpec((B, L, D), lambda: (0, 0, 0)),
                pl.BlockSpec((L, D, HW), lambda: (0, 0, 0)),
            ],
            out_specs=pl.BlockSpec((B, L, HW), lambda: (0, 0, 0)),
            cost_estimate=cost,
        )(code, weights)
    else:
        # Production-scale fallback: iterate filters on the grid, indexing the
        # L axis directly in the BlockSpecs (no wrapper transposes needed).
        # TODO(synk): if D*HW alone outgrows VMEM, add an HW grid axis with a
        # 128-multiple lane tile (e.g. 1024-2048) and index_map lambda l, n.
        out_blhw = pl.pallas_call(
            _decode_one_filter_kernel,
            out_shape=jax.ShapeDtypeStruct((B, L, HW), jnp.float32),
            grid=(L,),
            in_specs=[
                pl.BlockSpec((B, None, D), lambda l: (0, l, 0)),   # (B, D)
                pl.BlockSpec((None, D, HW), lambda l: (l, 0, 0)),  # (D, HW)
            ],
            out_specs=pl.BlockSpec((B, None, HW), lambda l: (0, l, 0)),
            compiler_params=pltpu.CompilerParams(
                dimension_semantics=("parallel",),  # independent filters
            ),
            cost_estimate=cost,
        )(code, weights)

    # Free reshape only; no transpose.
    return out_blhw.reshape(B, L, H, W)


if __name__ == "__main__":
    key = jax.random.PRNGKey(0)
    k_code, k_w = jax.random.split(key, 2)

    # Small shapes implied by the module: batch=2, num_filts=4, code_dim=32,
    # spatial 16x16  ->  size = (4, 16, 16).
    B, L, D, H, W = 2, 4, 32, 16, 16
    size = (L, H, W)

    code = jax.random.normal(k_code, (B, L, D), jnp.float32)
    # Stack of per-filter nn.Linear weights: weights[l].weight has shape
    # (out_features=D, in_features=H*W).
    weights = jax.random.normal(k_w, (L, D, H * W), jnp.float32) * 0.1

    out = grouped_linear_decoder(code, weights, size)
    out = jax.block_until_ready(out)

    # Pure-JAX reference of the exact PyTorch forward:
    #   x_hat[:, l] = (code[:, l] @ weights[l].weight).view(B, H, W)
    ref = jnp.einsum("bld,ldh->blh", code, weights).reshape(B, L, H, W)

    assert out.shape == (B, L, H, W), out.shape
    np.testing.assert_allclose(np.asarray(out), np.asarray(ref), rtol=1e-5, atol=1e-5)
    print("KERNEL_OK")
</pallas_src>

<mosaic_0001>
module attributes {stable_mosaic.version = 11 : i64} {
  func.func @_decode_all_kernel(%arg0: memref<2x4x32xf32, #tpu.memory_space<vmem>>, %arg1: memref<4x32x256xf32, #tpu.memory_space<vmem>>, %arg2: memref<2x4x256xf32, #tpu.memory_space<vmem>>) attributes {dimension_semantics = [], scalar_prefetch = 0 : i64, scratch_operands = 0 : i64, tpu.core_type = #tpu.core_type<tc>} {
    %c0 = arith.constant 0 : index
    %c0_0 = arith.constant 0 : index
    %c0_1 = arith.constant 0 : index
    %0 = vector.load %arg0[%c0, %c0_0, %c0_1] : memref<2x4x32xf32, #tpu.memory_space<vmem>>, vector<2x4x32xf32>
    %c0_2 = arith.constant 0 : index
    %c0_3 = arith.constant 0 : index
    %c0_4 = arith.constant 0 : index
    %1 = vector.load %arg1[%c0_2, %c0_3, %c0_4] : memref<4x32x256xf32, #tpu.memory_space<vmem>>, vector<4x32x256xf32>
    "tpu.trace_start"() <{level = 10 : i32, message = "bld,ldh->blh"}> : () -> ()
    %cst = arith.constant dense<0.000000e+00> : vector<4x256x2xf32>
    %2 = tpu.matmul %1, %0, %cst {dimension_numbers = #tpu.dot_dimension_numbers<[1], [2], [2], [0], [0, 0, 0, 2, 1, 0], [0], [1]>} : vector<4x32x256xf32>, vector<2x4x32xf32>, vector<4x256x2xf32> -> vector<4x256x2xf32>
    %3 = tpu.transpose %2, [2, 0, 1] : vector<4x256x2xf32> -> vector<2x4x256xf32>
    "tpu.trace_stop"() : () -> ()
    %c0_5 = arith.constant 0 : index
    %c0_6 = arith.constant 0 : index
    %c0_7 = arith.constant 0 : index
    %4 = vector.load %arg2[%c0_5, %c0_6, %c0_7] : memref<2x4x256xf32, #tpu.memory_space<vmem>>, vector<2x4x256xf32>
    tpu.vector_store %arg2[%c0_5, %c0_6, %c0_7], %3 {strides = array<i32>} : memref<2x4x256xf32, #tpu.memory_space<vmem>>, vector<2x4x256xf32>,
    return
  }
}

</mosaic_0001>

<llo_original>
// kernel: tpu_custom_call.1
$region0: #{tpu_custom_call.1}
  #allocation0 [shape = 'u32[]', space=smem, size = 0x4, offset = 0x4, fixed_abs, tag = 'smem constant byte address 0x4 - core index']
  #allocation1 [shape = 'u32[144,128]{1,0:T(1,128)}', space=vmem, size = 0x12000, scoped, tag = 'internal scratch']
  %s0 = inlined_call_operand.hbm [shape: f32[2,4,32], index: 0, kind: input, shape index: {}]
  %s1 = inlined_call_operand.hbm [shape: f32[4,32,256], index: 1, kind: input, shape index: {}]
  %s2 = inlined_call_operand.hbm [shape: f32[2,4,256], index: 2, kind: output, shape index: {}]
  %s3 = sld [smem:[#allocation0]]
  $region26: #{tpu_custom_call.1} parent=0
    _
  %s5 = ssub.s32 1, %s3
  %s6 = scalar_select 0, %s5, %s3
  $region1: #{tpu_custom_call.1} parent=0
    #allocation2 [shape = 'u8[4096]{0}', space=vmem, size = 0x1000, scoped, tag = 'input window, operand 0, single buffered']
    #allocation3 [shape = 's32[1]{0}', space=sflag, size = 0x4, scoped, tag = 'scoped memory for tpu_custom_call.1']
    #allocation4 [shape = 's32[1]{0}', space=sflag, size = 0x4, scoped, tag = 'scoped memory for tpu_custom_call.1']
    #allocation5 [shape = 'u8[131072]{0}', space=vmem, size = 0x20000, scoped, tag = 'input window, operand 1, single buffered']
    #allocation6 [shape = 's32[1]{0}', space=sflag, size = 0x4, scoped, tag = 'scoped memory for tpu_custom_call.1']
    #allocation7 [shape = 'u8[8192]{0}', space=vmem, size = 0x2000, scoped, tag = 'output window, operand 0, single buffered']
    %7 = vsyncpa [#allocation3], 0
    %8 = vsyncpa [#allocation6], 0
    %9 = vsyncpa [#allocation4], 0
    // Predicated region
    $region2: #{tpu_custom_call.1} parent=1 // pred_check
      _
    $region3: #{tpu_custom_call.1} parent=1 // pred_check_branch
      %11 = sbr.rel (0) target = $region5
    $region4: #{tpu_custom_call.1} parent=1 // pred_region
      %s13 = ssub.s32 128, 128
      %14 = vsyncadd [#allocation3], %s13
      %s15 = sshll.u32 [#allocation2], 4
      %s16 = int_to_ptr.vmem [resolvable:$true] %s15
      %21 = dma.hbm_to_vmem [thread:$0]  %s0, 128, %s16, [#allocation3], 64, 64, 4
    $region5: #{tpu_custom_call.1} parent=1 // pred_fallthru
      _
    // Predicated region
    $region6: #{tpu_custom_call.1} parent=1 // pred_check
      _
    $region7: #{tpu_custom_call.1} parent=1 // pred_check_branch
      %23 = sbr.rel (0) target = $region9
    $region8: #{tpu_custom_call.1} parent=1 // pred_region
      %s25 = ssub.s32 4096, 4096
      %26 = vsyncadd [#allocation6], %s25
      %s27 = sshll.u32 [#allocation5], 4
      %s28 = int_to_ptr.vmem [resolvable:$true] %s27
      %33 = dma.hbm_to_vmem [thread:$0]  %s1, 4096, %s28, [#allocation6], 256, 256, 16
    $region9: #{tpu_custom_call.1} parent=1 // pred_fallthru
      _
    // Predicated region
    $region10: #{tpu_custom_call.1} parent=1 // pred_check
      _
    $region11: #{tpu_custom_call.1} parent=1 // pred_check_branch
      %35 = sbr.rel (0) target = $region13
    $region12: #{tpu_custom_call.1} parent=1 // pred_region
      %36 = dma.done [#allocation3], 128
    $region13: #{tpu_custom_call.1} parent=1 // pred_fallthru
      _
    // Predicated region
    $region14: #{tpu_custom_call.1} parent=1 // pred_check
      _
    $region15: #{tpu_custom_call.1} parent=1 // pred_check_branch
      %38 = sbr.rel (0) target = $region17
    $region16: #{tpu_custom_call.1} parent=1 // pred_region
      %39 = dma.done [#allocation6], 4096
    $region17: #{tpu_custom_call.1} parent=1 // pred_fallthru
      _
    %v40 = vld [vmem:[#allocation2] sm:$0xf]
    %v41 = vld [vmem:[#allocation2 + $0x4] sm:$0xf]
    %v42 = vld [vmem:[#allocation5] sm:$0xff]
    %v43 = vld [vmem:[#allocation5 + $0x8] sm:$0xff]
    %v44 = vld [vmem:[#allocation5 + $0x10] sm:$0xff]
    %v45 = vld [vmem:[#allocation5 + $0x18] sm:$0xff]
    %v46 = vld [vmem:[#allocation5 + $0x20] sm:$0xff]
    %v47 = vld [vmem:[#allocation5 + $0x28] sm:$0xff]
    %v48 = vld [vmem:[#allocation5 + $0x30] sm:$0xff]
    %v49 = vld [vmem:[#allocation5 + $0x38] sm:$0xff]
    %v50 = vld [vmem:[#allocation5 + $0x40] sm:$0xff]
    %v51 = vld [vmem:[#allocation5 + $0x48] sm:$0xff]
    %v52 = vld [vmem:[#allocation5 + $0x50] sm:$0xff]
    %v53 = vld [vmem:[#allocation5 + $0x58] sm:$0xff]
    %v54 = vld [vmem:[#allocation5 + $0x60] sm:$0xff]
    %v55 = vld [vmem:[#allocation5 + $0x68] sm:$0xff]
    %v56 = vld [vmem:[#allocation5 + $0x70] sm:$0xff]
    %v57 = vld [vmem:[#allocation5 + $0x78] sm:$0xff]
    %v58 = vld [vmem:[#allocation5 + $0x80] sm:$0xff]
    %v59 = vld [vmem:[#allocation5 + $0x88] sm:$0xff]
    %v60 = vld [vmem:[#allocation5 + $0x90] sm:$0xff]
    %v61 = vld [vmem:[#allocation5 + $0x98] sm:$0xff]
    %v62 = vld [vmem:[#allocation5 + $0xa0] sm:$0xff]
    %v63 = vld [vmem:[#allocation5 + $0xa8] sm:$0xff]
    %v64 = vld [vmem:[#allocation5 + $0xb0] sm:$0xff]
    %v65 = vld [vmem:[#allocation5 + $0xb8] sm:$0xff]
    %v66 = vld [vmem:[#allocation5 + $0xc0] sm:$0xff]
    %v67 = vld [vmem:[#allocation5 + $0xc8] sm:$0xff]
    %v68 = vld [vmem:[#allocation5 + $0xd0] sm:$0xff]
    %v69 = vld [vmem:[#allocation5 + $0xd8] sm:$0xff]
    %v70 = vld [vmem:[#allocation5 + $0xe0] sm:$0xff]
    %v71 = vld [vmem:[#allocation5 + $0xe8] sm:$0xff]
    %v72 = vld [vmem:[#allocation5 + $0xf0] sm:$0xff]
    %v73 = vld [vmem:[#allocation5 + $0xf8] sm:$0xff]
    %74 = vxpose.xlu0.b32.start [1/16] %v40, 128
    %75 = vxpose.xlu0.b32.cont [2/16] 0.0, 128
    %76 = vxpose.xlu0.b32.cont [3/16] 0.0, 128
    %77 = vxpose.xlu0.b32.cont [4/16] 0.0, 128
    %78 = vxpose.xlu0.b32.cont [5/16] 0.0, 128
    %79 = vxpose.xlu0.b32.cont [6/16] 0.0, 128
    %80 = vxpose.xlu0.b32.cont [7/16] 0.0, 128
    %81 = vxpose.xlu0.b32.cont [8/16] 0.0, 128
    %82 = vxpose.xlu0.b32.cont [9/16] 0.0, 128
    %83 = vxpose.xlu0.b32.cont [10/16] 0.0, 128
    %84 = vxpose.xlu0.b32.cont [11/16] 0.0, 128
    %85 = vxpose.xlu0.b32.cont [12/16] 0.0, 128
    %86 = vxpose.xlu0.b32.cont [13/16] 0.0, 128
    %87 = vxpose.xlu0.b32.cont [14/16] 0.0, 128
    %88 = vxpose.xlu0.b32.cont [15/16] 0.0, 128
    %89 = vxpose.xlu0.b32.end [16/16] 0.0, 128
    %v90 = vpop.trf.xlu0
    %v91 = vpop.trf.xlu0
    %v92 = vpop.trf.xlu0
    %v93 = vpop.trf.xlu0
    %v94 = vpop.trf.xlu0
    %v95 = vpop.trf.xlu0
    %v96 = vpop.trf.xlu0
    %v97 = vpop.trf.xlu0
    %v98 = vpop.trf.xlu0
    %v99 = vpop.trf.xlu0
    %v100 = vpop.trf.xlu0
    %v101 = vpop.trf.xlu0
    %v102 = vpop.trf.xlu0
    %v103 = vpop.trf.xlu0
    %v104 = vpop.trf.xlu0
    %v105 = vpop.trf.xlu0
    %106 = vxpose.xlu0.b32.start [1/16] %v41, 128
    %107 = vxpose.xlu0.b32.cont [2/16] 0.0, 128
    %108 = vxpose.xlu0.b32.cont [3/16] 0.0, 128
    %109 = vxpose.xlu0.b32.cont [4/16] 0.0, 128
    %110 = vxpose.xlu0.b32.cont [5/16] 0.0, 128
    %111 = vxpose.xlu0.b32.cont [6/16] 0.0, 128
    %112 = vxpose.xlu0.b32.cont [7/16] 0.0, 128
    %113 = vxpose.xlu0.b32.cont [8/16] 0.0, 128
    %114 = vxpose.xlu0.b32.cont [9/16] 0.0, 128
    %115 = vxpose.xlu0.b32.cont [10/16] 0.0, 128
    %116 = vxpose.xlu0.b32.cont [11/16] 0.0, 128
    %117 = vxpose.xlu0.b32.cont [12/16] 0.0, 128
    %118 = vxpose.xlu0.b32.cont [13/16] 0.0, 128
    %119 = vxpose.xlu0.b32.cont [14/16] 0.0, 128
    %120 = vxpose.xlu0.b32.cont [15/16] 0.0, 128
    %121 = vxpose.xlu0.b32.end [16/16] 0.0, 128
    %v122 = vpop.trf.xlu0
    %v123 = vpop.trf.xlu0
    %v124 = vpop.trf.xlu0
    %v125 = vpop.trf.xlu0
    %v126 = vpop.trf.xlu0
    %v127 = vpop.trf.xlu0
    %v128 = vpop.trf.xlu0
    %v129 = vpop.trf.xlu0
    %v130 = vpop.trf.xlu0
    %v131 = vpop.trf.xlu0
    %v132 = vpop.trf.xlu0
    %v133 = vpop.trf.xlu0
    %v134 = vpop.trf.xlu0
    %v135 = vpop.trf.xlu0
    %v136 = vpop.trf.xlu0
    %v137 = vpop.trf.xlu0
    %v138 = vcombine.high %v90, 0.0
    %v140 = vunpack.c.l.s4 1983009808
    %v141 = vunpack.c.0.s8 %v140
    %v142 = vlaneseq
    %v143 = vshrl.u32 %v142, 7
    %v144 = vsub.s32 %v141, %v143
    %v145 = vrot.slane %v90, %v144
    %v147 = vunpack.c.l.s4 1983009808
    %v148 = vunpack.c.0.s8 %v147
    %v149 = vlaneseq
    %v150 = vshrl.u32 %v149, 7
    %v151 = vsub.s32 %v148, %v150
    %v152 = vrot.slane %v138, %v151
    %v153 = vcombine.high %v122, 0.0
    %v155 = vunpack.c.l.s4 1983009808
    %v156 = vunpack.c.0.s8 %v155
    %v157 = vlaneseq
    %v158 = vshrl.u32 %v157, 7
    %v159 = vsub.s32 %v156, %v158
    %v160 = vrot.slane %v122, %v159
    %v162 = vunpack.c.l.s4 1983009808
    %v163 = vunpack.c.0.s8 %v162
    %v164 = vlaneseq
    %v165 = vshrl.u32 %v164, 7
    %v166 = vsub.s32 %v163, %v165
    %v167 = vrot.slane %v153, %v166
    %v168 = vcombine.low %v145, %v160
    %v169 = vcombine.high %v145, %v160
    %v171 = vunpack.c.l.s4 1934713408
    %v172 = vunpack.c.0.s8 %v171
    %v173 = vlaneseq
    %v174 = vshrl.u32 %v173, 7
    %v175 = vsub.s32 %v172, %v174
    %v176 = vrot.slane %v168, %v175
    %v178 = vunpack.c.l.s4 1934713408
    %v179 = vunpack.c.0.s8 %v178
    %v180 = vlaneseq
    %v181 = vshrl.u32 %v180, 7
    %v182 = vsub.s32 %v179, %v181
    %v183 = vrot.slane %v169, %v182
    %v184 = vcombine.low %v152, %v167
    %v185 = vcombine.high %v152, %v167
    %v187 = vunpack.c.l.s4 1934713408
    %v188 = vunpack.c.0.s8 %v187
    %v189 = vlaneseq
    %v190 = vshrl.u32 %v189, 7
    %v191 = vsub.s32 %v188, %v190
    %v192 = vrot.slane %v184, %v191
    %v194 = vunpack.c.l.s4 1934713408
    %v195 = vunpack.c.0.s8 %v194
    %v196 = vlaneseq
    %v197 = vshrl.u32 %v196, 7
    %v198 = vsub.s32 %v195, %v197
    %v199 = vrot.slane %v185, %v198
    %v200 = vcombine.high %v176, 0.0
    %v201 = vcombine.high %v183, 0.0
    %v202 = vcombine.high %v192, 0.0
    %v203 = vcombine.high %v199, 0.0
    %v204 = vcombine.high %v91, 0.0
    %v206 = vunpack.c.l.s4 1983009808
    %v207 = vunpack.c.0.s8 %v206
    %v208 = vlaneseq
    %v209 = vshrl.u32 %v208, 7
    %v210 = vsub.s32 %v207, %v209
    %v211 = vrot.slane %v91, %v210
    %v213 = vunpack.c.l.s4 1983009808
    %v214 = vunpack.c.0.s8 %v213
    %v215 = vlaneseq
    %v216 = vshrl.u32 %v215, 7
    %v217 = vsub.s32 %v214, %v216
    %v218 = vrot.slane %v204, %v217
    %v219 = vcombine.high %v123, 0.0
    %v221 = vunpack.c.l.s4 1983009808
    %v222 = vunpack.c.0.s8 %v221
    %v223 = vlaneseq
    %v224 = vshrl.u32 %v223, 7
    %v225 = vsub.s32 %v222, %v224
    %v226 = vrot.slane %v123, %v225
    %v228 = vunpack.c.l.s4 1983009808
    %v229 = vunpack.c.0.s8 %v228
    %v230 = vlaneseq
    %v231 = vshrl.u32 %v230, 7
    %v232 = vsub.s32 %v229, %v231
    %v233 = vrot.slane %v219, %v232
    %v234 = vcombine.low %v211, %v226
    %v235 = vcombine.high %v211, %v226
    %v237 = vunpack.c.l.s4 1934713408
    %v238 = vunpack.c.0.s8 %v237
    %v239 = vlaneseq
    %v240 = vshrl.u32 %v239, 7
    %v241 = vsub.s32 %v238, %v240
    %v242 = vrot.slane %v234, %v241
    %v244 = vunpack.c.l.s4 1934713408
    %v245 = vunpack.c.0.s8 %v244
    %v246 = vlaneseq
    %v247 = vshrl.u32 %v246, 7
    %v248 = vsub.s32 %v245, %v247
    %v249 = vrot.slane %v235, %v248
    %v250 = vcombine.low %v218, %v233
    %v251 = vcombine.high %v218, %v233
    %v253 = vunpack.c.l.s4 1934713408
    %v254 = vunpack.c.0.s8 %v253
    %v255 = vlaneseq
    %v256 = vshrl.u32 %v255, 7
    %v257 = vsub.s32 %v254, %v256
    %v258 = vrot.slane %v250, %v257
    %v260 = vunpack.c.l.s4 1934713408
    %v261 = vunpack.c.0.s8 %v260
    %v262 = vlaneseq
    %v263 = vshrl.u32 %v262, 7
    %v264 = vsub.s32 %v261, %v263
    %v265 = vrot.slane %v251, %v264
    %v266 = vcombine.high %v242, 0.0
    %v267 = vcombine.high %v249, 0.0
    %v268 = vcombine.high %v258, 0.0
    %v269 = vcombine.high %v265, 0.0
    %v270 = vcombine.high %v92, 0.0
    %v272 = vunpack.c.l.s4 1983009808
    %v273 = vunpack.c.0.s8 %v272
    %v274 = vlaneseq
    %v275 = vshrl.u32 %v274, 7
    %v276 = vsub.s32 %v273, %v275
    %v277 = vrot.slane %v92, %v276
    %v279 = vunpack.c.l.s4 1983009808
    %v280 = vunpack.c.0.s8 %v279
    %v281 = vlaneseq
    %v282 = vshrl.u32 %v281, 7
    %v283 = vsub.s32 %v280, %v282
    %v284 = vrot.slane %v270, %v283
    %v285 = vcombine.high %v124, 0.0
    %v287 = vunpack.c.l.s4 1983009808
    %v288 = vunpack.c.0.s8 %v287
    %v289 = vlaneseq
    %v290 = vshrl.u32 %v289, 7
    %v291 = vsub.s32 %v288, %v290
    %v292 = vrot.slane %v124, %v291
    %v294 = vunpack.c.l.s4 1983009808
    %v295 = vunpack.c.0.s8 %v294
    %v296 = vlaneseq
    %v297 = vshrl.u32 %v296, 7
    %v298 = vsub.s32 %v295, %v297
    %v299 = vrot.slane %v285, %v298
    %v300 = vcombine.low %v277, %v292
    %v301 = vcombine.high %v277, %v292
    %v303 = vunpack.c.l.s4 1934713408
    %v304 = vunpack.c.0.s8 %v303
    %v305 = vlaneseq
    %v306 = vshrl.u32 %v305, 7
    %v307 = vsub.s32 %v304, %v306
    %v308 = vrot.slane %v300, %v307
    %v310 = vunpack.c.l.s4 1934713408
    %v311 = vunpack.c.0.s8 %v310
    %v312 = vlaneseq
    %v313 = vshrl.u32 %v312, 7
    %v314 = vsub.s32 %v311, %v313
    %v315 = vrot.slane %v301, %v314
    %v316 = vcombine.low %v284, %v299
    %v317 = vcombine.high %v284, %v299
    %v319 = vunpack.c.l.s4 1934713408
    %v320 = vunpack.c.0.s8 %v319
    %v321 = vlaneseq
    %v322 = vshrl.u32 %v321, 7
    %v323 = vsub.s32 %v320, %v322
    %v324 = vrot.slane %v316, %v323
    %v326 = vunpack.c.l.s4 1934713408
    %v327 = vunpack.c.0.s8 %v326
    %v328 = vlaneseq
    %v329 = vshrl.u32 %v328, 7
    %v330 = vsub.s32 %v327, %v329
    %v331 = vrot.slane %v317, %v330
    %v332 = vcombine.high %v308, 0.0
    %v333 = vcombine.high %v315, 0.0
    %v334 = vcombine.high %v324, 0.0
    %v335 = vcombine.high %v331, 0.0
    %v336 = vcombine.high %v93, 0.0
    %v338 = vunpack.c.l.s4 1983009808
    %v339 = vunpack.c.0.s8 %v338
    %v340 = vlaneseq
    %v341 = vshrl.u32 %v340, 7
    %v342 = vsub.s32 %v339, %v341
    %v343 = vrot.slane %v93, %v342
    %v345 = vunpack.c.l.s4 1983009808
    %v346 = vunpack.c.0.s8 %v345
    %v347 = vlaneseq
    %v348 = vshrl.u32 %v347, 7
    %v349 = vsub.s32 %v346, %v348
    %v350 = vrot.slane %v336, %v349
    %v351 = vcombine.high %v125, 0.0
    %v353 = vunpack.c.l.s4 1983009808
    %v354 = vunpack.c.0.s8 %v353
    %v355 = vlaneseq
    %v356 = vshrl.u32 %v355, 7
    %v357 = vsub.s32 %v354, %v356
    %v358 = vrot.slane %v125, %v357
    %v360 = vunpack.c.l.s4 1983009808
    %v361 = vunpack.c.0.s8 %v360
    %v362 = vlaneseq
    %v363 = vshrl.u32 %v362, 7
    %v364 = vsub.s32 %v361, %v363
    %v365 = vrot.slane %v351, %v364
    %v366 = vcombine.low %v343, %v358
    %v367 = vcombine.high %v343, %v358
    %v369 = vunpack.c.l.s4 1934713408
    %v370 = vunpack.c.0.s8 %v369
    %v371 = vlaneseq
    %v372 = vshrl.u32 %v371, 7
    %v373 = vsub.s32 %v370, %v372
    %v374 = vrot.slane %v366, %v373
    %v376 = vunpack.c.l.s4 1934713408
    %v377 = vunpack.c.0.s8 %v376
    %v378 = vlaneseq
    %v379 = vshrl.u32 %v378, 7
    %v380 = vsub.s32 %v377, %v379
    %v381 = vrot.slane %v367, %v380
    %v382 = vcombine.low %v350, %v365
    %v383 = vcombine.high %v350, %v365
    %v385 = vunpack.c.l.s4 1934713408
    %v386 = vunpack.c.0.s8 %v385
    %v387 = vlaneseq
    %v388 = vshrl.u32 %v387, 7
    %v389 = vsub.s32 %v386, %v388
    %v390 = vrot.slane %v382, %v389
    %v392 = vunpack.c.l.s4 1934713408
    %v393 = vunpack.c.0.s8 %v392
    %v394 = vlaneseq
    %v395 = vshrl.u32 %v394, 7
    %v396 = vsub.s32 %v393, %v395
    %v397 = vrot.slane %v383, %v396
    %v398 = vcombine.high %v374, 0.0
    %v399 = vcombine.high %v381, 0.0
    %v400 = vcombine.high %v390, 0.0
    %v401 = vcombine.high %v397, 0.0
    %402 = vxpose.xlu0.b32.start [1/16] %v176, 128
    %403 = vxpose.xlu0.b32.cont [2/16] 0.0, 128
    %404 = vxpose.xlu0.b32.cont [3/16] 0.0, 128
    %405 = vxpose.xlu0.b32.cont [4/16] 0.0, 128
    %406 = vxpose.xlu0.b32.cont [5/16] 0.0, 128
    %407 = vxpose.xlu0.b32.cont [6/16] 0.0, 128
    %408 = vxpose.xlu0.b32.cont [7/16] 0.0, 128
    %409 = vxpose.xlu0.b32.cont [8/16] 0.0, 128
    %410 = vxpose.xlu0.b32.cont [9/16] 0.0, 128
    %411 = vxpose.xlu0.b32.cont [10/16] 0.0, 128
    %412 = vxpose.xlu0.b32.cont [11/16] 0.0, 128
    %413 = vxpose.xlu0.b32.cont [12/16] 0.0, 128
    %414 = vxpose.xlu0.b32.cont [13/16] 0.0, 128
    %415 = vxpose.xlu0.b32.cont [14/16] 0.0, 128
    %416 = vxpose.xlu0.b32.cont [15/16] 0.0, 128
    %417 = vxpose.xlu0.b32.end [16/16] 0.0, 128
    %v418 = vpop.trf.xlu0
    %v419 = vpop.trf.xlu0
    %v420 = vpop.trf.xlu0
    %v421 = vpop.trf.xlu0
    %v422 = vpop.trf.xlu0
    %v423 = vpop.trf.xlu0
    %v424 = vpop.trf.xlu0
    %v425 = vpop.trf.xlu0
    %v426 = vpop.trf.xlu0
    %v427 = vpop.trf.xlu0
    %v428 = vpop.trf.xlu0
    %v429 = vpop.trf.xlu0
    %v430 = vpop.trf.xlu0
    %v431 = vpop.trf.xlu0
    %v432 = vpop.trf.xlu0
    %v433 = vpop.trf.xlu0
    %434 = vxpose.xlu0.b32.start [1/16] %v200, 128
    %435 = vxpose.xlu0.b32.cont [2/16] 0.0, 128
    %436 = vxpose.xlu0.b32.cont [3/16] 0.0, 128
    %437 = vxpose.xlu0.b32.cont [4/16] 0.0, 128
    %438 = vxpose.xlu0.b32.cont [5/16] 0.0, 128
    %439 = vxpose.xlu0.b32.cont [6/16] 0.0, 128
    %440 = vxpose.xlu0.b32.cont [7/16] 0.0, 128
    %441 = vxpose.xlu0.b32.cont [8/16] 0.0, 128
    %442 = vxpose.xlu0.b32.cont [9/16] 0.0, 128
    %443 = vxpose.xlu0.b32.cont [10/16] 0.0, 128
    %444 = vxpose.xlu0.b32.cont [11/16] 0.0, 128
    %445 = vxpose.xlu0.b32.cont [12/16] 0.0, 128
    %446 = vxpose.xlu0.b32.cont [13/16] 0.0, 128
    %447 = vxpose.xlu0.b32.cont [14/16] 0.0, 128
    %448 = vxpose.xlu0.b32.cont [15/16] 0.0, 128
    %449 = vxpose.xlu0.b32.end [16/16] 0.0, 128
    %v450 = vpop.trf.xlu0
    %v451 = vpop.trf.xlu0
    %v452 = vpop.trf.xlu0
    %v453 = vpop.trf.xlu0
    %v454 = vpop.trf.xlu0
    %v455 = vpop.trf.xlu0
    %v456 = vpop.trf.xlu0
    %v457 = vpop.trf.xlu0
    %v458 = vpop.trf.xlu0
    %v459 = vpop.trf.xlu0
    %v460 = vpop.trf.xlu0
    %v461 = vpop.trf.xlu0
    %v462 = vpop.trf.xlu0
    %v463 = vpop.trf.xlu0
    %v464 = vpop.trf.xlu0
    %v465 = vpop.trf.xlu0
    %466 = vxpose.xlu0.b32.start [1/16] %v183, 128
    %467 = vxpose.xlu0.b32.cont [2/16] 0.0, 128
    %468 = vxpose.xlu0.b32.cont [3/16] 0.0, 128
    %469 = vxpose.xlu0.b32.cont [4/16] 0.0, 128
    %470 = vxpose.xlu0.b32.cont [5/16] 0.0, 128
    %471 = vxpose.xlu0.b32.cont [6/16] 0.0, 128
    %472 = vxpose.xlu0.b32.cont [7/16] 0.0, 128
    %473 = vxpose.xlu0.b32.cont [8/16] 0.0, 128
    %474 = vxpose.xlu0.b32.cont [9/16] 0.0, 128
    %475 = vxpose.xlu0.b32.cont [10/16] 0.0, 128
    %476 = vxpose.xlu0.b32.cont [11/16] 0.0, 128
    %477 = vxpose.xlu0.b32.cont [12/16] 0.0, 128
    %478 = vxpose.xlu0.b32.cont [13/16] 0.0, 128
    %479 = vxpose.xlu0.b32.cont [14/16] 0.0, 128
    %480 = vxpose.xlu0.b32.cont [15/16] 0.0, 128
    %481 = vxpose.xlu0.b32.end [16/16] 0.0, 128
    %v482 = vpop.trf.xlu0
    %v483 = vpop.trf.xlu0
    %v484 = vpop.trf.xlu0
    %v485 = vpop.trf.xlu0
    %v486 = vpop.trf.xlu0
    %v487 = vpop.trf.xlu0
    %v488 = vpop.trf.xlu0
    %v489 = vpop.trf.xlu0
    %v490 = vpop.trf.xlu0
    %v491 = vpop.trf.xlu0
    %v492 = vpop.trf.xlu0
    %v493 = vpop.trf.xlu0
    %v494 = vpop.trf.xlu0
    %v495 = vpop.trf.xlu0
    %v496 = vpop.trf.xlu0
    %v497 = vpop.trf.xlu0
    %498 = vxpose.xlu0.b32.start [1/16] %v201, 128
    %499 = vxpose.xlu0.b32.cont [2/16] 0.0, 128
    %500 = vxpose.xlu0.b32.cont [3/16] 0.0, 128
    %501 = vxpose.xlu0.b32.cont [4/16] 0.0, 128
    %502 = vxpose.xlu0.b32.cont [5/16] 0.0, 128
    %503 = vxpose.xlu0.b32.cont [6/16] 0.0, 128
    %504 = vxpose.xlu0.b32.cont [7/16] 0.0, 128
    %505 = vxpose.xlu0.b32.cont [8/16] 0.0, 128
    %506 = vxpose.xlu0.b32.cont [9/16] 0.0, 128
    %507 = vxpose.xlu0.b32.cont [10/16] 0.0, 128
    %508 = vxpose.xlu0.b32.cont [11/16] 0.0, 128
    %509 = vxpose.xlu0.b32.cont [12/16] 0.0, 128
    %510 = vxpose.xlu0.b32.cont [13/16] 0.0, 128
    %511 = vxpose.xlu0.b32.cont [14/16] 0.0, 128
    %512 = vxpose.xlu0.b32.cont [15/16] 0.0, 128
    %513 = vxpose.xlu0.b32.end [16/16] 0.0, 128
    %v514 = vpop.trf.xlu0
    %v515 = vpop.trf.xlu0
    %v516 = vpop.trf.xlu0
    %v517 = vpop.trf.xlu0
    %v518 = vpop.trf.xlu0
    %v519 = vpop.trf.xlu0
    %v520 = vpop.trf.xlu0
    %v521 = vpop.trf.xlu0
    %v522 = vpop.trf.xlu0
    %v523 = vpop.trf.xlu0
    %v524 = vpop.trf.xlu0
    %v525 = vpop.trf.xlu0
    %v526 = vpop.trf.xlu0
    %v527 = vpop.trf.xlu0
    %v528 = vpop.trf.xlu0
    %v529 = vpop.trf.xlu0
    %530 = vxpose.xlu0.b32.start [1/16] %v192, 128
    %531 = vxpose.xlu0.b32.cont [2/16] 0.0, 128
    %532 = vxpose.xlu0.b32.cont [3/16] 0.0, 128
    %533 = vxpose.xlu0.b32.cont [4/16] 0.0, 128
    %534 = vxpose.xlu0.b32.cont [5/16] 0.0, 128
    %535 = vxpose.xlu0.b32.cont [6/16] 0.0, 128
    %536 = vxpose.xlu0.b32.cont [7/16] 0.0, 128
    %537 = vxpose.xlu0.b32.cont [8/16] 0.0, 128
    %538 = vxpose.xlu0.b32.cont [9/16] 0.0, 128
    %539 = vxpose.xlu0.b32.cont [10/16] 0.0, 128
    %540 = vxpose.xlu0.b32.cont [11/16] 0.0, 128
    %541 = vxpose.xlu0.b32.cont [12/16] 0.0, 128
    %542 = vxpose.xlu0.b32.cont [13/16] 0.0, 128
    %543 = vxpose.xlu0.b32.cont [14/16] 0.0, 128
    %544 = vxpose.xlu0.b32.cont [15/16] 0.0, 128
    %545 = vxpose.xlu0.b32.end [16/16] 0.0, 128
    %v546 = vpop.trf.xlu0
    %v547 = vpop.trf.xlu0
    %v548 = vpop.trf.xlu0
    %v549 = vpop.trf.xlu0
    %v550 = vpop.trf.xlu0
    %v551 = vpop.trf.xlu0
    %v552 = vpop.trf.xlu0
    %v553 = vpop.trf.xlu0
    %v554 = vpop.trf.xlu0
    %v555 = vpop.trf.xlu0
    %v556 = vpop.trf.xlu0
    %v557 = vpop.trf.xlu0
    %v558 = vpop.trf.xlu0
    %v559 = vpop.trf.xlu0
    %v560 = vpop.trf.xlu0
    %v561 = vpop.trf.xlu0
    %562 = vxpose.xlu0.b32.start [1/16] %v202, 128
    %563 = vxpose.xlu0.b32.cont [2/16] 0.0, 128
    %564 = vxpose.xlu0.b32.cont [3/16] 0.0, 128
    %565 = vxpose.xlu0.b32.cont [4/16] 0.0, 128
    %566 = vxpose.xlu0.b32.cont [5/16] 0.0, 128
    %567 = vxpose.xlu0.b32.cont [6/16] 0.0, 128
    %568 = vxpose.xlu0.b32.cont [7/16] 0.0, 128
    %569 = vxpose.xlu0.b32.cont [8/16] 0.0, 128
    %570 = vxpose.xlu0.b32.cont [9/16] 0.0, 128
    %571 = vxpose.xlu0.b32.cont [10/16] 0.0, 128
    %572 = vxpose.xlu0.b32.cont [11/16] 0.0, 128
    %573 = vxpose.xlu0.b32.cont [12/16] 0.0, 128
    %574 = vxpose.xlu0.b32.cont [13/16] 0.0, 128
    %575 = vxpose.xlu0.b32.cont [14/16] 0.0, 128
    %576 = vxpose.xlu0.b32.cont [15/16] 0.0, 128
    %577 = vxpose.xlu0.b32.end [16/16] 0.0, 128
    %v578 = vpop.trf.xlu0
    %v579 = vpop.trf.xlu0
    %v580 = vpop.trf.xlu0
    %v581 = vpop.trf.xlu0
    %v582 = vpop.trf.xlu0
    %v583 = vpop.trf.xlu0
    %v584 = vpop.trf.xlu0
    %v585 = vpop.trf.xlu0
    %v586 = vpop.trf.xlu0
    %v587 = vpop.trf.xlu0
    %v588 = vpop.trf.xlu0
    %v589 = vpop.trf.xlu0
    %v590 = vpop.trf.xlu0
    %v591 = vpop.trf.xlu0
    %v592 = vpop.trf.xlu0
    %v593 = vpop.trf.xlu0
    %594 = vxpose.xlu0.b32.start [1/16] %v199, 128
    %595 = vxpose.xlu0.b32.cont [2/16] 0.0, 128
    %596 = vxpose.xlu0.b32.cont [3/16] 0.0, 128
    %597 = vxpose.xlu0.b32.cont [4/16] 0.0, 128
    %598 = vxpose.xlu0.b32.cont [5/16] 0.0, 128
    %599 = vxpose.xlu0.b32.cont [6/16] 0.0, 128
    %600 = vxpose.xlu0.b32.cont [7/16] 0.0, 128
    %601 = vxpose.xlu0.b32.cont [8/16] 0.0, 128
    %602 = vxpose.xlu0.b32.cont [9/16] 0.0, 128
    %603 = vxpose.xlu0.b32.cont [10/16] 0.0, 128
    %604 = vxpose.xlu0.b32.cont [11/16] 0.0, 128
    %605 = vxpose.xlu0.b32.cont [12/16] 0.0, 128
    %606 = vxpose.xlu0.b32.cont [13/16] 0.0, 128
    %607 = vxpose.xlu0.b32.cont [14/16] 0.0, 128
    %608 = vxpose.xlu0.b32.cont [15/16] 0.0, 128
    %609 = vxpose.xlu0.b32.end [16/16] 0.0, 128
    %v610 = vpop.trf.xlu0
    %v611 = vpop.trf.xlu0
    %v612 = vpop.trf.xlu0
    %v613 = vpop.trf.xlu0
    %v614 = vpop.trf.xlu0
    %v615 = vpop.trf.xlu0
    %v616 = vpop.trf.xlu0
    %v617 = vpop.trf.xlu0
    %v618 = vpop.trf.xlu0
    %v619 = vpop.trf.xlu0
    %v620 = vpop.trf.xlu0
    %v621 = vpop.trf.xlu0
    %v622 = vpop.trf.xlu0
    %v623 = vpop.trf.xlu0
    %v624 = vpop.trf.xlu0
    %v625 = vpop.trf.xlu0
    %626 = vxpose.xlu0.b32.start [1/16] %v203, 128
    %627 = vxpose.xlu0.b32.cont [2/16] 0.0, 128
    %628 = vxpose.xlu0.b32.cont [3/16] 0.0, 128
    %629 = vxpose.xlu0.b32.cont [4/16] 0.0, 128
    %630 = vxpose.xlu0.b32.cont [5/16] 0.0, 128
    %631 = vxpose.xlu0.b32.cont [6/16] 0.0, 128
    %632 = vxpose.xlu0.b32.cont [7/16] 0.0, 128
    %633 = vxpose.xlu0.b32.cont [8/16] 0.0, 128
    %634 = vxpose.xlu0.b32.cont [9/16] 0.0, 128
    %635 = vxpose.xlu0.b32.cont [10/16] 0.0, 128
    %636 = vxpose.xlu0.b32.cont [11/16] 0.0, 128
    %637 = vxpose.xlu0.b32.cont [12/16] 0.0, 128
    %638 = vxpose.xlu0.b32.cont [13/16] 0.0, 128
    %639 = vxpose.xlu0.b32.cont [14/16] 0.0, 128
    %640 = vxpose.xlu0.b32.cont [15/16] 0.0, 128
    %641 = vxpose.xlu0.b32.end [16/16] 0.0, 128
    %v642 = vpop.trf.xlu0
    %v643 = vpop.trf.xlu0
    %v644 = vpop.trf.xlu0
    %v645 = vpop.trf.xlu0
    %v646 = vpop.trf.xlu0
    %v647 = vpop.trf.xlu0
    %v648 = vpop.trf.xlu0
    %v649 = vpop.trf.xlu0
    %v650 = vpop.trf.xlu0
    %v651 = vpop.trf.xlu0
    %v652 = vpop.trf.xlu0
    %v653 = vpop.trf.xlu0
    %v654 = vpop.trf.xlu0
    %v655 = vpop.trf.xlu0
    %v656 = vpop.trf.xlu0
    %v657 = vpop.trf.xlu0
    %658 = vxpose.xlu0.b32.start [1/16] %v242, 128
    %659 = vxpose.xlu0.b32.cont [2/16] 0.0, 128
    %660 = vxpose.xlu0.b32.cont [3/16] 0.0, 128
    %661 = vxpose.xlu0.b32.cont [4/16] 0.0, 128
    %662 = vxpose.xlu0.b32.cont [5/16] 0.0, 128
    %663 = vxpose.xlu0.b32.cont [6/16] 0.0, 128
    %664 = vxpose.xlu0.b32.cont [7/16] 0.0, 128
    %665 = vxpose.xlu0.b32.cont [8/16] 0.0, 128
    %666 = vxpose.xlu0.b32.cont [9/16] 0.0, 128
    %667 = vxpose.xlu0.b32.cont [10/16] 0.0, 128
    %668 = vxpose.xlu0.b32.cont [11/16] 0.0, 128
    %669 = vxpose.xlu0.b32.cont [12/16] 0.0, 128
    %670 = vxpose.xlu0.b32.cont [13/16] 0.0, 128
    %671 = vxpose.xlu0.b32.cont [14/16] 0.0, 128
    %672 = vxpose.xlu0.b32.cont [15/16] 0.0, 128
    %673 = vxpose.xlu0.b32.end [16/16] 0.0, 128
    %v674 = vpop.trf.xlu0
    %v675 = vpop.trf.xlu0
    %v676 = vpop.trf.xlu0
    %v677 = vpop.trf.xlu0
    %v678 = vpop.trf.xlu0
    %v679 = vpop.trf.xlu0
    %v680 = vpop.trf.xlu0
    %v681 = vpop.trf.xlu0
    %v682 = vpop.trf.xlu0
    %v683 = vpop.trf.xlu0
    %v684 = vpop.trf.xlu0
    %v685 = vpop.trf.xlu0
    %v686 = vpop.trf.xlu0
    %v687 = vpop.trf.xlu0
    %v688 = vpop.trf.xlu0
    %v689 = vpop.trf.xlu0
    %690 = vxpose.xlu0.b32.start [1/16] %v266, 128
    %691 = vxpose.xlu0.b32.cont [2/16] 0.0, 128
    %692 = vxpose.xlu0.b32.cont [3/16] 0.0, 128
    %693 = vxpose.xlu0.b32.cont [4/16] 0.0, 128
    %694 = vxpose.xlu0.b32.cont [5/16] 0.0, 128
    %695 = vxpose.xlu0.b32.cont [6/16] 0.0, 128
    %696 = vxpose.xlu0.b32.cont [7/16] 0.0, 128
    %697 = vxpose.xlu0.b32.cont [8/16] 0.0, 128
    %698 = vxpose.xlu0.b32.cont [9/16] 0.0, 128
    %699 = vxpose.xlu0.b32.cont [10/16] 0.0, 128
    %700 = vxpose.xlu0.b32.cont [11/16] 0.0, 128
    %701 = vxpose.xlu0.b32.cont [12/16] 0.0, 128
    %702 = vxpose.xlu0.b32.cont [13/16] 0.0, 128
    %703 = vxpose.xlu0.b32.cont [14/16] 0.0, 128
    %704 = vxpose.xlu0.b32.cont [15/16] 0.0, 128
    %705 = vxpose.xlu0.b32.end [16/16] 0.0, 128
    %v706 = vpop.trf.xlu0
    %v707 = vpop.trf.xlu0
    %v708 = vpop.trf.xlu0
    %v709 = vpop.trf.xlu0
    %v710 = vpop.trf.xlu0
    %v711 = vpop.trf.xlu0
    %v712 = vpop.trf.xlu0
    %v713 = vpop.trf.xlu0
    %v714 = vpop.trf.xlu0
    %v715 = vpop.trf.xlu0
    %v716 = vpop.trf.xlu0
    %v717 = vpop.trf.xlu0
    %v718 = vpop.trf.xlu0
    %v719 = vpop.trf.xlu0
    %v720 = vpop.trf.xlu0
    %v721 = vpop.trf.xlu0
    %722 = vxpose.xlu0.b32.start [1/16] %v249, 128
    %723 = vxpose.xlu0.b32.cont [2/16] 0.0, 128
    %724 = vxpose.xlu0.b32.cont [3/16] 0.0, 128
    %725 = vxpose.xlu0.b32.cont [4/16] 0.0, 128
    %726 = vxpose.xlu0.b32.cont [5/16] 0.0, 128
    %727 = vxpose.xlu0.b32.cont [6/16] 0.0, 128
    %728 = vxpose.xlu0.b32.cont [7/16] 0.0, 128
    %729 = vxpose.xlu0.b32.cont [8/16] 0.0, 128
    %730 = vxpose.xlu0.b32.cont [9/16] 0.0, 128
    %731 = vxpose.xlu0.b32.cont [10/16] 0.0, 128
    %732 = vxpose.xlu0.b32.cont [11/16] 0.0, 128
    %733 = vxpose.xlu0.b32.cont [12/16] 0.0, 128
    %734 = vxpose.xlu0.b32.cont [13/16] 0.0, 128
    %735 = vxpose.xlu0.b32.cont [14/16] 0.0, 128
    %736 = vxpose.xlu0.b32.cont [15/16] 0.0, 128
    %737 = vxpose.xlu0.b32.end [16/16] 0.0, 128
    %v738 = vpop.trf.xlu0
    %v739 = vpop.trf.xlu0
    %v740 = vpop.trf.xlu0
    %v741 = vpop.trf.xlu0
    %v742 = vpop.trf.xlu0
    %v743 = vpop.trf.xlu0
    %v744 = vpop.trf.xlu0
    %v745 = vpop.trf.xlu0
    %v746 = vpop.trf.xlu0
    %v747 = vpop.trf.xlu0
    %v748 = vpop.trf.xlu0
    %v749 = vpop.trf.xlu0
    %v750 = vpop.trf.xlu0
    %v751 = vpop.trf.xlu0
    %v752 = vpop.trf.xlu0
    %v753 = vpop.trf.xlu0
    %754 = vxpose.xlu0.b32.start [1/16] %v267, 128
    %755 = vxpose.xlu0.b32.cont [2/16] 0.0, 128
    %756 = vxpose.xlu0.b32.cont [3/16] 0.0, 128
    %757 = vxpose.xlu0.b32.cont [4/16] 0.0, 128
    %758 = vxpose.xlu0.b32.cont [5/16] 0.0, 128
    %759 = vxpose.xlu0.b32.cont [6/16] 0.0, 128
    %760 = vxpose.xlu0.b32.cont [7/16] 0.0, 128
    %761 = vxpose.xlu0.b32.cont [8/16] 0.0, 128
    %762 = vxpose.xlu0.b32.cont [9/16] 0.0, 128
    %763 = vxpose.xlu0.b32.cont [10/16] 0.0, 128
    %764 = vxpose.xlu0.b32.cont [11/16] 0.0, 128
    %765 = vxpose.xlu0.b32.cont [12/16] 0.0, 128
    %766 = vxpose.xlu0.b32.cont [13/16] 0.0, 128
    %767 = vxpose.xlu0.b32.cont [14/16] 0.0, 128
    %768 = vxpose.xlu0.b32.cont [15/16] 0.0, 128
    %769 = vxpose.xlu0.b32.end [16/16] 0.0, 128
    %v770 = vpop.trf.xlu0
    %v771 = vpop.trf.xlu0
    %v772 = vpop.trf.xlu0
    %v773 = vpop.trf.xlu0
    %v774 = vpop.trf.xlu0
    %v775 = vpop.trf.xlu0
    %v776 = vpop.trf.xlu0
    %v777 = vpop.trf.xlu0
    %v778 = vpop.trf.xlu0
    %v779 = vpop.trf.xlu0
    %v780 = vpop.trf.xlu0
    %v781 = vpop.trf.xlu0
    %v782 = vpop.trf.xlu0
    %v783 = vpop.trf.xlu0
    %v784 = vpop.trf.xlu0
    %v785 = vpop.trf.xlu0
    %786 = vxpose.xlu0.b32.start [1/16] %v258, 128
    %787 = vxpose.xlu0.b32.cont [2/16] 0.0, 128
    %788 = vxpose.xlu0.b32.cont [3/16] 0.0, 128
    %789 = vxpose.xlu0.b32.cont [4/16] 0.0, 128
    %790 = vxpose.xlu0.b32.cont [5/16] 0.0, 128
    %791 = vxpose.xlu0.b32.cont [6/16] 0.0, 128
    %792 = vxpose.xlu0.b32.cont [7/16] 0.0, 128
    %793 = vxpose.xlu0.b32.cont [8/16] 0.0, 128
    %794 = vxpose.xlu0.b32.cont [9/16] 0.0, 128
    %795 = vxpose.xlu0.b32.cont [10/16] 0.0, 128
    %796 = vxpose.xlu0.b32.cont [11/16] 0.0, 128
    %797 = vxpose.xlu0.b32.cont [12/16] 0.0, 128
    %798 = vxpose.xlu0.b32.cont [13/16] 0.0, 128
    %799 = vxpose.xlu0.b32.cont [14/16] 0.0, 128
    %800 = vxpose.xlu0.b32.cont [15/16] 0.0, 128
    %801 = vxpose.xlu0.b32.end [16/16] 0.0, 128
    %v802 = vpop.trf.xlu0
    %v803 = vpop.trf.xlu0
    %v804 = vpop.trf.xlu0
    %v805 = vpop.trf.xlu0
    %v806 = vpop.trf.xlu0
    %v807 = vpop.trf.xlu0
    %v808 = vpop.trf.xlu0
    %v809 = vpop.trf.xlu0
    %v810 = vpop.trf.xlu0
    %v811 = vpop.trf.xlu0
    %v812 = vpop.trf.xlu0
    %v813 = vpop.trf.xlu0
    %v814 = vpop.trf.xlu0
    %v815 = vpop.trf.xlu0
    %v816 = vpop.trf.xlu0
    %v817 = vpop.trf.xlu0
    %818 = vxpose.xlu0.b32.start [1/16] %v268, 128
    %819 = vxpose.xlu0.b32.cont [2/16] 0.0, 128
    %820 = vxpose.xlu0.b32.cont [3/16] 0.0, 128
    %821 = vxpose.xlu0.b32.cont [4/16] 0.0, 128
    %822 = vxpose.xlu0.b32.cont [5/16] 0.0, 128
    %823 = vxpose.xlu0.b32.cont [6/16] 0.0, 128
    %824 = vxpose.xlu0.b32.cont [7/16] 0.0, 128
    %825 = vxpose.xlu0.b32.cont [8/16] 0.0, 128
    %826 = vxpose.xlu0.b32.cont [9/16] 0.0, 128
    %827 = vxpose.xlu0.b32.cont [10/16] 0.0, 128
    %828 = vxpose.xlu0.b32.cont [11/16] 0.0, 128
    %829 = vxpose.xlu0.b32.cont [12/16] 0.0, 128
    %830 = vxpose.xlu0.b32.cont [13/16] 0.0, 128
    %831 = vxpose.xlu0.b32.cont [14/16] 0.0, 128
    %832 = vxpose.xlu0.b32.cont [15/16] 0.0, 128
    %833 = vxpose.xlu0.b32.end [16/16] 0.0, 128
    %v834 = vpop.trf.xlu0
    %v835 = vpop.trf.xlu0
    %v836 = vpop.trf.xlu0
    %v837 = vpop.trf.xlu0
    %v838 = vpop.trf.xlu0
    %v839 = vpop.trf.xlu0
    %v840 = vpop.trf.xlu0
    %v841 = vpop.trf.xlu0
    %v842 = vpop.trf.xlu0
    %v843 = vpop.trf.xlu0
    %v844 = vpop.trf.xlu0
    %v845 = vpop.trf.xlu0
    %v846 = vpop.trf.xlu0
    %v847 = vpop.trf.xlu0
    %v848 = vpop.trf.xlu0
    %v849 = vpop.trf.xlu0
    %850 = vxpose.xlu0.b32.start [1/16] %v265, 128
    %851 = vxpose.xlu0.b32.cont [2/16] 0.0, 128
    %852 = vxpose.xlu0.b32.cont [3/16] 0.0, 128
    %853 = vxpose.xlu0.b32.cont [4/16] 0.0, 128
    %854 = vxpose.xlu0.b32.cont [5/16] 0.0, 128
    %855 = vxpose.xlu0.b32.cont [6/16] 0.0, 128
    %856 = vxpose.xlu0.b32.cont [7/16] 0.0, 128
    %857 = vxpose.xlu0.b32.cont [8/16] 0.0, 128
    %858 = vxpose.xlu0.b32.cont [9/16] 0.0, 128
    %859 = vxpose.xlu0.b32.cont [10/16] 0.0, 128
    %860 = vxpose.xlu0.b32.cont [11/16] 0.0, 128
    %861 = vxpose.xlu0.b32.cont [12/16] 0.0, 128
    %862 = vxpose.xlu0.b32.cont [13/16] 0.0, 128
    %863 = vxpose.xlu0.b32.cont [14/16] 0.0, 128
    %864 = vxpose.xlu0.b32.cont [15/16] 0.0, 128
    %865 = vxpose.xlu0.b32.end [16/16] 0.0, 128
    %v866 = vpop.trf.xlu0
    %v867 = vpop.trf.xlu0
    %v868 = vpop.trf.xlu0
    %v869 = vpop.trf.xlu0
    %v870 = vpop.trf.xlu0
    %v871 = vpop.trf.xlu0
    %v872 = vpop.trf.xlu0
    %v873 = vpop.trf.xlu0
    %v874 = vpop.trf.xlu0
    %v875 = vpop.trf.xlu0
    %v876 = vpop.trf.xlu0
    %v877 = vpop.trf.xlu0
    %v878 = vpop.trf.xlu0
    %v879 = vpop.trf.xlu0
    %v880 = vpop.trf.xlu0
    %v881 = vpop.trf.xlu0
    %882 = vxpose.xlu0.b32.start [1/16] %v269, 128
    %883 = vxpose.xlu0.b32.cont [2/16] 0.0, 128
    %884 = vxpose.xlu0.b32.cont [3/16] 0.0, 128
    %885 = vxpose.xlu0.b32.cont [4/16] 0.0, 128
    %886 = vxpose.xlu0.b32.cont [5/16] 0.0, 128
    %887 = vxpose.xlu0.b32.cont [6/16] 0.0, 128
    %888 = vxpose.xlu0.b32.cont [7/16] 0.0, 128
    %889 = vxpose.xlu0.b32.cont [8/16] 0.0, 128
    %890 = vxpose.xlu0.b32.cont [9/16] 0.0, 128
    %891 = vxpose.xlu0.b32.cont [10/16] 0.0, 128
    %892 = vxpose.xlu0.b32.cont [11/16] 0.0, 128
    %893 = vxpose.xlu0.b32.cont [12/16] 0.0, 128
    %894 = vxpose.xlu0.b32.cont [13/16] 0.0, 128
    %895 = vxpose.xlu0.b32.cont [14/16] 0.0, 128
    %896 = vxpose.xlu0.b32.cont [15/16] 0.0, 128
    %897 = vxpose.xlu0.b32.end [16/16] 0.0, 128
    %v898 = vpop.trf.xlu0
    %v899 = vpop.trf.xlu0
    %v900 = vpop.trf.xlu0
    %v901 = vpop.trf.xlu0
    %v902 = vpop.trf.xlu0
    %v903 = vpop.trf.xlu0
    %v904 = vpop.trf.xlu0
    %v905 = vpop.trf.xlu0
    %v906 = vpop.trf.xlu0
    %v907 = vpop.trf.xlu0
    %v908 = vpop.trf.xlu0
    %v909 = vpop.trf.xlu0
    %v910 = vpop.trf.xlu0
    %v911 = vpop.trf.xlu0
    %v912 = vpop.trf.xlu0
    %v913 = vpop.trf.xlu0
    %914 = vxpose.xlu0.b32.start [1/16] %v308, 128
    %915 = vxpose.xlu0.b32.cont [2/16] 0.0, 128
    %916 = vxpose.xlu0.b32.cont [3/16] 0.0, 128
    %917 = vxpose.xlu0.b32.cont [4/16] 0.0, 128
    %918 = vxpose.xlu0.b32.cont [5/16] 0.0, 128
    %919 = vxpose.xlu0.b32.cont [6/16] 0.0, 128
    %920 = vxpose.xlu0.b32.cont [7/16] 0.0, 128
    %921 = vxpose.xlu0.b32.cont [8/16] 0.0, 128
    %922 = vxpose.xlu0.b32.cont [9/16] 0.0, 128
    %923 = vxpose.xlu0.b32.cont [10/16] 0.0, 128
    %924 = vxpose.xlu0.b32.cont [11/16] 0.0, 128
    %925 = vxpose.xlu0.b32.cont [12/16] 0.0, 128
    %926 = vxpose.xlu0.b32.cont [13/16] 0.0, 128
    %927 = vxpose.xlu0.b32.cont [14/16] 0.0, 128
    %928 = vxpose.xlu0.b32.cont [15/16] 0.0, 128
    %929 = vxpose.xlu0.b32.end [16/16] 0.0, 128
    %v930 = vpop.trf.xlu0
    %v931 = vpop.trf.xlu0
    %v932 = vpop.trf.xlu0
    %v933 = vpop.trf.xlu0
    %v934 = vpop.trf.xlu0
    %v935 = vpop.trf.xlu0
    %v936 = vpop.trf.xlu0
    %v937 = vpop.trf.xlu0
    %v938 = vpop.trf.xlu0
    %v939 = vpop.trf.xlu0
    %v940 = vpop.trf.xlu0
    %v941 = vpop.trf.xlu0
    %v942 = vpop.trf.xlu0
    %v943 = vpop.trf.xlu0
    %v944 = vpop.trf.xlu0
    %v945 = vpop.trf.xlu0
    %946 = vxpose.xlu0.b32.start [1/16] %v332, 128
    %947 = vxpose.xlu0.b32.cont [2/16] 0.0, 128
    %948 = vxpose.xlu0.b32.cont [3/16] 0.0, 128
    %949 = vxpose.xlu0.b32.cont [4/16] 0.0, 128
    %950 = vxpose.xlu0.b32.cont [5/16] 0.0, 128
    %951 = vxpose.xlu0.b32.cont [6/16] 0.0, 128
    %952 = vxpose.xlu0.b32.cont [7/16] 0.0, 128
    %953 = vxpose.xlu0.b32.cont [8/16] 0.0, 128
    %954 = vxpose.xlu0.b32.cont [9/16] 0.0, 128
    %955 = vxpose.xlu0.b32.cont [10/16] 0.0, 128
    %956 = vxpose.xlu0.b32.cont [11/16] 0.0, 128
    %957 = vxpose.xlu0.b32.cont [12/16] 0.0, 128
    %958 = vxpose.xlu0.b32.cont [13/16] 0.0, 128
    %959 = vxpose.xlu0.b32.cont [14/16] 0.0, 128
    %960 = vxpose.xlu0.b32.cont [15/16] 0.0, 128
    %961 = vxpose.xlu0.b32.end [16/16] 0.0, 128
    %v962 = vpop.trf.xlu0
    %v963 = vpop.trf.xlu0
    %v964 = vpop.trf.xlu0
    %v965 = vpop.trf.xlu0
    %v966 = vpop.trf.xlu0
    %v967 = vpop.trf.xlu0
    %v968 = vpop.trf.xlu0
    %v969 = vpop.trf.xlu0
    %v970 = vpop.trf.xlu0
    %v971 = vpop.trf.xlu0
    %v972 = vpop.trf.xlu0
    %v973 = vpop.trf.xlu0
    %v974 = vpop.trf.xlu0
    %v975 = vpop.trf.xlu0
    %v976 = vpop.trf.xlu0
    %v977 = vpop.trf.xlu0
    %978 = vxpose.xlu0.b32.start [1/16] %v315, 128
    %979 = vxpose.xlu0.b32.cont [2/16] 0.0, 128
    %980 = vxpose.xlu0.b32.cont [3/16] 0.0, 128
    %981 = vxpose.xlu0.b32.cont [4/16] 0.0, 128
    %982 = vxpose.xlu0.b32.cont [5/16] 0.0, 128
    %983 = vxpose.xlu0.b32.cont [6/16] 0.0, 128
    %984 = vxpose.xlu0.b32.cont [7/16] 0.0, 128
    %985 = vxpose.xlu0.b32.cont [8/16] 0.0, 128
    %986 = vxpose.xlu0.b32.cont [9/16] 0.0, 128
    %987 = vxpose.xlu0.b32.cont [10/16] 0.0, 128
    %988 = vxpose.xlu0.b32.cont [11/16] 0.0, 128
    %989 = vxpose.xlu0.b32.cont [12/16] 0.0, 128
    %990 = vxpose.xlu0.b32.cont [13/16] 0.0, 128
    %991 = vxpose.xlu0.b32.cont [14/16] 0.0, 128
    %992 = vxpose.xlu0.b32.cont [15/16] 0.0, 128
    %993 = vxpose.xlu0.b32.end [16/16] 0.0, 128
    %v994 = vpop.trf.xlu0
    %v995 = vpop.trf.xlu0
    %v996 = vpop.trf.xlu0
    %v997 = vpop.trf.xlu0
    %v998 = vpop.trf.xlu0
    %v999 = vpop.trf.xlu0
    %v1000 = vpop.trf.xlu0
    %v1001 = vpop.trf.xlu0
    %v1002 = vpop.trf.xlu0
    %v1003 = vpop.trf.xlu0
    %v1004 = vpop.trf.xlu0
    %v1005 = vpop.trf.xlu0
    %v1006 = vpop.trf.xlu0
    %v1007 = vpop.trf.xlu0
    %v1008 = vpop.trf.xlu0
    %v1009 = vpop.trf.xlu0
    %1010 = vxpose.xlu0.b32.start [1/16] %v333, 128
    %1011 = vxpose.xlu0.b32.cont [2/16] 0.0, 128
    %1012 = vxpose.xlu0.b32.cont [3/16] 0.0, 128
    %1013 = vxpose.xlu0.b32.cont [4/16] 0.0, 128
    %1014 = vxpose.xlu0.b32.cont [5/16] 0.0, 128
    %1015 = vxpose.xlu0.b32.cont [6/16] 0.0, 128
    %1016 = vxpose.xlu0.b32.cont [7/16] 0.0, 128
    %1017 = vxpose.xlu0.b32.cont [8/16] 0.0, 128
    %1018 = vxpose.xlu0.b32.cont [9/16] 0.0, 128
    %1019 = vxpose.xlu0.b32.cont [10/16] 0.0, 128
    %1020 = vxpose.xlu0.b32.cont [11/16] 0.0, 128
    %1021 = vxpose.xlu0.b32.cont [12/16] 0.0, 128
    %1022 = vxpose.xlu0.b32.cont [13/16] 0.0, 128
    %1023 = vxpose.xlu0.b32.cont [14/16] 0.0, 128
    %1024 = vxpose.xlu0.b32.cont [15/16] 0.0, 128
    %1025 = vxpose.xlu0.b32.end [16/16] 0.0, 128
    %v1026 = vpop.trf.xlu0
    %v1027 = vpop.trf.xlu0
    %v1028 = vpop.trf.xlu0
    %v1029 = vpop.trf.xlu0
    %v1030 = vpop.trf.xlu0
    %v1031 = vpop.trf.xlu0
    %v1032 = vpop.trf.xlu0
    %v1033 = vpop.trf.xlu0
    %v1034 = vpop.trf.xlu0
    %v1035 = vpop.trf.xlu0
    %v1036 = vpop.trf.xlu0
    %v1037 = vpop.trf.xlu0
    %v1038 = vpop.trf.xlu0
    %v1039 = vpop.trf.xlu0
    %v1040 = vpop.trf.xlu0
    %v1041 = vpop.trf.xlu0
    %1042 = vxpose.xlu0.b32.start [1/16] %v324, 128
    %1043 = vxpose.xlu0.b32.cont [2/16] 0.0, 128
    %1044 = vxpose.xlu0.b32.cont [3/16] 0.0, 128
    %1045 = vxpose.xlu0.b32.cont [4/16] 0.0, 128
    %1046 = vxpose.xlu0.b32.cont [5/16] 0.0, 128
    %1047 = vxpose.xlu0.b32.cont [6/16] 0.0, 128
    %1048 = vxpose.xlu0.b32.cont [7/16] 0.0, 128
    %1049 = vxpose.xlu0.b32.cont [8/16] 0.0, 128
    %1050 = vxpose.xlu0.b32.cont [9/16] 0.0, 128
    %1051 = vxpose.xlu0.b32.cont [10/16] 0.0, 128
    %1052 = vxpose.xlu0.b32.cont [11/16] 0.0, 128
    %1053 = vxpose.xlu0.b32.cont [12/16] 0.0, 128
    %1054 = vxpose.xlu0.b32.cont [13/16] 0.0, 128
    %1055 = vxpose.xlu0.b32.cont [14/16] 0.0, 128
    %1056 = vxpose.xlu0.b32.cont [15/16] 0.0, 128
    %1057 = vxpose.xlu0.b32.end [16/16] 0.0, 128
    %v1058 = vpop.trf.xlu0
    %v1059 = vpop.trf.xlu0
    %v1060 = vpop.trf.xlu0
    %v1061 = vpop.trf.xlu0
    %v1062 = vpop.trf.xlu0
    %v1063 = vpop.trf.xlu0
    %v1064 = vpop.trf.xlu0
    %v1065 = vpop.trf.xlu0
    %v1066 = vpop.trf.xlu0
    %v1067 = vpop.trf.xlu0
    %v1068 = vpop.trf.xlu0
    %v1069 = vpop.trf.xlu0
    %v1070 = vpop.trf.xlu0
    %v1071 = vpop.trf.xlu0
    %v1072 = vpop.trf.xlu0
    %v1073 = vpop.trf.xlu0
    %1074 = vxpose.xlu0.b32.start [1/16] %v334, 128
    %1075 = vxpose.xlu0.b32.cont [2/16] 0.0, 128
    %1076 = vxpose.xlu0.b32.cont [3/16] 0.0, 128
    %1077 = vxpose.xlu0.b32.cont [4/16] 0.0, 128
    %1078 = vxpose.xlu0.b32.cont [5/16] 0.0, 128
    %1079 = vxpose.xlu0.b32.cont [6/16] 0.0, 128
    %1080 = vxpose.xlu0.b32.cont [7/16] 0.0, 128
    %1081 = vxpose.xlu0.b32.cont [8/16] 0.0, 128
    %1082 = vxpose.xlu0.b32.cont [9/16] 0.0, 128
    %1083 = vxpose.xlu0.b32.cont [10/16] 0.0, 128
    %1084 = vxpose.xlu0.b32.cont [11/16] 0.0, 128
    %1085 = vxpose.xlu0.b32.cont [12/16] 0.0, 128
    %1086 = vxpose.xlu0.b32.cont [13/16] 0.0, 128
    %1087 = vxpose.xlu0.b32.cont [14/16] 0.0, 128
    %1088 = vxpose.xlu0.b32.cont [15/16] 0.0, 128
    %1089 = vxpose.xlu0.b32.end [16/16] 0.0, 128
    %v1090 = vpop.trf.xlu0
    %v1091 = vpop.trf.xlu0
    %v1092 = vpop.trf.xlu0
    %v1093 = vpop.trf.xlu0
    %v1094 = vpop.trf.xlu0
    %v1095 = vpop.trf.xlu0
    %v1096 = vpop.trf.xlu0
    %v1097 = vpop.trf.xlu0
    %v1098 = vpop.trf.xlu0
    %v1099 = vpop.trf.xlu0
    %v1100 = vpop.trf.xlu0
    %v1101 = vpop.trf.xlu0
    %v1102 = vpop.trf.xlu0
    %v1103 = vpop.trf.xlu0
    %v1104 = vpop.trf.xlu0
    %v1105 = vpop.trf.xlu0
    %1106 = vxpose.xlu0.b32.start [1/16] %v331, 128
    %1107 = vxpose.xlu0.b32.cont [2/16] 0.0, 128
    %1108 = vxpose.xlu0.b32.cont [3/16] 0.0, 128
    %1109 = vxpose.xlu0.b32.cont [4/16] 0.0, 128
    %1110 = vxpose.xlu0.b32.cont [5/16] 0.0, 128
    %1111 = vxpose.xlu0.b32.cont [6/16] 0.0, 128
    %1112 = vxpose.xlu0.b32.cont [7/16] 0.0, 128
    %1113 = vxpose.xlu0.b32.cont [8/16] 0.0, 128
    %1114 = vxpose.xlu0.b32.cont [9/16] 0.0, 128
    %1115 = vxpose.xlu0.b32.cont [10/16] 0.0, 128
    %1116 = vxpose.xlu0.b32.cont [11/16] 0.0, 128
    %1117 = vxpose.xlu0.b32.cont [12/16] 0.0, 128
    %1118 = vxpose.xlu0.b32.cont [13/16] 0.0, 128
    %1119 = vxpose.xlu0.b32.cont [14/16] 0.0, 128
    %1120 = vxpose.xlu0.b32.cont [15/16] 0.0, 128
    %1121 = vxpose.xlu0.b32.end [16/16] 0.0, 128
    %v1122 = vpop.trf.xlu0
    %v1123 = vpop.trf.xlu0
    %v1124 = vpop.trf.xlu0
    %v1125 = vpop.trf.xlu0
    %v1126 = vpop.trf.xlu0
    %v1127 = vpop.trf.xlu0
    %v1128 = vpop.trf.xlu0
    %v1129 = vpop.trf.xlu0
    %v1130 = vpop.trf.xlu0
    %v1131 = vpop.trf.xlu0
    %v1132 = vpop.trf.xlu0
    %v1133 = vpop.trf.xlu0
    %v1134 = vpop.trf.xlu0
    %v1135 = vpop.trf.xlu0
    %v1136 = vpop.trf.xlu0
    %v1137 = vpop.trf.xlu0
    %1138 = vxpose.xlu0.b32.start [1/16] %v335, 128
    %1139 = vxpose.xlu0.b32.cont [2/16] 0.0, 128
    %1140 = vxpose.xlu0.b32.cont [3/16] 0.0, 128
    %1141 = vxpose.xlu0.b32.cont [4/16] 0.0, 128
    %1142 = vxpose.xlu0.b32.cont [5/16] 0.0, 128
    %1143 = vxpose.xlu0.b32.cont [6/16] 0.0, 128
    %1144 = vxpose.xlu0.b32.cont [7/16] 0.0, 128
    %1145 = vxpose.xlu0.b32.cont [8/16] 0.0, 128
    %1146 = vxpose.xlu0.b32.cont [9/16] 0.0, 128
    %1147 = vxpose.xlu0.b32.cont [10/16] 0.0, 128
    %1148 = vxpose.xlu0.b32.cont [11/16] 0.0, 128
    %1149 = vxpose.xlu0.b32.cont [12/16] 0.0, 128
    %1150 = vxpose.xlu0.b32.cont [13/16] 0.0, 128
    %1151 = vxpose.xlu0.b32.cont [14/16] 0.0, 128
    %1152 = vxpose.xlu0.b32.cont [15/16] 0.0, 128
    %1153 = vxpose.xlu0.b32.end [16/16] 0.0, 128
    %v1154 = vpop.trf.xlu0
    %v1155 = vpop.trf.xlu0
    %v1156 = vpop.trf.xlu0
    %v1157 = vpop.trf.xlu0
    %v1158 = vpop.trf.xlu0
    %v1159 = vpop.trf.xlu0
    %v1160 = vpop.trf.xlu0
    %v1161 = vpop.trf.xlu0
    %v1162 = vpop.trf.xlu0
    %v1163 = vpop.trf.xlu0
    %v1164 = vpop.trf.xlu0
    %v1165 = vpop.trf.xlu0
    %v1166 = vpop.trf.xlu0
    %v1167 = vpop.trf.xlu0
    %v1168 = vpop.trf.xlu0
    %v1169 = vpop.trf.xlu0
    %1170 = vxpose.xlu0.b32.start [1/16] %v374, 128
    %1171 = vxpose.xlu0.b32.cont [2/16] 0.0, 128
    %1172 = vxpose.xlu0.b32.cont [3/16] 0.0, 128
    %1173 = vxpose.xlu0.b32.cont [4/16] 0.0, 128
    %1174 = vxpose.xlu0.b32.cont [5/16] 0.0, 128
    %1175 = vxpose.xlu0.b32.cont [6/16] 0.0, 128
    %1176 = vxpose.xlu0.b32.cont [7/16] 0.0, 128
    %1177 = vxpose.xlu0.b32.cont [8/16] 0.0, 128
    %1178 = vxpose.xlu0.b32.cont [9/16] 0.0, 128
    %1179 = vxpose.xlu0.b32.cont [10/16] 0.0, 128
    %1180 = vxpose.xlu0.b32.cont [11/16] 0.0, 128
    %1181 = vxpose.xlu0.b32.cont [12/16] 0.0, 128
    %1182 = vxpose.xlu0.b32.cont [13/16] 0.0, 128
    %1183 = vxpose.xlu0.b32.cont [14/16] 0.0, 128
    %1184 = vxpose.xlu0.b32.cont [15/16] 0.0, 128
    %1185 = vxpose.xlu0.b32.end [16/16] 0.0, 128
    %v1186 = vpop.trf.xlu0
    %v1187 = vpop.trf.xlu0
    %v1188 = vpop.trf.xlu0
    %v1189 = vpop.trf.xlu0
    %v1190 = vpop.trf.xlu0
    %v1191 = vpop.trf.xlu0
    %v1192 = vpop.trf.xlu0
    %v1193 = vpop.trf.xlu0
    %v1194 = vpop.trf.xlu0
    %v1195 = vpop.trf.xlu0
    %v1196 = vpop.trf.xlu0
    %v1197 = vpop.trf.xlu0
    %v1198 = vpop.trf.xlu0
    %v1199 = vpop.trf.xlu0
    %v1200 = vpop.trf.xlu0
    %v1201 = vpop.trf.xlu0
    %1202 = vxpose.xlu0.b32.start [1/16] %v398, 128
    %1203 = vxpose.xlu0.b32.cont [2/16] 0.0, 128
    %1204 = vxpose.xlu0.b32.cont [3/16] 0.0, 128
    %1205 = vxpose.xlu0.b32.cont [4/16] 0.0, 128
    %1206 = vxpose.xlu0.b32.cont [5/16] 0.0, 128
    %1207 = vxpose.xlu0.b32.cont [6/16] 0.0, 128
    %1208 = vxpose.xlu0.b32.cont [7/16] 0.0, 128
    %1209 = vxpose.xlu0.b32.cont [8/16] 0.0, 128
    %1210 = vxpose.xlu0.b32.cont [9/16] 0.0, 128
    %1211 = vxpose.xlu0.b32.cont [10/16] 0.0, 128
    %1212 = vxpose.xlu0.b32.cont [11/16] 0.0, 128
    %1213 = vxpose.xlu0.b32.cont [12/16] 0.0, 128
    %1214 = vxpose.xlu0.b32.cont [13/16] 0.0, 128
    %1215 = vxpose.xlu0.b32.cont [14/16] 0.0, 128
    %1216 = vxpose.xlu0.b32.cont [15/16] 0.0, 128
    %1217 = vxpose.xlu0.b32.end [16/16] 0.0, 128
    %v1218 = vpop.trf.xlu0
    %v1219 = vpop.trf.xlu0
    %v1220 = vpop.trf.xlu0
    %v1221 = vpop.trf.xlu0
    %v1222 = vpop.trf.xlu0
    %v1223 = vpop.trf.xlu0
    %v1224 = vpop.trf.xlu0
    %v1225 = vpop.trf.xlu0
    %v1226 = vpop.trf.xlu0
    %v1227 = vpop.trf.xlu0
    %v1228 = vpop.trf.xlu0
    %v1229 = vpop.trf.xlu0
    %v1230 = vpop.trf.xlu0
    %v1231 = vpop.trf.xlu0
    %v1232 = vpop.trf.xlu0
    %v1233 = vpop.trf.xlu0
    %1234 = vxpose.xlu0.b32.start [1/16] %v381, 128
    %1235 = vxpose.xlu0.b32.cont [2/16] 0.0, 128
    %1236 = vxpose.xlu0.b32.cont [3/16] 0.0, 128
    %1237 = vxpose.xlu0.b32.cont [4/16] 0.0, 128
    %1238 = vxpose.xlu0.b32.cont [5/16] 0.0, 128
    %1239 = vxpose.xlu0.b32.cont [6/16] 0.0, 128
    %1240 = vxpose.xlu0.b32.cont [7/16] 0.0, 128
    %1241 = vxpose.xlu0.b32.cont [8/16] 0.0, 128
    %1242 = vxpose.xlu0.b32.cont [9/16] 0.0, 128
    %1243 = vxpose.xlu0.b32.cont [10/16] 0.0, 128
    %1244 = vxpose.xlu0.b32.cont [11/16] 0.0, 128
    %1245 = vxpose.xlu0.b32.cont [12/16] 0.0, 128
    %1246 = vxpose.xlu0.b32.cont [13/16] 0.0, 128
    %1247 = vxpose.xlu0.b32.cont [14/16] 0.0, 128
    %1248 = vxpose.xlu0.b32.cont [15/16] 0.0, 128
    %1249 = vxpose.xlu0.b32.end [16/16] 0.0, 128
    %v1250 = vpop.trf.xlu0
    %v1251 = vpop.trf.xlu0
    %v1252 = vpop.trf.xlu0
    %v1253 = vpop.trf.xlu0
    %v1254 = vpop.trf.xlu0
    %v1255 = vpop.trf.xlu0
    %v1256 = vpop.trf.xlu0
    %v1257 = vpop.trf.xlu0
    %v1258 = vpop.trf.xlu0
    %v1259 = vpop.trf.xlu0
    %v1260 = vpop.trf.xlu0
    %v1261 = vpop.trf.xlu0
    %v1262 = vpop.trf.xlu0
    %v1263 = vpop.trf.xlu0
    %v1264 = vpop.trf.xlu0
    %v1265 = vpop.trf.xlu0
    %1266 = vxpose.xlu0.b32.start [1/16] %v399, 128
    %1267 = vxpose.xlu0.b32.cont [2/16] 0.0, 128
    %1268 = vxpose.xlu0.b32.cont [3/16] 0.0, 128
    %1269 = vxpose.xlu0.b32.cont [4/16] 0.0, 128
    %1270 = vxpose.xlu0.b32.cont [5/16] 0.0, 128
    %1271 = vxpose.xlu0.b32.cont [6/16] 0.0, 128
    %1272 = vxpose.xlu0.b32.cont [7/16] 0.0, 128
    %1273 = vxpose.xlu0.b32.cont [8/16] 0.0, 128
    %1274 = vxpose.xlu0.b32.cont [9/16] 0.0, 128
    %1275 = vxpose.xlu0.b32.cont [10/16] 0.0, 128
    %1276 = vxpose.xlu0.b32.cont [11/16] 0.0, 128
    %1277 = vxpose.xlu0.b32.cont [12/16] 0.0, 128
    %1278 = vxpose.xlu0.b32.cont [13/16] 0.0, 128
    %1279 = vxpose.xlu0.b32.cont [14/16] 0.0, 128
    %1280 = vxpose.xlu0.b32.cont [15/16] 0.0, 128
    %1281 = vxpose.xlu0.b32.end [16/16] 0.0, 128
    %v1282 = vpop.trf.xlu0
    %v1283 = vpop.trf.xlu0
    %v1284 = vpop.trf.xlu0
    %v1285 = vpop.trf.xlu0
    %v1286 = vpop.trf.xlu0
    %v1287 = vpop.trf.xlu0
    %v1288 = vpop.trf.xlu0
    %v1289 = vpop.trf.xlu0
    %v1290 = vpop.trf.xlu0
    %v1291 = vpop.trf.xlu0
    %v1292 = vpop.trf.xlu0
    %v1293 = vpop.trf.xlu0
    %v1294 = vpop.trf.xlu0
    %v1295 = vpop.trf.xlu0
    %v1296 = vpop.trf.xlu0
    %v1297 = vpop.trf.xlu0
    %1298 = vxpose.xlu0.b32.start [1/16] %v390, 128
    %1299 = vxpose.xlu0.b32.cont [2/16] 0.0, 128
    %1300 = vxpose.xlu0.b32.cont [3/16] 0.0, 128
    %1301 = vxpose.xlu0.b32.cont [4/16] 0.0, 128
    %1302 = vxpose.xlu0.b32.cont [5/16] 0.0, 128
    %1303 = vxpose.xlu0.b32.cont [6/16] 0.0, 128
    %1304 = vxpose.xlu0.b32.cont [7/16] 0.0, 128
    %1305 = vxpose.xlu0.b32.cont [8/16] 0.0, 128
    %1306 = vxpose.xlu0.b32.cont [9/16] 0.0, 128
    %1307 = vxpose.xlu0.b32.cont [10/16] 0.0, 128
    %1308 = vxpose.xlu0.b32.cont [11/16] 0.0, 128
    %1309 = vxpose.xlu0.b32.cont [12/16] 0.0, 128
    %1310 = vxpose.xlu0.b32.cont [13/16] 0.0, 128
    %1311 = vxpose.xlu0.b32.cont [14/16] 0.0, 128
    %1312 = vxpose.xlu0.b32.cont [15/16] 0.0, 128
    %1313 = vxpose.xlu0.b32.end [16/16] 0.0, 128
    %v1314 = vpop.trf.xlu0
    %v1315 = vpop.trf.xlu0
    %v1316 = vpop.trf.xlu0
    %v1317 = vpop.trf.xlu0
    %v1318 = vpop.trf.xlu0
    %v1319 = vpop.trf.xlu0
    %v1320 = vpop.trf.xlu0
    %v1321 = vpop.trf.xlu0
    %v1322 = vpop.trf.xlu0
    %v1323 = vpop.trf.xlu0
    %v1324 = vpop.trf.xlu0
    %v1325 = vpop.trf.xlu0
    %v1326 = vpop.trf.xlu0
    %v1327 = vpop.trf.xlu0
    %v1328 = vpop.trf.xlu0
    %v1329 = vpop.trf.xlu0
    %1330 = vxpose.xlu0.b32.start [1/16] %v400, 128
    %1331 = vxpose.xlu0.b32.cont [2/16] 0.0, 128
    %1332 = vxpose.xlu0.b32.cont [3/16] 0.0, 128
    %1333 = vxpose.xlu0.b32.cont [4/16] 0.0, 128
    %1334 = vxpose.xlu0.b32.cont [5/16] 0.0, 128
    %1335 = vxpose.xlu0.b32.cont [6/16] 0.0, 128
    %1336 = vxpose.xlu0.b32.cont [7/16] 0.0, 128
    %1337 = vxpose.xlu0.b32.cont [8/16] 0.0, 128
    %1338 = vxpose.xlu0.b32.cont [9/16] 0.0, 128
    %1339 = vxpose.xlu0.b32.cont [10/16] 0.0, 128
    %1340 = vxpose.xlu0.b32.cont [11/16] 0.0, 128
    %1341 = vxpose.xlu0.b32.cont [12/16] 0.0, 128
    %1342 = vxpose.xlu0.b32.cont [13/16] 0.0, 128
    %1343 = vxpose.xlu0.b32.cont [14/16] 0.0, 128
    %1344 = vxpose.xlu0.b32.cont [15/16] 0.0, 128
    %1345 = vxpose.xlu0.b32.end [16/16] 0.0, 128
    %v1346 = vpop.trf.xlu0
    %v1347 = vpop.trf.xlu0
    %v1348 = vpop.trf.xlu0
    %v1349 = vpop.trf.xlu0
    %v1350 = vpop.trf.xlu0
    %v1351 = vpop.trf.xlu0
    %v1352 = vpop.trf.xlu0
    %v1353 = vpop.trf.xlu0
    %v1354 = vpop.trf.xlu0
    %v1355 = vpop.trf.xlu0
    %v1356 = vpop.trf.xlu0
    %v1357 = vpop.trf.xlu0
    %v1358 = vpop.trf.xlu0
    %v1359 = vpop.trf.xlu0
    %v1360 = vpop.trf.xlu0
    %v1361 = vpop.trf.xlu0
    %1362 = vxpose.xlu0.b32.start [1/16] %v397, 128
    %1363 = vxpose.xlu0.b32.cont [2/16] 0.0, 128
    %1364 = vxpose.xlu0.b32.cont [3/16] 0.0, 128
    %1365 = vxpose.xlu0.b32.cont [4/16] 0.0, 128
    %1366 = vxpose.xlu0.b32.cont [5/16] 0.0, 128
    %1367 = vxpose.xlu0.b32.cont [6/16] 0.0, 128
    %1368 = vxpose.xlu0.b32.cont [7/16] 0.0, 128
    %1369 = vxpose.xlu0.b32.cont [8/16] 0.0, 128
    %1370 = vxpose.xlu0.b32.cont [9/16] 0.0, 128
    %1371 = vxpose.xlu0.b32.cont [10/16] 0.0, 128
    %1372 = vxpose.xlu0.b32.cont [11/16] 0.0, 128
    %1373 = vxpose.xlu0.b32.cont [12/16] 0.0, 128
    %1374 = vxpose.xlu0.b32.cont [13/16] 0.0, 128
    %1375 = vxpose.xlu0.b32.cont [14/16] 0.0, 128
    %1376 = vxpose.xlu0.b32.cont [15/16] 0.0, 128
    %1377 = vxpose.xlu0.b32.end [16/16] 0.0, 128
    %v1378 = vpop.trf.xlu0
    %v1379 = vpop.trf.xlu0
    %v1380 = vpop.trf.xlu0
    %v1381 = vpop.trf.xlu0
    %v1382 = vpop.trf.xlu0
    %v1383 = vpop.trf.xlu0
    %v1384 = vpop.trf.xlu0
    %v1385 = vpop.trf.xlu0
    %v1386 = vpop.trf.xlu0
    %v1387 = vpop.trf.xlu0
    %v1388 = vpop.trf.xlu0
    %v1389 = vpop.trf.xlu0
    %v1390 = vpop.trf.xlu0
    %v1391 = vpop.trf.xlu0
    %v1392 = vpop.trf.xlu0
    %v1393 = vpop.trf.xlu0
    %1394 = vxpose.xlu0.b32.start [1/16] %v401, 128
    %1395 = vxpose.xlu0.b32.cont [2/16] 0.0, 128
    %1396 = vxpose.xlu0.b32.cont [3/16] 0.0, 128
    %1397 = vxpose.xlu0.b32.cont [4/16] 0.0, 128
    %1398 = vxpose.xlu0.b32.cont [5/16] 0.0, 128
    %1399 = vxpose.xlu0.b32.cont [6/16] 0.0, 128
    %1400 = vxpose.xlu0.b32.cont [7/16] 0.0, 128
    %1401 = vxpose.xlu0.b32.cont [8/16] 0.0, 128
    %1402 = vxpose.xlu0.b32.cont [9/16] 0.0, 128
    %1403 = vxpose.xlu0.b32.cont [10/16] 0.0, 128
    %1404 = vxpose.xlu0.b32.cont [11/16] 0.0, 128
    %1405 = vxpose.xlu0.b32.cont [12/16] 0.0, 128
    %1406 = vxpose.xlu0.b32.cont [13/16] 0.0, 128
    %1407 = vxpose.xlu0.b32.cont [14/16] 0.0, 128
    %1408 = vxpose.xlu0.b32.cont [15/16] 0.0, 128
    %1409 = vxpose.xlu0.b32.end [16/16] 0.0, 128
    %v1410 = vpop.trf.xlu0
    %v1411 = vpop.trf.xlu0
    %v1412 = vpop.trf.xlu0
    %v1413 = vpop.trf.xlu0
    %v1414 = vpop.trf.xlu0
    %v1415 = vpop.trf.xlu0
    %v1416 = vpop.trf.xlu0
    %v1417 = vpop.trf.xlu0
    %v1418 = vpop.trf.xlu0
    %v1419 = vpop.trf.xlu0
    %v1420 = vpop.trf.xlu0
    %v1421 = vpop.trf.xlu0
    %v1422 = vpop.trf.xlu0
    %v1423 = vpop.trf.xlu0
    %v1424 = vpop.trf.xlu0
    %v1425 = vpop.trf.xlu0
    %v1426 = vcombine.low %v418, %v482
    %v1428 = vunpack.c.l.s4 1983009808
    %v1429 = vunpack.c.0.s8 %v1428
    %v1430 = vlaneseq
    %v1431 = vshrl.u32 %v1430, 7
    %v1432 = vsub.s32 %v1429, %v1431
    %v1433 = vrot.slane %v1426, %v1432
    %v1434 = vcombine.low %v450, %v514
    %v1436 = vunpack.c.l.s4 1983009808
    %v1437 = vunpack.c.0.s8 %v1436
    %v1438 = vlaneseq
    %v1439 = vshrl.u32 %v1438, 7
    %v1440 = vsub.s32 %v1437, %v1439
    %v1441 = vrot.slane %v1434, %v1440
    %v1442 = vcombine.low %v546, %v610
    %v1444 = vunpack.c.l.s4 1983009808
    %v1445 = vunpack.c.0.s8 %v1444
    %v1446 = vlaneseq
    %v1447 = vshrl.u32 %v1446, 7
    %v1448 = vsub.s32 %v1445, %v1447
    %v1449 = vrot.slane %v1442, %v1448
    %v1450 = vcombine.low %v578, %v642
    %v1452 = vunpack.c.l.s4 1983009808
    %v1453 = vunpack.c.0.s8 %v1452
    %v1454 = vlaneseq
    %v1455 = vshrl.u32 %v1454, 7
    %v1456 = vsub.s32 %v1453, %v1455
    %v1457 = vrot.slane %v1450, %v1456
    %v1458 = vcombine.low %v1433, %v1441
    %v1459 = vcombine.high %v1433, %v1441
    %v1461 = vunpack.c.l.s4 1934713408
    %v1462 = vunpack.c.0.s8 %v1461
    %v1463 = vlaneseq
    %v1464 = vshrl.u32 %v1463, 7
    %v1465 = vsub.s32 %v1462, %v1464
    %v1466 = vrot.slane %v1458, %v1465
    %v1468 = vunpack.c.l.s4 1934713408
    %v1469 = vunpack.c.0.s8 %v1468
    %v1470 = vlaneseq
    %v1471 = vshrl.u32 %v1470, 7
    %v1472 = vsub.s32 %v1469, %v1471
    %v1473 = vrot.slane %v1459, %v1472
    %v1474 = vcombine.low %v1449, %v1457
    %v1475 = vcombine.high %v1449, %v1457
    %v1477 = vunpack.c.l.s4 1934713408
    %v1478 = vunpack.c.0.s8 %v1477
    %v1479 = vlaneseq
    %v1480 = vshrl.u32 %v1479, 7
    %v1481 = vsub.s32 %v1478, %v1480
    %v1482 = vrot.slane %v1474, %v1481
    %v1484 = vunpack.c.l.s4 1934713408
    %v1485 = vunpack.c.0.s8 %v1484
    %v1486 = vlaneseq
    %v1487 = vshrl.u32 %v1486, 7
    %v1488 = vsub.s32 %v1485, %v1487
    %v1489 = vrot.slane %v1475, %v1488
    %v1490 = vcombine.low %v1466, %v1482
    %v1491 = vcombine.high %v1466, %v1482
    %v1492 = vcombine.low %v1473, %v1489
    %v1493 = vcombine.high %v1473, %v1489
    %v1494 = vcombine.low %v674, %v738
    %v1496 = vunpack.c.l.s4 1983009808
    %v1497 = vunpack.c.0.s8 %v1496
    %v1498 = vlaneseq
    %v1499 = vshrl.u32 %v1498, 7
    %v1500 = vsub.s32 %v1497, %v1499
    %v1501 = vrot.slane %v1494, %v1500
    %v1502 = vcombine.low %v706, %v770
    %v1504 = vunpack.c.l.s4 1983009808
    %v1505 = vunpack.c.0.s8 %v1504
    %v1506 = vlaneseq
    %v1507 = vshrl.u32 %v1506, 7
    %v1508 = vsub.s32 %v1505, %v1507
    %v1509 = vrot.slane %v1502, %v1508
    %v1510 = vcombine.low %v802, %v866
    %v1512 = vunpack.c.l.s4 1983009808
    %v1513 = vunpack.c.0.s8 %v1512
    %v1514 = vlaneseq
    %v1515 = vshrl.u32 %v1514, 7
    %v1516 = vsub.s32 %v1513, %v1515
    %v1517 = vrot.slane %v1510, %v1516
    %v1518 = vcombine.low %v834, %v898
    %v1520 = vunpack.c.l.s4 1983009808
    %v1521 = vunpack.c.0.s8 %v1520
    %v1522 = vlaneseq
    %v1523 = vshrl.u32 %v1522, 7
    %v1524 = vsub.s32 %v1521, %v1523
    %v1525 = vrot.slane %v1518, %v1524
    %v1526 = vcombine.low %v1501, %v1509
    %v1527 = vcombine.high %v1501, %v1509
    %v1529 = vunpack.c.l.s4 1934713408
    %v1530 = vunpack.c.0.s8 %v1529
    %v1531 = vlaneseq
    %v1532 = vshrl.u32 %v1531, 7
    %v1533 = vsub.s32 %v1530, %v1532
    %v1534 = vrot.slane %v1526, %v1533
    %v1536 = vunpack.c.l.s4 1934713408
    %v1537 = vunpack.c.0.s8 %v1536
    %v1538 = vlaneseq
    %v1539 = vshrl.u32 %v1538, 7
    %v1540 = vsub.s32 %v1537, %v1539
    %v1541 = vrot.slane %v1527, %v1540
    %v1542 = vcombine.low %v1517, %v1525
    %v1543 = vcombine.high %v1517, %v1525
    %v1545 = vunpack.c.l.s4 1934713408
    %v1546 = vunpack.c.0.s8 %v1545
    %v1547 = vlaneseq
    %v1548 = vshrl.u32 %v1547, 7
    %v1549 = vsub.s32 %v1546, %v1548
    %v1550 = vrot.slane %v1542, %v1549
    %v1552 = vunpack.c.l.s4 1934713408
    %v1553 = vunpack.c.0.s8 %v1552
    %v1554 = vlaneseq
    %v1555 = vshrl.u32 %v1554, 7
    %v1556 = vsub.s32 %v1553, %v1555
    %v1557 = vrot.slane %v1543, %v1556
    %v1558 = vcombine.low %v1534, %v1550
    %v1559 = vcombine.high %v1534, %v1550
    %v1560 = vcombine.low %v1541, %v1557
    %v1561 = vcombine.high %v1541, %v1557
    %v1562 = vcombine.low %v930, %v994
    %v1564 = vunpack.c.l.s4 1983009808
    %v1565 = vunpack.c.0.s8 %v1564
    %v1566 = vlaneseq
    %v1567 = vshrl.u32 %v1566, 7
    %v1568 = vsub.s32 %v1565, %v1567
    %v1569 = vrot.slane %v1562, %v1568
    %v1570 = vcombine.low %v962, %v1026
    %v1572 = vunpack.c.l.s4 1983009808
    %v1573 = vunpack.c.0.s8 %v1572
    %v1574 = vlaneseq
    %v1575 = vshrl.u32 %v1574, 7
    %v1576 = vsub.s32 %v1573, %v1575
    %v1577 = vrot.slane %v1570, %v1576
    %v1578 = vcombine.low %v1058, %v1122
    %v1580 = vunpack.c.l.s4 1983009808
    %v1581 = vunpack.c.0.s8 %v1580
    %v1582 = vlaneseq
    %v1583 = vshrl.u32 %v1582, 7
    %v1584 = vsub.s32 %v1581, %v1583
    %v1585 = vrot.slane %v1578, %v1584
    %v1586 = vcombine.low %v1090, %v1154
    %v1588 = vunpack.c.l.s4 1983009808
    %v1589 = vunpack.c.0.s8 %v1588
    %v1590 = vlaneseq
    %v1591 = vshrl.u32 %v1590, 7
    %v1592 = vsub.s32 %v1589, %v1591
    %v1593 = vrot.slane %v1586, %v1592
    %v1594 = vcombine.low %v1569, %v1577
    %v1595 = vcombine.high %v1569, %v1577
    %v1597 = vunpack.c.l.s4 1934713408
    %v1598 = vunpack.c.0.s8 %v1597
    %v1599 = vlaneseq
    %v1600 = vshrl.u32 %v1599, 7
    %v1601 = vsub.s32 %v1598, %v1600
    %v1602 = vrot.slane %v1594, %v1601
    %v1604 = vunpack.c.l.s4 1934713408
    %v1605 = vunpack.c.0.s8 %v1604
    %v1606 = vlaneseq
    %v1607 = vshrl.u32 %v1606, 7
    %v1608 = vsub.s32 %v1605, %v1607
    %v1609 = vrot.slane %v1595, %v1608
    %v1610 = vcombine.low %v1585, %v1593
    %v1611 = vcombine.high %v1585, %v1593
    %v1613 = vunpack.c.l.s4 1934713408
    %v1614 = vunpack.c.0.s8 %v1613
    %v1615 = vlaneseq
    %v1616 = vshrl.u32 %v1615, 7
    %v1617 = vsub.s32 %v1614, %v1616
    %v1618 = vrot.slane %v1610, %v1617
    %v1620 = vunpack.c.l.s4 1934713408
    %v1621 = vunpack.c.0.s8 %v1620
    %v1622 = vlaneseq
    %v1623 = vshrl.u32 %v1622, 7
    %v1624 = vsub.s32 %v1621, %v1623
    %v1625 = vrot.slane %v1611, %v1624
    %v1626 = vcombine.low %v1602, %v1618
    %v1627 = vcombine.high %v1602, %v1618
    %v1628 = vcombine.low %v1609, %v1625
    %v1629 = vcombine.high %v1609, %v1625
    %v1630 = vcombine.low %v1186, %v1250
    %v1632 = vunpack.c.l.s4 1983009808
    %v1633 = vunpack.c.0.s8 %v1632
    %v1634 = vlaneseq
    %v1635 = vshrl.u32 %v1634, 7
    %v1636 = vsub.s32 %v1633, %v1635
    %v1637 = vrot.slane %v1630, %v1636
    %v1638 = vcombine.low %v1218, %v1282
    %v1640 = vunpack.c.l.s4 1983009808
    %v1641 = vunpack.c.0.s8 %v1640
    %v1642 = vlaneseq
    %v1643 = vshrl.u32 %v1642, 7
    %v1644 = vsub.s32 %v1641, %v1643
    %v1645 = vrot.slane %v1638, %v1644
    %v1646 = vcombine.low %v1314, %v1378
    %v1648 = vunpack.c.l.s4 1983009808
    %v1649 = vunpack.c.0.s8 %v1648
    %v1650 = vlaneseq
    %v1651 = vshrl.u32 %v1650, 7
    %v1652 = vsub.s32 %v1649, %v1651
    %v1653 = vrot.slane %v1646, %v1652
    %v1654 = vcombine.low %v1346, %v1410
    %v1656 = vunpack.c.l.s4 1983009808
    %v1657 = vunpack.c.0.s8 %v1656
    %v1658 = vlaneseq
    %v1659 = vshrl.u32 %v1658, 7
    %v1660 = vsub.s32 %v1657, %v1659
    %v1661 = vrot.slane %v1654, %v1660
    %v1662 = vcombine.low %v1637, %v1645
    %v1663 = vcombine.high %v1637, %v1645
    %v1665 = vunpack.c.l.s4 1934713408
    %v1666 = vunpack.c.0.s8 %v1665
    %v1667 = vlaneseq
    %v1668 = vshrl.u32 %v1667, 7
    %v1669 = vsub.s32 %v1666, %v1668
    %v1670 = vrot.slane %v1662, %v1669
    %v1672 = vunpack.c.l.s4 1934713408
    %v1673 = vunpack.c.0.s8 %v1672
    %v1674 = vlaneseq
    %v1675 = vshrl.u32 %v1674, 7
    %v1676 = vsub.s32 %v1673, %v1675
    %v1677 = vrot.slane %v1663, %v1676
    %v1678 = vcombine.low %v1653, %v1661
    %v1679 = vcombine.high %v1653, %v1661
    %v1681 = vunpack.c.l.s4 1934713408
    %v1682 = vunpack.c.0.s8 %v1681
    %v1683 = vlaneseq
    %v1684 = vshrl.u32 %v1683, 7
    %v1685 = vsub.s32 %v1682, %v1684
    %v1686 = vrot.slane %v1678, %v1685
    %v1688 = vunpack.c.l.s4 1934713408
    %v1689 = vunpack.c.0.s8 %v1688
    %v1690 = vlaneseq
    %v1691 = vshrl.u32 %v1690, 7
    %v1692 = vsub.s32 %v1689, %v1691
    %v1693 = vrot.slane %v1679, %v1692
    %v1694 = vcombine.low %v1670, %v1686
    %v1695 = vcombine.high %v1670, %v1686
    %v1696 = vcombine.low %v1677, %v1693
    %v1697 = vcombine.high %v1677, %v1693
    %1698 = vxpose.xlu0.b32.start [1/16] %v42, 128
    %1699 = vxpose.xlu0.b32.cont [2/16] %v44, 128
    %1700 = vxpose.xlu0.b32.cont [3/16] %v46, 128
    %1701 = vxpose.xlu0.b32.cont [4/16] %v48, 128
    %1702 = vxpose.xlu0.b32.cont [5/16] 0.0, 128
    %1703 = vxpose.xlu0.b32.cont [6/16] 0.0, 128
    %1704 = vxpose.xlu0.b32.cont [7/16] 0.0, 128
    %1705 = vxpose.xlu0.b32.cont [8/16] 0.0, 128
    %1706 = vxpose.xlu0.b32.cont [9/16] 0.0, 128
    %1707 = vxpose.xlu0.b32.cont [10/16] 0.0, 128
    %1708 = vxpose.xlu0.b32.cont [11/16] 0.0, 128
    %1709 = vxpose.xlu0.b32.cont [12/16] 0.0, 128
    %1710 = vxpose.xlu0.b32.cont [13/16] 0.0, 128
    %1711 = vxpose.xlu0.b32.cont [14/16] 0.0, 128
    %1712 = vxpose.xlu0.b32.cont [15/16] 0.0, 128
    %1713 = vxpose.xlu0.b32.end [16/16] 0.0, 128
    %v1714 = vpop.trf.xlu0
    %v1715 = vpop.trf.xlu0
    %v1716 = vpop.trf.xlu0
    %v1717 = vpop.trf.xlu0
    %v1718 = vpop.trf.xlu0
    %v1719 = vpop.trf.xlu0
    %v1720 = vpop.trf.xlu0
    %v1721 = vpop.trf.xlu0
    %v1722 = vpop.trf.xlu0
    %v1723 = vpop.trf.xlu0
    %v1724 = vpop.trf.xlu0
    %v1725 = vpop.trf.xlu0
    %v1726 = vpop.trf.xlu0
    %v1727 = vpop.trf.xlu0
    %v1728 = vpop.trf.xlu0
    %v1729 = vpop.trf.xlu0
    %1730 = vxpose.xlu0.b32.start [1/16] %v43, 128
    %1731 = vxpose.xlu0.b32.cont [2/16] %v45, 128
    %1732 = vxpose.xlu0.b32.cont [3/16] %v47, 128
    %1733 = vxpose.xlu0.b32.cont [4/16] %v49, 128
    %1734 = vxpose.xlu0.b32.cont [5/16] 0.0, 128
    %1735 = vxpose.xlu0.b32.cont [6/16] 0.0, 128
    %1736 = vxpose.xlu0.b32.cont [7/16] 0.0, 128
    %1737 = vxpose.xlu0.b32.cont [8/16] 0.0, 128
    %1738 = vxpose.xlu0.b32.cont [9/16] 0.0, 128
    %1739 = vxpose.xlu0.b32.cont [10/16] 0.0, 128
    %1740 = vxpose.xlu0.b32.cont [11/16] 0.0, 128
    %1741 = vxpose.xlu0.b32.cont [12/16] 0.0, 128
    %1742 = vxpose.xlu0.b32.cont [13/16] 0.0, 128
    %1743 = vxpose.xlu0.b32.cont [14/16] 0.0, 128
    %1744 = vxpose.xlu0.b32.cont [15/16] 0.0, 128
    %1745 = vxpose.xlu0.b32.end [16/16] 0.0, 128
    %v1746 = vpop.trf.xlu0
    %v1747 = vpop.trf.xlu0
    %v1748 = vpop.trf.xlu0
    %v1749 = vpop.trf.xlu0
    %v1750 = vpop.trf.xlu0
    %v1751 = vpop.trf.xlu0
    %v1752 = vpop.trf.xlu0
    %v1753 = vpop.trf.xlu0
    %v1754 = vpop.trf.xlu0
    %v1755 = vpop.trf.xlu0
    %v1756 = vpop.trf.xlu0
    %v1757 = vpop.trf.xlu0
    %v1758 = vpop.trf.xlu0
    %v1759 = vpop.trf.xlu0
    %v1760 = vpop.trf.xlu0
    %v1761 = vpop.trf.xlu0
    %vm1762 = vcmask 261120
    %v1764 = vsel %vm1762, %v1714, 0
    %v1767 = vsel %vm1762, %v1715, 0
    %v1770 = vsel %vm1762, %v1716, 0
    %v1773 = vsel %vm1762, %v1717, 0
    %v1776 = vsel %vm1762, %v1718, 0
    %v1779 = vsel %vm1762, %v1719, 0
    %v1782 = vsel %vm1762, %v1720, 0
    %v1785 = vsel %vm1762, %v1721, 0
    %v1788 = vsel %vm1762, %v1722, 0
    %v1791 = vsel %vm1762, %v1723, 0
    %v1794 = vsel %vm1762, %v1724, 0
    %v1797 = vsel %vm1762, %v1725, 0
    %v1800 = vsel %vm1762, %v1726, 0
    %v1803 = vsel %vm1762, %v1727, 0
    %v1806 = vsel %vm1762, %v1728, 0
    %v1809 = vsel %vm1762, %v1729, 0
    %v1812 = vsel %vm1762, %v1746, 0
    %v1815 = vsel %vm1762, %v1747, 0
    %v1818 = vsel %vm1762, %v1748, 0
    %v1821 = vsel %vm1762, %v1749, 0
    %v1824 = vsel %vm1762, %v1750, 0
    %v1827 = vsel %vm1762, %v1751, 0
    %v1830 = vsel %vm1762, %v1752, 0
    %v1833 = vsel %vm1762, %v1753, 0
    %v1836 = vsel %vm1762, %v1754, 0
    %v1839 = vsel %vm1762, %v1755, 0
    %v1842 = vsel %vm1762, %v1756, 0
    %v1845 = vsel %vm1762, %v1757, 0
    %v1848 = vsel %vm1762, %v1758, 0
    %v1851 = vsel %vm1762, %v1759, 0
    %v1854 = vsel %vm1762, %v1760, 0
    %v1857 = vsel %vm1762, %v1761, 0
    %1859 = vmatprep.subr.mxu0 0.0
    %1860 = vmatpush1.msra.mxu0 %v1490
    %1861 = vmatprep.subr.mxu0 0.0
    %1862 = vmatpush1.msra.mxu0 %v1558
    %1863 = vmatprep.subr.mxu0 0.0
    %1864 = vmatpush1.msra.mxu0 %v1626
    %1865 = vmatprep.subr.mxu0 0.0
    %1866 = vmatpush1.msra.mxu0 %v1694
    %1867 = vmatprep.subr.mxu0 0.0
    %1868 = vmatpush1.msra.mxu0 0.0
    %1869 = vmatprep.subr.mxu0 0.0
    %1870 = vmatpush1.msra.mxu0 0.0
    %1871 = vmatprep.subr.mxu0 0.0
    %1872 = vmatpush1.msra.mxu0 0.0
    %1873 = vmatprep.subr.mxu0 0.0
    %1874 = vmatpush1.msra.mxu0 0.0
    %1875 = vmatprep.subr.mxu0 0.0
    %1876 = vmatpush1.msra.mxu0 0.0
    %1877 = vmatprep.subr.mxu0 0.0
    %1878 = vmatpush1.msra.mxu0 0.0
    %1879 = vmatprep.subr.mxu0 0.0
    %1880 = vmatpush1.msra.mxu0 0.0
    %1881 = vmatprep.subr.mxu0 0.0
    %1882 = vmatpush1.msra.mxu0 0.0
    %1883 = vmatprep.subr.mxu0 0.0
    %1884 = vmatpush1.msra.mxu0 0.0
    %1885 = vmatprep.subr.mxu0 0.0
    %1886 = vmatpush1.msra.mxu0 0.0
    %1887 = vmatprep.subr.mxu0 0.0
    %1888 = vmatpush1.msra.mxu0 0.0
    %1889 = vmatprep.subr.mxu0 0.0
    %1890 = vmatpush1.msra.mxu0 0.0
    %1891 = vmatprep.subr.mxu0 0.0
    %1892 = vmatpush1.msra.mxu0 0.0
    %1893 = vmatprep.subr.mxu0 0.0
    %1894 = vmatpush1.msra.mxu0 0.0
    %1895 = vmatprep.subr.mxu0 0.0
    %1896 = vmatpush1.msra.mxu0 0.0
    %1897 = vmatprep.subr.mxu0 0.0
    %1898 = vmatpush1.msra.mxu0 0.0
    %1899 = vmatprep.subr.mxu0 0.0
    %1900 = vmatpush1.msra.mxu0 0.0
    %1901 = vmatprep.subr.mxu0 0.0
    %1902 = vmatpush1.msra.mxu0 0.0
    %1903 = vmatprep.subr.mxu0 0.0
    %1904 = vmatpush1.msra.mxu0 0.0
    %1905 = vmatprep.subr.mxu0 0.0
    %1906 = vmatpush1.msra.mxu0 0.0
    %1907 = vmatprep.subr.mxu0 0.0
    %1908 = vmatpush1.msra.mxu0 0.0
    %1909 = vmatprep.subr.mxu0 0.0
    %1910 = vmatpush1.msra.mxu0 0.0
    %1911 = vmatprep.subr.mxu0 0.0
    %1912 = vmatpush1.msra.mxu0 0.0
    %1913 = vmatprep.subr.mxu0 0.0
    %1914 = vmatpush1.msra.mxu0 0.0
    %1915 = vmatprep.subr.mxu0 0.0
    %1916 = vmatpush1.msra.mxu0 0.0
    %1917 = vmatprep.subr.mxu0 0.0
    %1918 = vmatpush1.msra.mxu0 0.0
    %1919 = vmatprep.subr.mxu0 0.0
    %1920 = vmatpush1.msra.mxu0 0.0
    %1921 = vmatprep.subr.mxu0 0.0
    %1922 = vmatpush1.msra.mxu0 0.0
    %1923 = vmatprep.mubr.f32.mxu0 0.0
    %1924 = vmatmul.mubr.f32.gmra.mrb[0].mxu0 %v1764
    %v1925 = vpop.f32.mrb[0].mxu0
    %v1926 = vadd.f32 0.0, %v1925
    %v1927 = vpop.f32.mrb[0].mxu0
    %1928 = vmatprep.mubr.f32.mxu0 0.0
    %1929 = vmatmul.mubr.f32.gmra.mrb[0].mxu0 %v1767
    %v1930 = vpop.f32.mrb[0].mxu0
    %v1931 = vadd.f32 0.0, %v1930
    %v1932 = vpop.f32.mrb[0].mxu0
    %1933 = vmatprep.mubr.f32.mxu0 0.0
    %1934 = vmatmul.mubr.f32.gmra.mrb[0].mxu0 %v1770
    %v1935 = vpop.f32.mrb[0].mxu0
    %v1936 = vadd.f32 0.0, %v1935
    %v1937 = vpop.f32.mrb[0].mxu0
    %1938 = vmatprep.mubr.f32.mxu0 0.0
    %1939 = vmatmul.mubr.f32.gmra.mrb[0].mxu0 %v1773
    %v1940 = vpop.f32.mrb[0].mxu0
    %v1941 = vadd.f32 0.0, %v1940
    %v1942 = vpop.f32.mrb[0].mxu0
    %1943 = vmatprep.mubr.f32.mxu0 0.0
    %1944 = vmatmul.mubr.f32.gmra.mrb[0].mxu0 %v1776
    %v1945 = vpop.f32.mrb[0].mxu0
    %v1946 = vadd.f32 0.0, %v1945
    %v1947 = vpop.f32.mrb[0].mxu0
    %1948 = vmatprep.mubr.f32.mxu0 0.0
    %1949 = vmatmul.mubr.f32.gmra.mrb[0].mxu0 %v1779
    %v1950 = vpop.f32.mrb[0].mxu0
    %v1951 = vadd.f32 0.0, %v1950
    %v1952 = vpop.f32.mrb[0].mxu0
    %1953 = vmatprep.mubr.f32.mxu0 0.0
    %1954 = vmatmul.mubr.f32.gmra.mrb[0].mxu0 %v1782
    %v1955 = vpop.f32.mrb[0].mxu0
    %v1956 = vadd.f32 0.0, %v1955
    %v1957 = vpop.f32.mrb[0].mxu0
    %1958 = vmatprep.mubr.f32.mxu0 0.0
    %1959 = vmatmul.mubr.f32.gmra.mrb[0].mxu0 %v1785
    %v1960 = vpop.f32.mrb[0].mxu0
    %v1961 = vadd.f32 0.0, %v1960
    %v1962 = vpop.f32.mrb[0].mxu0
    %1963 = vmatprep.mubr.f32.mxu0 0.0
    %1964 = vmatmul.mubr.f32.gmra.mrb[0].mxu0 %v1788
    %v1965 = vpop.f32.mrb[0].mxu0
    %v1966 = vadd.f32 0.0, %v1965
    %v1967 = vpop.f32.mrb[0].mxu0
    %1968 = vmatprep.mubr.f32.mxu0 0.0
    %1969 = vmatmul.mubr.f32.gmra.mrb[0].mxu0 %v1791
    %v1970 = vpop.f32.mrb[0].mxu0
    %v1971 = vadd.f32 0.0, %v1970
    %v1972 = vpop.f32.mrb[0].mxu0
    %1973 = vmatprep.mubr.f32.mxu0 0.0
    %1974 = vmatmul.mubr.f32.gmra.mrb[0].mxu0 %v1794
    %v1975 = vpop.f32.mrb[0].mxu0
    %v1976 = vadd.f32 0.0, %v1975
    %v1977 = vpop.f32.mrb[0].mxu0
    %1978 = vmatprep.mubr.f32.mxu0 0.0
    %1979 = vmatmul.mubr.f32.gmra.mrb[0].mxu0 %v1797
    %v1980 = vpop.f32.mrb[0].mxu0
    %v1981 = vadd.f32 0.0, %v1980
    %v1982 = vpop.f32.mrb[0].mxu0
    %1983 = vmatprep.mubr.f32.mxu0 0.0
    %1984 = vmatmul.mubr.f32.gmra.mrb[0].mxu0 %v1800
    %v1985 = vpop.f32.mrb[0].mxu0
    %v1986 = vadd.f32 0.0, %v1985
    %v1987 = vpop.f32.mrb[0].mxu0
    %1988 = vmatprep.mubr.f32.mxu0 0.0
    %1989 = vmatmul.mubr.f32.gmra.mrb[0].mxu0 %v1803
    %v1990 = vpop.f32.mrb[0].mxu0
    %v1991 = vadd.f32 0.0, %v1990
    %v1992 = vpop.f32.mrb[0].mxu0
    %1993 = vmatprep.mubr.f32.mxu0 0.0
    %1994 = vmatmul.mubr.f32.gmra.mrb[0].mxu0 %v1806
    %v1995 = vpop.f32.mrb[0].mxu0
    %v1996 = vadd.f32 0.0, %v1995
    %v1997 = vpop.f32.mrb[0].mxu0
    %1998 = vmatprep.mubr.f32.mxu0 0.0
    %1999 = vmatmul.mubr.f32.gmra.mrb[0].mxu0 %v1809
    %v2000 = vpop.f32.mrb[0].mxu0
    %v2001 = vadd.f32 0.0, %v2000
    %v2002 = vpop.f32.mrb[0].mxu0
    %2003 = vmatprep.mubr.f32.mxu0 0.0
    %2004 = vmatmul.mubr.f32.gmra.mrb[0].mxu0 %v1812
    %v2005 = vpop.f32.mrb[0].mxu0
    %v2006 = vadd.f32 0.0, %v2005
    %v2007 = vpop.f32.mrb[0].mxu0
    %2008 = vmatprep.mubr.f32.mxu0 0.0
    %2009 = vmatmul.mubr.f32.gmra.mrb[0].mxu0 %v1815
    %v2010 = vpop.f32.mrb[0].mxu0
    %v2011 = vadd.f32 0.0, %v2010
    %v2012 = vpop.f32.mrb[0].mxu0
    %2013 = vmatprep.mubr.f32.mxu0 0.0
    %2014 = vmatmul.mubr.f32.gmra.mrb[0].mxu0 %v1818
    %v2015 = vpop.f32.mrb[0].mxu0
    %v2016 = vadd.f32 0.0, %v2015
    %v2017 = vpop.f32.mrb[0].mxu0
    %2018 = vmatprep.mubr.f32.mxu0 0.0
    %2019 = vmatmul.mubr.f32.gmra.mrb[0].mxu0 %v1821
    %v2020 = vpop.f32.mrb[0].mxu0
    %v2021 = vadd.f32 0.0, %v2020
    %v2022 = vpop.f32.mrb[0].mxu0
    %2023 = vmatprep.mubr.f32.mxu0 0.0
    %2024 = vmatmul.mubr.f32.gmra.mrb[0].mxu0 %v1824
    %v2025 = vpop.f32.mrb[0].mxu0
    %v2026 = vadd.f32 0.0, %v2025
    %v2027 = vpop.f32.mrb[0].mxu0
    %2028 = vmatprep.mubr.f32.mxu0 0.0
    %2029 = vmatmul.mubr.f32.gmra.mrb[0].mxu0 %v1827
    %v2030 = vpop.f32.mrb[0].mxu0
    %v2031 = vadd.f32 0.0, %v2030
    %v2032 = vpop.f32.mrb[0].mxu0
    %2033 = vmatprep.mubr.f32.mxu0 0.0
    %2034 = vmatmul.mubr.f32.gmra.mrb[0].mxu0 %v1830
    %v2035 = vpop.f32.mrb[0].mxu0
    %v2036 = vadd.f32 0.0, %v2035
    %v2037 = vpop.f32.mrb[0].mxu0
    %2038 = vmatprep.mubr.f32.mxu0 0.0
    %2039 = vmatmul.mubr.f32.gmra.mrb[0].mxu0 %v1833
    %v2040 = vpop.f32.mrb[0].mxu0
    %v2041 = vadd.f32 0.0, %v2040
    %v2042 = vpop.f32.mrb[0].mxu0
    %2043 = vmatprep.mubr.f32.mxu0 0.0
    %2044 = vmatmul.mubr.f32.gmra.mrb[0].mxu0 %v1836
    %v2045 = vpop.f32.mrb[0].mxu0
    %v2046 = vadd.f32 0.0, %v2045
    %v2047 = vpop.f32.mrb[0].mxu0
    %2048 = vmatprep.mubr.f32.mxu0 0.0
    %2049 = vmatmul.mubr.f32.gmra.mrb[0].mxu0 %v1839
    %v2050 = vpop.f32.mrb[0].mxu0
    %v2051 = vadd.f32 0.0, %v2050
    %v2052 = vpop.f32.mrb[0].mxu0
    %2053 = vmatprep.mubr.f32.mxu0 0.0
    %2054 = vmatmul.mubr.f32.gmra.mrb[0].mxu0 %v1842
    %v2055 = vpop.f32.mrb[0].mxu0
    %v2056 = vadd.f32 0.0, %v2055
    %v2057 = vpop.f32.mrb[0].mxu0
    %2058 = vmatprep.mubr.f32.mxu0 0.0
    %2059 = vmatmul.mubr.f32.gmra.mrb[0].mxu0 %v1845
    %v2060 = vpop.f32.mrb[0].mxu0
    %v2061 = vadd.f32 0.0, %v2060
    %v2062 = vpop.f32.mrb[0].mxu0
    %2063 = vmatprep.mubr.f32.mxu0 0.0
    %2064 = vmatmul.mubr.f32.gmra.mrb[0].mxu0 %v1848
    %v2065 = vpop.f32.mrb[0].mxu0
    %v2066 = vadd.f32 0.0, %v2065
    %v2067 = vpop.f32.mrb[0].mxu0
    %2068 = vmatprep.mubr.f32.mxu0 0.0
    %2069 = vmatmul.mubr.f32.gmra.mrb[0].mxu0 %v1851
    %v2070 = vpop.f32.mrb[0].mxu0
    %v2071 = vadd.f32 0.0, %v2070
    %v2072 = vpop.f32.mrb[0].mxu0
    %2073 = vmatprep.mubr.f32.mxu0 0.0
    %2074 = vmatmul.mubr.f32.gmra.mrb[0].mxu0 %v1854
    %v2075 = vpop.f32.mrb[0].mxu0
    %v2076 = vadd.f32 0.0, %v2075
    %v2077 = vpop.f32.mrb[0].mxu0
    %2078 = vmatprep.mubr.f32.mxu0 0.0
    %2079 = vmatmul.mubr.f32.gmra.mrb[0].mxu0 %v1857
    %v2080 = vpop.f32.mrb[0].mxu0
    %v2081 = vadd.f32 0.0, %v2080
    %v2082 = vpop.f32.mrb[0].mxu0
    %2083 = vdwg.mxu0
    %2084 = vxpose.xlu0.b32.start [1/16] %v50, 128
    %2085 = vxpose.xlu0.b32.cont [2/16] %v52, 128
    %2086 = vxpose.xlu0.b32.cont [3/16] %v54, 128
    %2087 = vxpose.xlu0.b32.cont [4/16] %v56, 128
    %2088 = vxpose.xlu0.b32.cont [5/16] 0.0, 128
    %2089 = vxpose.xlu0.b32.cont [6/16] 0.0, 128
    %2090 = vxpose.xlu0.b32.cont [7/16] 0.0, 128
    %2091 = vxpose.xlu0.b32.cont [8/16] 0.0, 128
    %2092 = vxpose.xlu0.b32.cont [9/16] 0.0, 128
    %2093 = vxpose.xlu0.b32.cont [10/16] 0.0, 128
    %2094 = vxpose.xlu0.b32.cont [11/16] 0.0, 128
    %2095 = vxpose.xlu0.b32.cont [12/16] 0.0, 128
    %2096 = vxpose.xlu0.b32.cont [13/16] 0.0, 128
    %2097 = vxpose.xlu0.b32.cont [14/16] 0.0, 128
    %2098 = vxpose.xlu0.b32.cont [15/16] 0.0, 128
    %2099 = vxpose.xlu0.b32.end [16/16] 0.0, 128
    %v2100 = vpop.trf.xlu0
    %v2101 = vpop.trf.xlu0
    %v2102 = vpop.trf.xlu0
    %v2103 = vpop.trf.xlu0
    %v2104 = vpop.trf.xlu0
    %v2105 = vpop.trf.xlu0
    %v2106 = vpop.trf.xlu0
    %v2107 = vpop.trf.xlu0
    %v2108 = vpop.trf.xlu0
    %v2109 = vpop.trf.xlu0
    %v2110 = vpop.trf.xlu0
    %v2111 = vpop.trf.xlu0
    %v2112 = vpop.trf.xlu0
    %v2113 = vpop.trf.xlu0
    %v2114 = vpop.trf.xlu0
    %v2115 = vpop.trf.xlu0
    %2116 = vxpose.xlu0.b32.start [1/16] %v51, 128
    %2117 = vxpose.xlu0.b32.cont [2/16] %v53, 128
    %2118 = vxpose.xlu0.b32.cont [3/16] %v55, 128
    %2119 = vxpose.xlu0.b32.cont [4/16] %v57, 128
    %2120 = vxpose.xlu0.b32.cont [5/16] 0.0, 128
    %2121 = vxpose.xlu0.b32.cont [6/16] 0.0, 128
    %2122 = vxpose.xlu0.b32.cont [7/16] 0.0, 128
    %2123 = vxpose.xlu0.b32.cont [8/16] 0.0, 128
    %2124 = vxpose.xlu0.b32.cont [9/16] 0.0, 128
    %2125 = vxpose.xlu0.b32.cont [10/16] 0.0, 128
    %2126 = vxpose.xlu0.b32.cont [11/16] 0.0, 128
    %2127 = vxpose.xlu0.b32.cont [12/16] 0.0, 128
    %2128 = vxpose.xlu0.b32.cont [13/16] 0.0, 128
    %2129 = vxpose.xlu0.b32.cont [14/16] 0.0, 128
    %2130 = vxpose.xlu0.b32.cont [15/16] 0.0, 128
    %2131 = vxpose.xlu0.b32.end [16/16] 0.0, 128
    %v2132 = vpop.trf.xlu0
    %v2133 = vpop.trf.xlu0
    %v2134 = vpop.trf.xlu0
    %v2135 = vpop.trf.xlu0
    %v2136 = vpop.trf.xlu0
    %v2137 = vpop.trf.xlu0
    %v2138 = vpop.trf.xlu0
    %v2139 = vpop.trf.xlu0
    %v2140 = vpop.trf.xlu0
    %v2141 = vpop.trf.xlu0
    %v2142 = vpop.trf.xlu0
    %v2143 = vpop.trf.xlu0
    %v2144 = vpop.trf.xlu0
    %v2145 = vpop.trf.xlu0
    %v2146 = vpop.trf.xlu0
    %v2147 = vpop.trf.xlu0
    %v2149 = vsel %vm1762, %v2100, 0
    %v2152 = vsel %vm1762, %v2101, 0
    %v2155 = vsel %vm1762, %v2102, 0
    %v2158 = vsel %vm1762, %v2103, 0
    %v2161 = vsel %vm1762, %v2104, 0
    %v2164 = vsel %vm1762, %v2105, 0
    %v2167 = vsel %vm1762, %v2106, 0
    %v2170 = vsel %vm1762, %v2107, 0
    %v2173 = vsel %vm1762, %v2108, 0
    %v2176 = vsel %vm1762, %v2109, 0
    %v2179 = vsel %vm1762, %v2110, 0
    %v2182 = vsel %vm1762, %v2111, 0
    %v2185 = vsel %vm1762, %v2112, 0
    %v2188 = vsel %vm1762, %v2113, 0
    %v2191 = vsel %vm1762, %v2114, 0
    %v2194 = vsel %vm1762, %v2115, 0
    %v2197 = vsel %vm1762, %v2132, 0
    %v2200 = vsel %vm1762, %v2133, 0
    %v2203 = vsel %vm1762, %v2134, 0
    %v2206 = vsel %vm1762, %v2135, 0
    %v2209 = vsel %vm1762, %v2136, 0
    %v2212 = vsel %vm1762, %v2137, 0
    %v2215 = vsel %vm1762, %v2138, 0
    %v2218 = vsel %vm1762, %v2139, 0
    %v2221 = vsel %vm1762, %v2140, 0
    %v2224 = vsel %vm1762, %v2141, 0
    %v2227 = vsel %vm1762, %v2142, 0
    %v2230 = vsel %vm1762, %v2143, 0
    %v2233 = vsel %vm1762, %v2144, 0
    %v2236 = vsel %vm1762, %v2145, 0
    %v2239 = vsel %vm1762, %v2146, 0
    %v2242 = vsel %vm1762, %v2147, 0
    %2244 = vmatprep.subr.mxu0 0.0
    %2245 = vmatpush1.msra.mxu0 %v1491
    %2246 = vmatprep.subr.mxu0 0.0
    %2247 = vmatpush1.msra.mxu0 %v1559
    %2248 = vmatprep.subr.mxu0 0.0
    %2249 = vmatpush1.msra.mxu0 %v1627
    %2250 = vmatprep.subr.mxu0 0.0
    %2251 = vmatpush1.msra.mxu0 %v1695
    %2252 = vmatprep.subr.mxu0 0.0
    %2253 = vmatpush1.msra.mxu0 0.0
    %2254 = vmatprep.subr.mxu0 0.0
    %2255 = vmatpush1.msra.mxu0 0.0
    %2256 = vmatprep.subr.mxu0 0.0
    %2257 = vmatpush1.msra.mxu0 0.0
    %2258 = vmatprep.subr.mxu0 0.0
    %2259 = vmatpush1.msra.mxu0 0.0
    %2260 = vmatprep.subr.mxu0 0.0
    %2261 = vmatpush1.msra.mxu0 0.0
    %2262 = vmatprep.subr.mxu0 0.0
    %2263 = vmatpush1.msra.mxu0 0.0
    %2264 = vmatprep.subr.mxu0 0.0
    %2265 = vmatpush1.msra.mxu0 0.0
    %2266 = vmatprep.subr.mxu0 0.0
    %2267 = vmatpush1.msra.mxu0 0.0
    %2268 = vmatprep.subr.mxu0 0.0
    %2269 = vmatpush1.msra.mxu0 0.0
    %2270 = vmatprep.subr.mxu0 0.0
    %2271 = vmatpush1.msra.mxu0 0.0
    %2272 = vmatprep.subr.mxu0 0.0
    %2273 = vmatpush1.msra.mxu0 0.0
    %2274 = vmatprep.subr.mxu0 0.0
    %2275 = vmatpush1.msra.mxu0 0.0
    %2276 = vmatprep.subr.mxu0 0.0
    %2277 = vmatpush1.msra.mxu0 0.0
    %2278 = vmatprep.subr.mxu0 0.0
    %2279 = vmatpush1.msra.mxu0 0.0
    %2280 = vmatprep.subr.mxu0 0.0
    %2281 = vmatpush1.msra.mxu0 0.0
    %2282 = vmatprep.subr.mxu0 0.0
    %2283 = vmatpush1.msra.mxu0 0.0
    %2284 = vmatprep.subr.mxu0 0.0
    %2285 = vmatpush1.msra.mxu0 0.0
    %2286 = vmatprep.subr.mxu0 0.0
    %2287 = vmatpush1.msra.mxu0 0.0
    %2288 = vmatprep.subr.mxu0 0.0
    %2289 = vmatpush1.msra.mxu0 0.0
    %2290 = vmatprep.subr.mxu0 0.0
    %2291 = vmatpush1.msra.mxu0 0.0
    %2292 = vmatprep.subr.mxu0 0.0
    %2293 = vmatpush1.msra.mxu0 0.0
    %2294 = vmatprep.subr.mxu0 0.0
    %2295 = vmatpush1.msra.mxu0 0.0
    %2296 = vmatprep.subr.mxu0 0.0
    %2297 = vmatpush1.msra.mxu0 0.0
    %2298 = vmatprep.subr.mxu0 0.0
    %2299 = vmatpush1.msra.mxu0 0.0
    %2300 = vmatprep.subr.mxu0 0.0
    %2301 = vmatpush1.msra.mxu0 0.0
    %2302 = vmatprep.subr.mxu0 0.0
    %2303 = vmatpush1.msra.mxu0 0.0
    %2304 = vmatprep.subr.mxu0 0.0
    %2305 = vmatpush1.msra.mxu0 0.0
    %2306 = vmatprep.subr.mxu0 0.0
    %2307 = vmatpush1.msra.mxu0 0.0
    %2308 = vmatprep.mubr.f32.mxu0 0.0
    %2309 = vmatmul.mubr.f32.gmra.mrb[0].mxu0 %v2149
    %v2310 = vpop.f32.mrb[0].mxu0
    %v2311 = vadd.f32 0.0, %v2310
    %v2312 = vpop.f32.mrb[0].mxu0
    %2313 = vmatprep.mubr.f32.mxu0 0.0
    %2314 = vmatmul.mubr.f32.gmra.mrb[0].mxu0 %v2152
    %v2315 = vpop.f32.mrb[0].mxu0
    %v2316 = vadd.f32 0.0, %v2315
    %v2317 = vpop.f32.mrb[0].mxu0
    %2318 = vmatprep.mubr.f32.mxu0 0.0
    %2319 = vmatmul.mubr.f32.gmra.mrb[0].mxu0 %v2155
    %v2320 = vpop.f32.mrb[0].mxu0
    %v2321 = vadd.f32 0.0, %v2320
    %v2322 = vpop.f32.mrb[0].mxu0
    %2323 = vmatprep.mubr.f32.mxu0 0.0
    %2324 = vmatmul.mubr.f32.gmra.mrb[0].mxu0 %v2158
    %v2325 = vpop.f32.mrb[0].mxu0
    %v2326 = vadd.f32 0.0, %v2325
    %v2327 = vpop.f32.mrb[0].mxu0
    %2328 = vmatprep.mubr.f32.mxu0 0.0
    %2329 = vmatmul.mubr.f32.gmra.mrb[0].mxu0 %v2161
    %v2330 = vpop.f32.mrb[0].mxu0
    %v2331 = vadd.f32 0.0, %v2330
    %v2332 = vpop.f32.mrb[0].mxu0
    %2333 = vmatprep.mubr.f32.mxu0 0.0
    %2334 = vmatmul.mubr.f32.gmra.mrb[0].mxu0 %v2164
    %v2335 = vpop.f32.mrb[0].mxu0
    %v2336 = vadd.f32 0.0, %v2335
    %v2337 = vpop.f32.mrb[0].mxu0
    %2338 = vmatprep.mubr.f32.mxu0 0.0
    %2339 = vmatmul.mubr.f32.gmra.mrb[0].mxu0 %v2167
    %v2340 = vpop.f32.mrb[0].mxu0
    %v2341 = vadd.f32 0.0, %v2340
    %v2342 = vpop.f32.mrb[0].mxu0
    %2343 = vmatprep.mubr.f32.mxu0 0.0
    %2344 = vmatmul.mubr.f32.gmra.mrb[0].mxu0 %v2170
    %v2345 = vpop.f32.mrb[0].mxu0
    %v2346 = vadd.f32 0.0, %v2345
    %v2347 = vpop.f32.mrb[0].mxu0
    %2348 = vmatprep.mubr.f32.mxu0 0.0
    %2349 = vmatmul.mubr.f32.gmra.mrb[0].mxu0 %v2173
    %v2350 = vpop.f32.mrb[0].mxu0
    %v2351 = vadd.f32 0.0, %v2350
    %v2352 = vpop.f32.mrb[0].mxu0
    %2353 = vmatprep.mubr.f32.mxu0 0.0
    %2354 = vmatmul.mubr.f32.gmra.mrb[0].mxu0 %v2176
    %v2355 = vpop.f32.mrb[0].mxu0
    %v2356 = vadd.f32 0.0, %v2355
    %v2357 = vpop.f32.mrb[0].mxu0
    %2358 = vmatprep.mubr.f32.mxu0 0.0
    %2359 = vmatmul.mubr.f32.gmra.mrb[0].mxu0 %v2179
    %v2360 = vpop.f32.mrb[0].mxu0
    %v2361 = vadd.f32 0.0, %v2360
    %v2362 = vpop.f32.mrb[0].mxu0
    %2363 = vmatprep.mubr.f32.mxu0 0.0
    %2364 = vmatmul.mubr.f32.gmra.mrb[0].mxu0 %v2182
    %v2365 = vpop.f32.mrb[0].mxu0
    %v2366 = vadd.f32 0.0, %v2365
    %v2367 = vpop.f32.mrb[0].mxu0
    %2368 = vmatprep.mubr.f32.mxu0 0.0
    %2369 = vmatmul.mubr.f32.gmra.mrb[0].mxu0 %v2185
    %v2370 = vpop.f32.mrb[0].mxu0
    %v2371 = vadd.f32 0.0, %v2370
    %v2372 = vpop.f32.mrb[0].mxu0
    %2373 = vmatprep.mubr.f32.mxu0 0.0
    %2374 = vmatmul.mubr.f32.gmra.mrb[0].mxu0 %v2188
    %v2375 = vpop.f32.mrb[0].mxu0
    %v2376 = vadd.f32 0.0, %v2375
    %v2377 = vpop.f32.mrb[0].mxu0
    %2378 = vmatprep.mubr.f32.mxu0 0.0
    %2379 = vmatmul.mubr.f32.gmra.mrb[0].mxu0 %v2191
    %v2380 = vpop.f32.mrb[0].mxu0
    %v2381 = vadd.f32 0.0, %v2380
    %v2382 = vpop.f32.mrb[0].mxu0
    %2383 = vmatprep.mubr.f32.mxu0 0.0
    %2384 = vmatmul.mubr.f32.gmra.mrb[0].mxu0 %v2194
    %v2385 = vpop.f32.mrb[0].mxu0
    %v2386 = vadd.f32 0.0, %v2385
    %v2387 = vpop.f32.mrb[0].mxu0
    %2388 = vmatprep.mubr.f32.mxu0 0.0
    %2389 = vmatmul.mubr.f32.gmra.mrb[0].mxu0 %v2197
    %v2390 = vpop.f32.mrb[0].mxu0
    %v2391 = vadd.f32 0.0, %v2390
    %v2392 = vpop.f32.mrb[0].mxu0
    %2393 = vmatprep.mubr.f32.mxu0 0.0
    %2394 = vmatmul.mubr.f32.gmra.mrb[0].mxu0 %v2200
    %v2395 = vpop.f32.mrb[0].mxu0
    %v2396 = vadd.f32 0.0, %v2395
    %v2397 = vpop.f32.mrb[0].mxu0
    %2398 = vmatprep.mubr.f32.mxu0 0.0
    %2399 = vmatmul.mubr.f32.gmra.mrb[0].mxu0 %v2203
    %v2400 = vpop.f32.mrb[0].mxu0
    %v2401 = vadd.f32 0.0, %v2400
    %v2402 = vpop.f32.mrb[0].mxu0
    %2403 = vmatprep.mubr.f32.mxu0 0.0
    %2404 = vmatmul.mubr.f32.gmra.mrb[0].mxu0 %v2206
    %v2405 = vpop.f32.mrb[0].mxu0
    %v2406 = vadd.f32 0.0, %v2405
    %v2407 = vpop.f32.mrb[0].mxu0
    %2408 = vmatprep.mubr.f32.mxu0 0.0
    %2409 = vmatmul.mubr.f32.gmra.mrb[0].mxu0 %v2209
    %v2410 = vpop.f32.mrb[0].mxu0
    %v2411 = vadd.f32 0.0, %v2410
    %v2412 = vpop.f32.mrb[0].mxu0
    %2413 = vmatprep.mubr.f32.mxu0 0.0
    %2414 = vmatmul.mubr.f32.gmra.mrb[0].mxu0 %v2212
    %v2415 = vpop.f32.mrb[0].mxu0
    %v2416 = vadd.f32 0.0, %v2415
    %v2417 = vpop.f32.mrb[0].mxu0
    %2418 = vmatprep.mubr.f32.mxu0 0.0
    %2419 = vmatmul.mubr.f32.gmra.mrb[0].mxu0 %v2215
    %v2420 = vpop.f32.mrb[0].mxu0
    %v2421 = vadd.f32 0.0, %v2420
    %v2422 = vpop.f32.mrb[0].mxu0
    %2423 = vmatprep.mubr.f32.mxu0 0.0
    %2424 = vmatmul.mubr.f32.gmra.mrb[0].mxu0 %v2218
    %v2425 = vpop.f32.mrb[0].mxu0
    %v2426 = vadd.f32 0.0, %v2425
    %v2427 = vpop.f32.mrb[0].mxu0
    %2428 = vmatprep.mubr.f32.mxu0 0.0
    %2429 = vmatmul.mubr.f32.gmra.mrb[0].mxu0 %v2221
    %v2430 = vpop.f32.mrb[0].mxu0
    %v2431 = vadd.f32 0.0, %v2430
    %v2432 = vpop.f32.mrb[0].mxu0
    %2433 = vmatprep.mubr.f32.mxu0 0.0
    %2434 = vmatmul.mubr.f32.gmra.mrb[0].mxu0 %v2224
    %v2435 = vpop.f32.mrb[0].mxu0
    %v2436 = vadd.f32 0.0, %v2435
    %v2437 = vpop.f32.mrb[0].mxu0
    %2438 = vmatprep.mubr.f32.mxu0 0.0
    %2439 = vmatmul.mubr.f32.gmra.mrb[0].mxu0 %v2227
    %v2440 = vpop.f32.mrb[0].mxu0
    %v2441 = vadd.f32 0.0, %v2440
    %v2442 = vpop.f32.mrb[0].mxu0
    %2443 = vmatprep.mubr.f32.mxu0 0.0
    %2444 = vmatmul.mubr.f32.gmra.mrb[0].mxu0 %v2230
    %v2445 = vpop.f32.mrb[0].mxu0
    %v2446 = vadd.f32 0.0, %v2445
    %v2447 = vpop.f32.mrb[0].mxu0
    %2448 = vmatprep.mubr.f32.mxu0 0.0
    %2449 = vmatmul.mubr.f32.gmra.mrb[0].mxu0 %v2233
    %v2450 = vpop.f32.mrb[0].mxu0
    %v2451 = vadd.f32 0.0, %v2450
    %v2452 = vpop.f32.mrb[0].mxu0
    %2453 = vmatprep.mubr.f32.mxu0 0.0
    %2454 = vmatmul.mubr.f32.gmra.mrb[0].mxu0 %v2236
    %v2455 = vpop.f32.mrb[0].mxu0
    %v2456 = vadd.f32 0.0, %v2455
    %v2457 = vpop.f32.mrb[0].mxu0
    %2458 = vmatprep.mubr.f32.mxu0 0.0
    %2459 = vmatmul.mubr.f32.gmra.mrb[0].mxu0 %v2239
    %v2460 = vpop.f32.mrb[0].mxu0
    %v2461 = vadd.f32 0.0, %v2460
    %v2462 = vpop.f32.mrb[0].mxu0
    %2463 = vmatprep.mubr.f32.mxu0 0.0
    %2464 = vmatmul.mubr.f32.gmra.mrb[0].mxu0 %v2242
    %v2465 = vpop.f32.mrb[0].mxu0
    %v2466 = vadd.f32 0.0, %v2465
    %v2467 = vpop.f32.mrb[0].mxu0
    %2468 = vdwg.mxu0
    %2469 = vxpose.xlu0.b32.start [1/16] %v58, 128
    %2470 = vxpose.xlu0.b32.cont [2/16] %v60, 128
    %2471 = vxpose.xlu0.b32.cont [3/16] %v62, 128
    %2472 = vxpose.xlu0.b32.cont [4/16] %v64, 128
    %2473 = vxpose.xlu0.b32.cont [5/16] 0.0, 128
    %2474 = vxpose.xlu0.b32.cont [6/16] 0.0, 128
    %2475 = vxpose.xlu0.b32.cont [7/16] 0.0, 128
    %2476 = vxpose.xlu0.b32.cont [8/16] 0.0, 128
    %2477 = vxpose.xlu0.b32.cont [9/16] 0.0, 128
    %2478 = vxpose.xlu0.b32.cont [10/16] 0.0, 128
    %2479 = vxpose.xlu0.b32.cont [11/16] 0.0, 128
    %2480 = vxpose.xlu0.b32.cont [12/16] 0.0, 128
    %2481 = vxpose.xlu0.b32.cont [13/16] 0.0, 128
    %2482 = vxpose.xlu0.b32.cont [14/16] 0.0, 128
    %2483 = vxpose.xlu0.b32.cont [15/16] 0.0, 128
    %2484 = vxpose.xlu0.b32.end [16/16] 0.0, 128
    %v2485 = vpop.trf.xlu0
    %v2486 = vpop.trf.xlu0
    %v2487 = vpop.trf.xlu0
    %v2488 = vpop.trf.xlu0
    %v2489 = vpop.trf.xlu0
    %v2490 = vpop.trf.xlu0
    %v2491 = vpop.trf.xlu0
    %v2492 = vpop.trf.xlu0
    %v2493 = vpop.trf.xlu0
    %v2494 = vpop.trf.xlu0
    %v2495 = vpop.trf.xlu0
    %v2496 = vpop.trf.xlu0
    %v2497 = vpop.trf.xlu0
    %v2498 = vpop.trf.xlu0
    %v2499 = vpop.trf.xlu0
    %v2500 = vpop.trf.xlu0
    %2501 = vxpose.xlu0.b32.start [1/16] %v59, 128
    %2502 = vxpose.xlu0.b32.cont [2/16] %v61, 128
    %2503 = vxpose.xlu0.b32.cont [3/16] %v63, 128
    %2504 = vxpose.xlu0.b32.cont [4/16] %v65, 128
    %2505 = vxpose.xlu0.b32.cont [5/16] 0.0, 128
    %2506 = vxpose.xlu0.b32.cont [6/16] 0.0, 128
    %2507 = vxpose.xlu0.b32.cont [7/16] 0.0, 128
    %2508 = vxpose.xlu0.b32.cont [8/16] 0.0, 128
    %2509 = vxpose.xlu0.b32.cont [9/16] 0.0, 128
    %2510 = vxpose.xlu0.b32.cont [10/16] 0.0, 128
    %2511 = vxpose.xlu0.b32.cont [11/16] 0.0, 128
    %2512 = vxpose.xlu0.b32.cont [12/16] 0.0, 128
    %2513 = vxpose.xlu0.b32.cont [13/16] 0.0, 128
    %2514 = vxpose.xlu0.b32.cont [14/16] 0.0, 128
    %2515 = vxpose.xlu0.b32.cont [15/16] 0.0, 128
    %2516 = vxpose.xlu0.b32.end [16/16] 0.0, 128
    %v2517 = vpop.trf.xlu0
    %v2518 = vpop.trf.xlu0
    %v2519 = vpop.trf.xlu0
    %v2520 = vpop.trf.xlu0
    %v2521 = vpop.trf.xlu0
    %v2522 = vpop.trf.xlu0
    %v2523 = vpop.trf.xlu0
    %v2524 = vpop.trf.xlu0
    %v2525 = vpop.trf.xlu0
    %v2526 = vpop.trf.xlu0
    %v2527 = vpop.trf.xlu0
    %v2528 = vpop.trf.xlu0
    %v2529 = vpop.trf.xlu0
    %v2530 = vpop.trf.xlu0
    %v2531 = vpop.trf.xlu0
    %v2532 = vpop.trf.xlu0
    %v2534 = vsel %vm1762, %v2485, 0
    %v2537 = vsel %vm1762, %v2486, 0
    %v2540 = vsel %vm1762, %v2487, 0
    %v2543 = vsel %vm1762, %v2488, 0
    %v2546 = vsel %vm1762, %v2489, 0
    %v2549 = vsel %vm1762, %v2490, 0
    %v2552 = vsel %vm1762, %v2491, 0
    %v2555 = vsel %vm1762, %v2492, 0
    %v2558 = vsel %vm1762, %v2493, 0
    %v2561 = vsel %vm1762, %v2494, 0
    %v2564 = vsel %vm1762, %v2495, 0
    %v2567 = vsel %vm1762, %v2496, 0
    %v2570 = vsel %vm1762, %v2497, 0
    %v2573 = vsel %vm1762, %v2498, 0
    %v2576 = vsel %vm1762, %v2499, 0
    %v2579 = vsel %vm1762, %v2500, 0
    %v2582 = vsel %vm1762, %v2517, 0
    %v2585 = vsel %vm1762, %v2518, 0
    %v2588 = vsel %vm1762, %v2519, 0
    %v2591 = vsel %vm1762, %v2520, 0
    %v2594 = vsel %vm1762, %v2521, 0
    %v2597 = vsel %vm1762, %v2522, 0
    %v2600 = vsel %vm1762, %v2523, 0
    %v2603 = vsel %vm1762, %v2524, 0
    %v2606 = vsel %vm1762, %v2525, 0
    %v2609 = vsel %vm1762, %v2526, 0
    %v2612 = vsel %vm1762, %v2527, 0
    %v2615 = vsel %vm1762, %v2528, 0
    %v2618 = vsel %vm1762, %v2529, 0
    %v2621 = vsel %vm1762, %v2530, 0
    %v2624 = vsel %vm1762, %v2531, 0
    %v2627 = vsel %vm1762, %v2532, 0
    %2629 = vmatprep.subr.mxu0 0.0
    %2630 = vmatpush1.msra.mxu0 %v1492
    %2631 = vmatprep.subr.mxu0 0.0
    %2632 = vmatpush1.msra.mxu0 %v1560
    %2633 = vmatprep.subr.mxu0 0.0
    %2634 = vmatpush1.msra.mxu0 %v1628
    %2635 = vmatprep.subr.mxu0 0.0
    %2636 = vmatpush1.msra.mxu0 %v1696
    %2637 = vmatprep.subr.mxu0 0.0
    %2638 = vmatpush1.msra.mxu0 0.0
    %2639 = vmatprep.subr.mxu0 0.0
    %2640 = vmatpush1.msra.mxu0 0.0
    %2641 = vmatprep.subr.mxu0 0.0
    %2642 = vmatpush1.msra.mxu0 0.0
    %2643 = vmatprep.subr.mxu0 0.0
    %2644 = vmatpush1.msra.mxu0 0.0
    %2645 = vmatprep.subr.mxu0 0.0
    %2646 = vmatpush1.msra.mxu0 0.0
    %2647 = vmatprep.subr.mxu0 0.0
    %2648 = vmatpush1.msra.mxu0 0.0
    %2649 = vmatprep.subr.mxu0 0.0
    %2650 = vmatpush1.msra.mxu0 0.0
    %2651 = vmatprep.subr.mxu0 0.0
    %2652 = vmatpush1.msra.mxu0 0.0
    %2653 = vmatprep.subr.mxu0 0.0
    %2654 = vmatpush1.msra.mxu0 0.0
    %2655 = vmatprep.subr.mxu0 0.0
    %2656 = vmatpush1.msra.mxu0 0.0
    %2657 = vmatprep.subr.mxu0 0.0
    %2658 = vmatpush1.msra.mxu0 0.0
    %2659 = vmatprep.subr.mxu0 0.0
    %2660 = vmatpush1.msra.mxu0 0.0
    %2661 = vmatprep.subr.mxu0 0.0
    %2662 = vmatpush1.msra.mxu0 0.0
    %2663 = vmatprep.subr.mxu0 0.0
    %2664 = vmatpush1.msra.mxu0 0.0
    %2665 = vmatprep.subr.mxu0 0.0
    %2666 = vmatpush1.msra.mxu0 0.0
    %2667 = vmatprep.subr.mxu0 0.0
    %2668 = vmatpush1.msra.mxu0 0.0
    %2669 = vmatprep.subr.mxu0 0.0
    %2670 = vmatpush1.msra.mxu0 0.0
    %2671 = vmatprep.subr.mxu0 0.0
    %2672 = vmatpush1.msra.mxu0 0.0
    %2673 = vmatprep.subr.mxu0 0.0
    %2674 = vmatpush1.msra.mxu0 0.0
    %2675 = vmatprep.subr.mxu0 0.0
    %2676 = vmatpush1.msra.mxu0 0.0
    %2677 = vmatprep.subr.mxu0 0.0
    %2678 = vmatpush1.msra.mxu0 0.0
    %2679 = vmatprep.subr.mxu0 0.0
    %2680 = vmatpush1.msra.mxu0 0.0
    %2681 = vmatprep.subr.mxu0 0.0
    %2682 = vmatpush1.msra.mxu0 0.0
    %2683 = vmatprep.subr.mxu0 0.0
    %2684 = vmatpush1.msra.mxu0 0.0
    %2685 = vmatprep.subr.mxu0 0.0
    %2686 = vmatpush1.msra.mxu0 0.0
    %2687 = vmatprep.subr.mxu0 0.0
    %2688 = vmatpush1.msra.mxu0 0.0
    %2689 = vmatprep.subr.mxu0 0.0
    %2690 = vmatpush1.msra.mxu0 0.0
    %2691 = vmatprep.subr.mxu0 0.0
    %2692 = vmatpush1.msra.mxu0 0.0
    %2693 = vmatprep.mubr.f32.mxu0 0.0
    %2694 = vmatmul.mubr.f32.gmra.mrb[0].mxu0 %v2534
    %v2695 = vpop.f32.mrb[0].mxu0
    %v2696 = vadd.f32 0.0, %v2695
    %v2697 = vpop.f32.mrb[0].mxu0
    %2698 = vmatprep.mubr.f32.mxu0 0.0
    %2699 = vmatmul.mubr.f32.gmra.mrb[0].mxu0 %v2537
    %v2700 = vpop.f32.mrb[0].mxu0
    %v2701 = vadd.f32 0.0, %v2700
    %v2702 = vpop.f32.mrb[0].mxu0
    %2703 = vmatprep.mubr.f32.mxu0 0.0
    %2704 = vmatmul.mubr.f32.gmra.mrb[0].mxu0 %v2540
    %v2705 = vpop.f32.mrb[0].mxu0
    %v2706 = vadd.f32 0.0, %v2705
    %v2707 = vpop.f32.mrb[0].mxu0
    %2708 = vmatprep.mubr.f32.mxu0 0.0
    %2709 = vmatmul.mubr.f32.gmra.mrb[0].mxu0 %v2543
    %v2710 = vpop.f32.mrb[0].mxu0
    %v2711 = vadd.f32 0.0, %v2710
    %v2712 = vpop.f32.mrb[0].mxu0
    %2713 = vmatprep.mubr.f32.mxu0 0.0
    %2714 = vmatmul.mubr.f32.gmra.mrb[0].mxu0 %v2546
    %v2715 = vpop.f32.mrb[0].mxu0
    %v2716 = vadd.f32 0.0, %v2715
    %v2717 = vpop.f32.mrb[0].mxu0
    %2718 = vmatprep.mubr.f32.mxu0 0.0
    %2719 = vmatmul.mubr.f32.gmra.mrb[0].mxu0 %v2549
    %v2720 = vpop.f32.mrb[0].mxu0
    %v2721 = vadd.f32 0.0, %v2720
    %v2722 = vpop.f32.mrb[0].mxu0
    %2723 = vmatprep.mubr.f32.mxu0 0.0
    %2724 = vmatmul.mubr.f32.gmra.mrb[0].mxu0 %v2552
    %v2725 = vpop.f32.mrb[0].mxu0
    %v2726 = vadd.f32 0.0, %v2725
    %v2727 = vpop.f32.mrb[0].mxu0
    %2728 = vmatprep.mubr.f32.mxu0 0.0
    %2729 = vmatmul.mubr.f32.gmra.mrb[0].mxu0 %v2555
    %v2730 = vpop.f32.mrb[0].mxu0
    %v2731 = vadd.f32 0.0, %v2730
    %v2732 = vpop.f32.mrb[0].mxu0
    %2733 = vmatprep.mubr.f32.mxu0 0.0
    %2734 = vmatmul.mubr.f32.gmra.mrb[0].mxu0 %v2558
    %v2735 = vpop.f32.mrb[0].mxu0
    %v2736 = vadd.f32 0.0, %v2735
    %v2737 = vpop.f32.mrb[0].mxu0
    %2738 = vmatprep.mubr.f32.mxu0 0.0
    %2739 = vmatmul.mubr.f32.gmra.mrb[0].mxu0 %v2561
    %v2740 = vpop.f32.mrb[0].mxu0
    %v2741 = vadd.f32 0.0, %v2740
    %v2742 = vpop.f32.mrb[0].mxu0
    %2743 = vmatprep.mubr.f32.mxu0 0.0
    %2744 = vmatmul.mubr.f32.gmra.mrb[0].mxu0 %v2564
    %v2745 = vpop.f32.mrb[0].mxu0
    %v2746 = vadd.f32 0.0, %v2745
    %v2747 = vpop.f32.mrb[0].mxu0
    %2748 = vmatprep.mubr.f32.mxu0 0.0
    %2749 = vmatmul.mubr.f32.gmra.mrb[0].mxu0 %v2567
    %v2750 = vpop.f32.mrb[0].mxu0
    %v2751 = vadd.f32 0.0, %v2750
    %v2752 = vpop.f32.mrb[0].mxu0
    %2753 = vmatprep.mubr.f32.mxu0 0.0
    %2754 = vmatmul.mubr.f32.gmra.mrb[0].mxu0 %v2570
    %v2755 = vpop.f32.mrb[0].mxu0
    %v2756 = vadd.f32 0.0, %v2755
    %v2757 = vpop.f32.mrb[0].mxu0
    %2758 = vmatprep.mubr.f32.mxu0 0.0
    %2759 = vmatmul.mubr.f32.gmra.mrb[0].mxu0 %v2573
    %v2760 = vpop.f32.mrb[0].mxu0
    %v2761 = vadd.f32 0.0, %v2760
    %v2762 = vpop.f32.mrb[0].mxu0
    %2763 = vmatprep.mubr.f32.mxu0 0.0
    %2764 = vmatmul.mubr.f32.gmra.mrb[0].mxu0 %v2576
    %v2765 = vpop.f32.mrb[0].mxu0
    %v2766 = vadd.f32 0.0, %v2765
    %v2767 = vpop.f32.mrb[0].mxu0
    %2768 = vmatprep.mubr.f32.mxu0 0.0
    %2769 = vmatmul.mubr.f32.gmra.mrb[0].mxu0 %v2579
    %v2770 = vpop.f32.mrb[0].mxu0
    %v2771 = vadd.f32 0.0, %v2770
    %v2772 = vpop.f32.mrb[0].mxu0
    %2773 = vmatprep.mubr.f32.mxu0 0.0
    %2774 = vmatmul.mubr.f32.gmra.mrb[0].mxu0 %v2582
    %v2775 = vpop.f32.mrb[0].mxu0
    %v2776 = vadd.f32 0.0, %v2775
    %v2777 = vpop.f32.mrb[0].mxu0
    %2778 = vmatprep.mubr.f32.mxu0 0.0
    %2779 = vmatmul.mubr.f32.gmra.mrb[0].mxu0 %v2585
    %v2780 = vpop.f32.mrb[0].mxu0
    %v2781 = vadd.f32 0.0, %v2780
    %v2782 = vpop.f32.mrb[0].mxu0
    %2783 = vmatprep.mubr.f32.mxu0 0.0
    %2784 = vmatmul.mubr.f32.gmra.mrb[0].mxu0 %v2588
    %v2785 = vpop.f32.mrb[0].mxu0
    %v2786 = vadd.f32 0.0, %v2785
    %v2787 = vpop.f32.mrb[0].mxu0
    %2788 = vmatprep.mubr.f32.mxu0 0.0
    %2789 = vmatmul.mubr.f32.gmra.mrb[0].mxu0 %v2591
    %v2790 = vpop.f32.mrb[0].mxu0
    %v2791 = vadd.f32 0.0, %v2790
    %v2792 = vpop.f32.mrb[0].mxu0
    %2793 = vmatprep.mubr.f32.mxu0 0.0
    %2794 = vmatmul.mubr.f32.gmra.mrb[0].mxu0 %v2594
    %v2795 = vpop.f32.mrb[0].mxu0
    %v2796 = vadd.f32 0.0, %v2795
    %v2797 = vpop.f32.mrb[0].mxu0
    %2798 = vmatprep.mubr.f32.mxu0 0.0
    %2799 = vmatmul.mubr.f32.gmra.mrb[0].mxu0 %v2597
    %v2800 = vpop.f32.mrb[0].mxu0
    %v2801 = vadd.f32 0.0, %v2800
    %v2802 = vpop.f32.mrb[0].mxu0
    %2803 = vmatprep.mubr.f32.mxu0 0.0
    %2804 = vmatmul.mubr.f32.gmra.mrb[0].mxu0 %v2600
    %v2805 = vpop.f32.mrb[0].mxu0
    %v2806 = vadd.f32 0.0, %v2805
    %v2807 = vpop.f32.mrb[0].mxu0
    %2808 = vmatprep.mubr.f32.mxu0 0.0
    %2809 = vmatmul.mubr.f32.gmra.mrb[0].mxu0 %v2603
    %v2810 = vpop.f32.mrb[0].mxu0
    %v2811 = vadd.f32 0.0, %v2810
    %v2812 = vpop.f32.mrb[0].mxu0
    %2813 = vmatprep.mubr.f32.mxu0 0.0
    %2814 = vmatmul.mubr.f32.gmra.mrb[0].mxu0 %v2606
    %v2815 = vpop.f32.mrb[0].mxu0
    %v2816 = vadd.f32 0.0, %v2815
    %v2817 = vpop.f32.mrb[0].mxu0
    %2818 = vmatprep.mubr.f32.mxu0 0.0
    %2819 = vmatmul.mubr.f32.gmra.mrb[0].mxu0 %v2609
    %v2820 = vpop.f32.mrb[0].mxu0
    %v2821 = vadd.f32 0.0, %v2820
    %v2822 = vpop.f32.mrb[0].mxu0
    %2823 = vmatprep.mubr.f32.mxu0 0.0
    %2824 = vmatmul.mubr.f32.gmra.mrb[0].mxu0 %v2612
    %v2825 = vpop.f32.mrb[0].mxu0
    %v2826 = vadd.f32 0.0, %v2825
    %v2827 = vpop.f32.mrb[0].mxu0
    %2828 = vmatprep.mubr.f32.mxu0 0.0
    %2829 = vmatmul.mubr.f32.gmra.mrb[0].mxu0 %v2615
    %v2830 = vpop.f32.mrb[0].mxu0
    %v2831 = vadd.f32 0.0, %v2830
    %v2832 = vpop.f32.mrb[0].mxu0
    %2833 = vmatprep.mubr.f32.mxu0 0.0
    %2834 = vmatmul.mubr.f32.gmra.mrb[0].mxu0 %v2618
    %v2835 = vpop.f32.mrb[0].mxu0
    %v2836 = vadd.f32 0.0, %v2835
    %v2837 = vpop.f32.mrb[0].mxu0
    %2838 = vmatprep.mubr.f32.mxu0 0.0
    %2839 = vmatmul.mubr.f32.gmra.mrb[0].mxu0 %v2621
    %v2840 = vpop.f32.mrb[0].mxu0
    %v2841 = vadd.f32 0.0, %v2840
    %v2842 = vpop.f32.mrb[0].mxu0
    %2843 = vmatprep.mubr.f32.mxu0 0.0
    %2844 = vmatmul.mubr.f32.gmra.mrb[0].mxu0 %v2624
    %v2845 = vpop.f32.mrb[0].mxu0
    %v2846 = vadd.f32 0.0, %v2845
    %v2847 = vpop.f32.mrb[0].mxu0
    %2848 = vmatprep.mubr.f32.mxu0 0.0
    %2849 = vmatmul.mubr.f32.gmra.mrb[0].mxu0 %v2627
    %v2850 = vpop.f32.mrb[0].mxu0
    %v2851 = vadd.f32 0.0, %v2850
    %v2852 = vpop.f32.mrb[0].mxu0
    %2853 = vdwg.mxu0
    %2854 = vxpose.xlu0.b32.start [1/16] %v66, 128
    %2855 = vxpose.xlu0.b32.cont [2/16] %v68, 128
    %2856 = vxpose.xlu0.b32.cont [3/16] %v70, 128
    %2857 = vxpose.xlu0.b32.cont [4/16] %v72, 128
    %2858 = vxpose.xlu0.b32.cont [5/16] 0.0, 128
    %2859 = vxpose.xlu0.b32.cont [6/16] 0.0, 128
    %2860 = vxpose.xlu0.b32.cont [7/16] 0.0, 128
    %2861 = vxpose.xlu0.b32.cont [8/16] 0.0, 128
    %2862 = vxpose.xlu0.b32.cont [9/16] 0.0, 128
    %2863 = vxpose.xlu0.b32.cont [10/16] 0.0, 128
    %2864 = vxpose.xlu0.b32.cont [11/16] 0.0, 128
    %2865 = vxpose.xlu0.b32.cont [12/16] 0.0, 128
    %2866 = vxpose.xlu0.b32.cont [13/16] 0.0, 128
    %2867 = vxpose.xlu0.b32.cont [14/16] 0.0, 128
    %2868 = vxpose.xlu0.b32.cont [15/16] 0.0, 128
    %2869 = vxpose.xlu0.b32.end [16/16] 0.0, 128
    %v2870 = vpop.trf.xlu0
    %v2871 = vpop.trf.xlu0
    %v2872 = vpop.trf.xlu0
    %v2873 = vpop.trf.xlu0
    %v2874 = vpop.trf.xlu0
    %v2875 = vpop.trf.xlu0
    %v2876 = vpop.trf.xlu0
    %v2877 = vpop.trf.xlu0
    %v2878 = vpop.trf.xlu0
    %v2879 = vpop.trf.xlu0
    %v2880 = vpop.trf.xlu0
    %v2881 = vpop.trf.xlu0
    %v2882 = vpop.trf.xlu0
    %v2883 = vpop.trf.xlu0
    %v2884 = vpop.trf.xlu0
    %v2885 = vpop.trf.xlu0
    %2886 = vxpose.xlu0.b32.start [1/16] %v67, 128
    %2887 = vxpose.xlu0.b32.cont [2/16] %v69, 128
    %2888 = vxpose.xlu0.b32.cont [3/16] %v71, 128
    %2889 = vxpose.xlu0.b32.cont [4/16] %v73, 128
    %2890 = vxpose.xlu0.b32.cont [5/16] 0.0, 128
    %2891 = vxpose.xlu0.b32.cont [6/16] 0.0, 128
    %2892 = vxpose.xlu0.b32.cont [7/16] 0.0, 128
    %2893 = vxpose.xlu0.b32.cont [8/16] 0.0, 128
    %2894 = vxpose.xlu0.b32.cont [9/16] 0.0, 128
    %2895 = vxpose.xlu0.b32.cont [10/16] 0.0, 128
    %2896 = vxpose.xlu0.b32.cont [11/16] 0.0, 128
    %2897 = vxpose.xlu0.b32.cont [12/16] 0.0, 128
    %2898 = vxpose.xlu0.b32.cont [13/16] 0.0, 128
    %2899 = vxpose.xlu0.b32.cont [14/16] 0.0, 128
    %2900 = vxpose.xlu0.b32.cont [15/16] 0.0, 128
    %2901 = vxpose.xlu0.b32.end [16/16] 0.0, 128
    %v2902 = vpop.trf.xlu0
    %v2903 = vpop.trf.xlu0
    %v2904 = vpop.trf.xlu0
    %v2905 = vpop.trf.xlu0
    %v2906 = vpop.trf.xlu0
    %v2907 = vpop.trf.xlu0
    %v2908 = vpop.trf.xlu0
    %v2909 = vpop.trf.xlu0
    %v2910 = vpop.trf.xlu0
    %v2911 = vpop.trf.xlu0
    %v2912 = vpop.trf.xlu0
    %v2913 = vpop.trf.xlu0
    %v2914 = vpop.trf.xlu0
    %v2915 = vpop.trf.xlu0
    %v2916 = vpop.trf.xlu0
    %v2917 = vpop.trf.xlu0
    %v2919 = vsel %vm1762, %v2870, 0
    %v2922 = vsel %vm1762, %v2871, 0
    %v2925 = vsel %vm1762, %v2872, 0
    %v2928 = vsel %vm1762, %v2873, 0
    %v2931 = vsel %vm1762, %v2874, 0
    %v2934 = vsel %vm1762, %v2875, 0
    %v2937 = vsel %vm1762, %v2876, 0
    %v2940 = vsel %vm1762, %v2877, 0
    %v2943 = vsel %vm1762, %v2878, 0
    %v2946 = vsel %vm1762, %v2879, 0
    %v2949 = vsel %vm1762, %v2880, 0
    %v2952 = vsel %vm1762, %v2881, 0
    %v2955 = vsel %vm1762, %v2882, 0
    %v2958 = vsel %vm1762, %v2883, 0
    %v2961 = vsel %vm1762, %v2884, 0
    %v2964 = vsel %vm1762, %v2885, 0
    %v2967 = vsel %vm1762, %v2902, 0
    %v2970 = vsel %vm1762, %v2903, 0
    %v2973 = vsel %vm1762, %v2904, 0
    %v2976 = vsel %vm1762, %v2905, 0
    %v2979 = vsel %vm1762, %v2906, 0
    %v2982 = vsel %vm1762, %v2907, 0
    %v2985 = vsel %vm1762, %v2908, 0
    %v2988 = vsel %vm1762, %v2909, 0
    %v2991 = vsel %vm1762, %v2910, 0
    %v2994 = vsel %vm1762, %v2911, 0
    %v2997 = vsel %vm1762, %v2912, 0
    %v3000 = vsel %vm1762, %v2913, 0
    %v3003 = vsel %vm1762, %v2914, 0
    %v3006 = vsel %vm1762, %v2915, 0
    %v3009 = vsel %vm1762, %v2916, 0
    %v3012 = vsel %vm1762, %v2917, 0
    %3014 = vmatprep.subr.mxu0 0.0
    %3015 = vmatpush1.msra.mxu0 %v1493
    %3016 = vmatprep.subr.mxu0 0.0
    %3017 = vmatpush1.msra.mxu0 %v1561
    %3018 = vmatprep.subr.mxu0 0.0
    %3019 = vmatpush1.msra.mxu0 %v1629
    %3020 = vmatprep.subr.mxu0 0.0
    %3021 = vmatpush1.msra.mxu0 %v1697
    %3022 = vmatprep.subr.mxu0 0.0
    %3023 = vmatpush1.msra.mxu0 0.0
    %3024 = vmatprep.subr.mxu0 0.0
    %3025 = vmatpush1.msra.mxu0 0.0
    %3026 = vmatprep.subr.mxu0 0.0
    %3027 = vmatpush1.msra.mxu0 0.0
    %3028 = vmatprep.subr.mxu0 0.0
    %3029 = vmatpush1.msra.mxu0 0.0
    %3030 = vmatprep.subr.mxu0 0.0
    %3031 = vmatpush1.msra.mxu0 0.0
    %3032 = vmatprep.subr.mxu0 0.0
    %3033 = vmatpush1.msra.mxu0 0.0
    %3034 = vmatprep.subr.mxu0 0.0
    %3035 = vmatpush1.msra.mxu0 0.0
    %3036 = vmatprep.subr.mxu0 0.0
    %3037 = vmatpush1.msra.mxu0 0.0
    %3038 = vmatprep.subr.mxu0 0.0
    %3039 = vmatpush1.msra.mxu0 0.0
    %3040 = vmatprep.subr.mxu0 0.0
    %3041 = vmatpush1.msra.mxu0 0.0
    %3042 = vmatprep.subr.mxu0 0.0
    %3043 = vmatpush1.msra.mxu0 0.0
    %3044 = vmatprep.subr.mxu0 0.0
    %3045 = vmatpush1.msra.mxu0 0.0
    %3046 = vmatprep.subr.mxu0 0.0
    %3047 = vmatpush1.msra.mxu0 0.0
    %3048 = vmatprep.subr.mxu0 0.0
    %3049 = vmatpush1.msra.mxu0 0.0
    %3050 = vmatprep.subr.mxu0 0.0
    %3051 = vmatpush1.msra.mxu0 0.0
    %3052 = vmatprep.subr.mxu0 0.0
    %3053 = vmatpush1.msra.mxu0 0.0
    %3054 = vmatprep.subr.mxu0 0.0
    %3055 = vmatpush1.msra.mxu0 0.0
    %3056 = vmatprep.subr.mxu0 0.0
    %3057 = vmatpush1.msra.mxu0 0.0
    %3058 = vmatprep.subr.mxu0 0.0
    %3059 = vmatpush1.msra.mxu0 0.0
    %3060 = vmatprep.subr.mxu0 0.0
    %3061 = vmatpush1.msra.mxu0 0.0
    %3062 = vmatprep.subr.mxu0 0.0
    %3063 = vmatpush1.msra.mxu0 0.0
    %3064 = vmatprep.subr.mxu0 0.0
    %3065 = vmatpush1.msra.mxu0 0.0
    %3066 = vmatprep.subr.mxu0 0.0
    %3067 = vmatpush1.msra.mxu0 0.0
    %3068 = vmatprep.subr.mxu0 0.0
    %3069 = vmatpush1.msra.mxu0 0.0
    %3070 = vmatprep.subr.mxu0 0.0
    %3071 = vmatpush1.msra.mxu0 0.0
    %3072 = vmatprep.subr.mxu0 0.0
    %3073 = vmatpush1.msra.mxu0 0.0
    %3074 = vmatprep.subr.mxu0 0.0
    %3075 = vmatpush1.msra.mxu0 0.0
    %3076 = vmatprep.subr.mxu0 0.0
    %3077 = vmatpush1.msra.mxu0 0.0
    %3078 = vmatprep.mubr.f32.mxu0 0.0
    %3079 = vmatmul.mubr.f32.gmra.mrb[0].mxu0 %v2919
    %v3080 = vpop.f32.mrb[0].mxu0
    %v3081 = vadd.f32 0.0, %v3080
    %v3082 = vpop.f32.mrb[0].mxu0
    %3083 = vmatprep.mubr.f32.mxu0 0.0
    %3084 = vmatmul.mubr.f32.gmra.mrb[0].mxu0 %v2922
    %v3085 = vpop.f32.mrb[0].mxu0
    %v3086 = vadd.f32 0.0, %v3085
    %v3087 = vpop.f32.mrb[0].mxu0
    %3088 = vmatprep.mubr.f32.mxu0 0.0
    %3089 = vmatmul.mubr.f32.gmra.mrb[0].mxu0 %v2925
    %v3090 = vpop.f32.mrb[0].mxu0
    %v3091 = vadd.f32 0.0, %v3090
    %v3092 = vpop.f32.mrb[0].mxu0
    %3093 = vmatprep.mubr.f32.mxu0 0.0
    %3094 = vmatmul.mubr.f32.gmra.mrb[0].mxu0 %v2928
    %v3095 = vpop.f32.mrb[0].mxu0
    %v3096 = vadd.f32 0.0, %v3095
    %v3097 = vpop.f32.mrb[0].mxu0
    %3098 = vmatprep.mubr.f32.mxu0 0.0
    %3099 = vmatmul.mubr.f32.gmra.mrb[0].mxu0 %v2931
    %v3100 = vpop.f32.mrb[0].mxu0
    %v3101 = vadd.f32 0.0, %v3100
    %v3102 = vpop.f32.mrb[0].mxu0
    %3103 = vmatprep.mubr.f32.mxu0 0.0
    %3104 = vmatmul.mubr.f32.gmra.mrb[0].mxu0 %v2934
    %v3105 = vpop.f32.mrb[0].mxu0
    %v3106 = vadd.f32 0.0, %v3105
    %v3107 = vpop.f32.mrb[0].mxu0
    %3108 = vmatprep.mubr.f32.mxu0 0.0
    %3109 = vmatmul.mubr.f32.gmra.mrb[0].mxu0 %v2937
    %v3110 = vpop.f32.mrb[0].mxu0
    %v3111 = vadd.f32 0.0, %v3110
    %v3112 = vpop.f32.mrb[0].mxu0
    %3113 = vmatprep.mubr.f32.mxu0 0.0
    %3114 = vmatmul.mubr.f32.gmra.mrb[0].mxu0 %v2940
    %v3115 = vpop.f32.mrb[0].mxu0
    %v3116 = vadd.f32 0.0, %v3115
    %v3117 = vpop.f32.mrb[0].mxu0
    %3118 = vmatprep.mubr.f32.mxu0 0.0
    %3119 = vmatmul.mubr.f32.gmra.mrb[0].mxu0 %v2943
    %v3120 = vpop.f32.mrb[0].mxu0
    %v3121 = vadd.f32 0.0, %v3120
    %v3122 = vpop.f32.mrb[0].mxu0
    %3123 = vmatprep.mubr.f32.mxu0 0.0
    %3124 = vmatmul.mubr.f32.gmra.mrb[0].mxu0 %v2946
    %v3125 = vpop.f32.mrb[0].mxu0
    %v3126 = vadd.f32 0.0, %v3125
    %v3127 = vpop.f32.mrb[0].mxu0
    %3128 = vmatprep.mubr.f32.mxu0 0.0
    %3129 = vmatmul.mubr.f32.gmra.mrb[0].mxu0 %v2949
    %v3130 = vpop.f32.mrb[0].mxu0
    %v3131 = vadd.f32 0.0, %v3130
    %v3132 = vpop.f32.mrb[0].mxu0
    %3133 = vmatprep.mubr.f32.mxu0 0.0
    %3134 = vmatmul.mubr.f32.gmra.mrb[0].mxu0 %v2952
    %v3135 = vpop.f32.mrb[0].mxu0
    %v3136 = vadd.f32 0.0, %v3135
    %v3137 = vpop.f32.mrb[0].mxu0
    %3138 = vmatprep.mubr.f32.mxu0 0.0
    %3139 = vmatmul.mubr.f32.gmra.mrb[0].mxu0 %v2955
    %v3140 = vpop.f32.mrb[0].mxu0
    %v3141 = vadd.f32 0.0, %v3140
    %v3142 = vpop.f32.mrb[0].mxu0
    %3143 = vmatprep.mubr.f32.mxu0 0.0
    %3144 = vmatmul.mubr.f32.gmra.mrb[0].mxu0 %v2958
    %v3145 = vpop.f32.mrb[0].mxu0
    %v3146 = vadd.f32 0.0, %v3145
    %v3147 = vpop.f32.mrb[0].mxu0
    %3148 = vmatprep.mubr.f32.mxu0 0.0
    %3149 = vmatmul.mubr.f32.gmra.mrb[0].mxu0 %v2961
    %v3150 = vpop.f32.mrb[0].mxu0
    %v3151 = vadd.f32 0.0, %v3150
    %v3152 = vpop.f32.mrb[0].mxu0
    %3153 = vmatprep.mubr.f32.mxu0 0.0
    %3154 = vmatmul.mubr.f32.gmra.mrb[0].mxu0 %v2964
    %v3155 = vpop.f32.mrb[0].mxu0
    %v3156 = vadd.f32 0.0, %v3155
    %v3157 = vpop.f32.mrb[0].mxu0
    %3158 = vmatprep.mubr.f32.mxu0 0.0
    %3159 = vmatmul.mubr.f32.gmra.mrb[0].mxu0 %v2967
    %v3160 = vpop.f32.mrb[0].mxu0
    %v3161 = vadd.f32 0.0, %v3160
    %v3162 = vpop.f32.mrb[0].mxu0
    %3163 = vmatprep.mubr.f32.mxu0 0.0
    %3164 = vmatmul.mubr.f32.gmra.mrb[0].mxu0 %v2970
    %v3165 = vpop.f32.mrb[0].mxu0
    %v3166 = vadd.f32 0.0, %v3165
    %v3167 = vpop.f32.mrb[0].mxu0
    %3168 = vmatprep.mubr.f32.mxu0 0.0
    %3169 = vmatmul.mubr.f32.gmra.mrb[0].mxu0 %v2973
    %v3170 = vpop.f32.mrb[0].mxu0
    %v3171 = vadd.f32 0.0, %v3170
    %v3172 = vpop.f32.mrb[0].mxu0
    %3173 = vmatprep.mubr.f32.mxu0 0.0
    %3174 = vmatmul.mubr.f32.gmra.mrb[0].mxu0 %v2976
    %v3175 = vpop.f32.mrb[0].mxu0
    %v3176 = vadd.f32 0.0, %v3175
    %v3177 = vpop.f32.mrb[0].mxu0
    %3178 = vmatprep.mubr.f32.mxu0 0.0
    %3179 = vmatmul.mubr.f32.gmra.mrb[0].mxu0 %v2979
    %v3180 = vpop.f32.mrb[0].mxu0
    %v3181 = vadd.f32 0.0, %v3180
    %v3182 = vpop.f32.mrb[0].mxu0
    %3183 = vmatprep.mubr.f32.mxu0 0.0
    %3184 = vmatmul.mubr.f32.gmra.mrb[0].mxu0 %v2982
    %v3185 = vpop.f32.mrb[0].mxu0
    %v3186 = vadd.f32 0.0, %v3185
    %v3187 = vpop.f32.mrb[0].mxu0
    %3188 = vmatprep.mubr.f32.mxu0 0.0
    %3189 = vmatmul.mubr.f32.gmra.mrb[0].mxu0 %v2985
    %v3190 = vpop.f32.mrb[0].mxu0
    %v3191 = vadd.f32 0.0, %v3190
    %v3192 = vpop.f32.mrb[0].mxu0
    %3193 = vmatprep.mubr.f32.mxu0 0.0
    %3194 = vmatmul.mubr.f32.gmra.mrb[0].mxu0 %v2988
    %v3195 = vpop.f32.mrb[0].mxu0
    %v3196 = vadd.f32 0.0, %v3195
    %v3197 = vpop.f32.mrb[0].mxu0
    %3198 = vmatprep.mubr.f32.mxu0 0.0
    %3199 = vmatmul.mubr.f32.gmra.mrb[0].mxu0 %v2991
    %v3200 = vpop.f32.mrb[0].mxu0
    %v3201 = vadd.f32 0.0, %v3200
    %v3202 = vpop.f32.mrb[0].mxu0
    %3203 = vmatprep.mubr.f32.mxu0 0.0
    %3204 = vmatmul.mubr.f32.gmra.mrb[0].mxu0 %v2994
    %v3205 = vpop.f32.mrb[0].mxu0
    %v3206 = vadd.f32 0.0, %v3205
    %v3207 = vpop.f32.mrb[0].mxu0
    %3208 = vmatprep.mubr.f32.mxu0 0.0
    %3209 = vmatmul.mubr.f32.gmra.mrb[0].mxu0 %v2997
    %v3210 = vpop.f32.mrb[0].mxu0
    %v3211 = vadd.f32 0.0, %v3210
    %v3212 = vpop.f32.mrb[0].mxu0
    %3213 = vmatprep.mubr.f32.mxu0 0.0
    %3214 = vmatmul.mubr.f32.gmra.mrb[0].mxu0 %v3000
    %v3215 = vpop.f32.mrb[0].mxu0
    %v3216 = vadd.f32 0.0, %v3215
    %v3217 = vpop.f32.mrb[0].mxu0
    %3218 = vmatprep.mubr.f32.mxu0 0.0
    %3219 = vmatmul.mubr.f32.gmra.mrb[0].mxu0 %v3003
    %v3220 = vpop.f32.mrb[0].mxu0
    %v3221 = vadd.f32 0.0, %v3220
    %v3222 = vpop.f32.mrb[0].mxu0
    %3223 = vmatprep.mubr.f32.mxu0 0.0
    %3224 = vmatmul.mubr.f32.gmra.mrb[0].mxu0 %v3006
    %v3225 = vpop.f32.mrb[0].mxu0
    %v3226 = vadd.f32 0.0, %v3225
    %v3227 = vpop.f32.mrb[0].mxu0
    %3228 = vmatprep.mubr.f32.mxu0 0.0
    %3229 = vmatmul.mubr.f32.gmra.mrb[0].mxu0 %v3009
    %v3230 = vpop.f32.mrb[0].mxu0
    %v3231 = vadd.f32 0.0, %v3230
    %v3232 = vpop.f32.mrb[0].mxu0
    %3233 = vmatprep.mubr.f32.mxu0 0.0
    %3234 = vmatmul.mubr.f32.gmra.mrb[0].mxu0 %v3012
    %v3235 = vpop.f32.mrb[0].mxu0
    %v3236 = vadd.f32 0.0, %v3235
    %v3237 = vpop.f32.mrb[0].mxu0
    %3238 = vdwg.mxu0
    %3239 = vxpose.xlu0.b32.start [1/16] %v1926, 128
    %3240 = vxpose.xlu0.b32.cont [2/16] %v1931, 128
    %3241 = vxpose.xlu0.b32.cont [3/16] %v1936, 128
    %3242 = vxpose.xlu0.b32.cont [4/16] %v1941, 128
    %3243 = vxpose.xlu0.b32.cont [5/16] %v1946, 128
    %3244 = vxpose.xlu0.b32.cont [6/16] %v1951, 128
    %3245 = vxpose.xlu0.b32.cont [7/16] %v1956, 128
    %3246 = vxpose.xlu0.b32.cont [8/16] %v1961, 128
    %3247 = vxpose.xlu0.b32.cont [9/16] %v1966, 128
    %3248 = vxpose.xlu0.b32.cont [10/16] %v1971, 128
    %3249 = vxpose.xlu0.b32.cont [11/16] %v1976, 128
    %3250 = vxpose.xlu0.b32.cont [12/16] %v1981, 128
    %3251 = vxpose.xlu0.b32.cont [13/16] %v1986, 128
    %3252 = vxpose.xlu0.b32.cont [14/16] %v1991, 128
    %3253 = vxpose.xlu0.b32.cont [15/16] %v1996, 128
    %3254 = vxpose.xlu0.b32.end [16/16] %v2001, 128
    %v3255 = vpop.trf.xlu0
    %v3256 = vpop.trf.xlu0
    %v3257 = vpop.trf.xlu0
    %v3258 = vpop.trf.xlu0
    %v3259 = vpop.trf.xlu0
    %v3260 = vpop.trf.xlu0
    %v3261 = vpop.trf.xlu0
    %v3262 = vpop.trf.xlu0
    %v3263 = vpop.trf.xlu0
    %v3264 = vpop.trf.xlu0
    %v3265 = vpop.trf.xlu0
    %v3266 = vpop.trf.xlu0
    %v3267 = vpop.trf.xlu0
    %v3268 = vpop.trf.xlu0
    %v3269 = vpop.trf.xlu0
    %v3270 = vpop.trf.xlu0
    %3271 = vxpose.xlu0.b32.start [1/16] %v2006, 128
    %3272 = vxpose.xlu0.b32.cont [2/16] %v2011, 128
    %3273 = vxpose.xlu0.b32.cont [3/16] %v2016, 128
    %3274 = vxpose.xlu0.b32.cont [4/16] %v2021, 128
    %3275 = vxpose.xlu0.b32.cont [5/16] %v2026, 128
    %3276 = vxpose.xlu0.b32.cont [6/16] %v2031, 128
    %3277 = vxpose.xlu0.b32.cont [7/16] %v2036, 128
    %3278 = vxpose.xlu0.b32.cont [8/16] %v2041, 128
    %3279 = vxpose.xlu0.b32.cont [9/16] %v2046, 128
    %3280 = vxpose.xlu0.b32.cont [10/16] %v2051, 128
    %3281 = vxpose.xlu0.b32.cont [11/16] %v2056, 128
    %3282 = vxpose.xlu0.b32.cont [12/16] %v2061, 128
    %3283 = vxpose.xlu0.b32.cont [13/16] %v2066, 128
    %3284 = vxpose.xlu0.b32.cont [14/16] %v2071, 128
    %3285 = vxpose.xlu0.b32.cont [15/16] %v2076, 128
    %3286 = vxpose.xlu0.b32.end [16/16] %v2081, 128
    %v3287 = vpop.trf.xlu0
    %v3288 = vpop.trf.xlu0
    %v3289 = vpop.trf.xlu0
    %v3290 = vpop.trf.xlu0
    %v3291 = vpop.trf.xlu0
    %v3292 = vpop.trf.xlu0
    %v3293 = vpop.trf.xlu0
    %v3294 = vpop.trf.xlu0
    %v3295 = vpop.trf.xlu0
    %v3296 = vpop.trf.xlu0
    %v3297 = vpop.trf.xlu0
    %v3298 = vpop.trf.xlu0
    %v3299 = vpop.trf.xlu0
    %v3300 = vpop.trf.xlu0
    %v3301 = vpop.trf.xlu0
    %v3302 = vpop.trf.xlu0
    %3303 = vxpose.xlu0.b32.start [1/16] %v2311, 128
    %3304 = vxpose.xlu0.b32.cont [2/16] %v2316, 128
    %3305 = vxpose.xlu0.b32.cont [3/16] %v2321, 128
    %3306 = vxpose.xlu0.b32.cont [4/16] %v2326, 128
    %3307 = vxpose.xlu0.b32.cont [5/16] %v2331, 128
    %3308 = vxpose.xlu0.b32.cont [6/16] %v2336, 128
    %3309 = vxpose.xlu0.b32.cont [7/16] %v2341, 128
    %3310 = vxpose.xlu0.b32.cont [8/16] %v2346, 128
    %3311 = vxpose.xlu0.b32.cont [9/16] %v2351, 128
    %3312 = vxpose.xlu0.b32.cont [10/16] %v2356, 128
    %3313 = vxpose.xlu0.b32.cont [11/16] %v2361, 128
    %3314 = vxpose.xlu0.b32.cont [12/16] %v2366, 128
    %3315 = vxpose.xlu0.b32.cont [13/16] %v2371, 128
    %3316 = vxpose.xlu0.b32.cont [14/16] %v2376, 128
    %3317 = vxpose.xlu0.b32.cont [15/16] %v2381, 128
    %3318 = vxpose.xlu0.b32.end [16/16] %v2386, 128
    %v3319 = vpop.trf.xlu0
    %v3320 = vpop.trf.xlu0
    %v3321 = vpop.trf.xlu0
    %v3322 = vpop.trf.xlu0
    %v3323 = vpop.trf.xlu0
    %v3324 = vpop.trf.xlu0
    %v3325 = vpop.trf.xlu0
    %v3326 = vpop.trf.xlu0
    %v3327 = vpop.trf.xlu0
    %v3328 = vpop.trf.xlu0
    %v3329 = vpop.trf.xlu0
    %v3330 = vpop.trf.xlu0
    %v3331 = vpop.trf.xlu0
    %v3332 = vpop.trf.xlu0
    %v3333 = vpop.trf.xlu0
    %v3334 = vpop.trf.xlu0
    %3335 = vxpose.xlu0.b32.start [1/16] %v2391, 128
    %3336 = vxpose.xlu0.b32.cont [2/16] %v2396, 128
    %3337 = vxpose.xlu0.b32.cont [3/16] %v2401, 128
    %3338 = vxpose.xlu0.b32.cont [4/16] %v2406, 128
    %3339 = vxpose.xlu0.b32.cont [5/16] %v2411, 128
    %3340 = vxpose.xlu0.b32.cont [6/16] %v2416, 128
    %3341 = vxpose.xlu0.b32.cont [7/16] %v2421, 128
    %3342 = vxpose.xlu0.b32.cont [8/16] %v2426, 128
    %3343 = vxpose.xlu0.b32.cont [9/16] %v2431, 128
    %3344 = vxpose.xlu0.b32.cont [10/16] %v2436, 128
    %3345 = vxpose.xlu0.b32.cont [11/16] %v2441, 128
    %3346 = vxpose.xlu0.b32.cont [12/16] %v2446, 128
    %3347 = vxpose.xlu0.b32.cont [13/16] %v2451, 128
    %3348 = vxpose.xlu0.b32.cont [14/16] %v2456, 128
    %3349 = vxpose.xlu0.b32.cont [15/16] %v2461, 128
    %3350 = vxpose.xlu0.b32.end [16/16] %v2466, 128
    %v3351 = vpop.trf.xlu0
    %v3352 = vpop.trf.xlu0
    %v3353 = vpop.trf.xlu0
    %v3354 = vpop.trf.xlu0
    %v3355 = vpop.trf.xlu0
    %v3356 = vpop.trf.xlu0
    %v3357 = vpop.trf.xlu0
    %v3358 = vpop.trf.xlu0
    %v3359 = vpop.trf.xlu0
    %v3360 = vpop.trf.xlu0
    %v3361 = vpop.trf.xlu0
    %v3362 = vpop.trf.xlu0
    %v3363 = vpop.trf.xlu0
    %v3364 = vpop.trf.xlu0
    %v3365 = vpop.trf.xlu0
    %v3366 = vpop.trf.xlu0
    %3367 = vxpose.xlu0.b32.start [1/16] %v2696, 128
    %3368 = vxpose.xlu0.b32.cont [2/16] %v2701, 128
    %3369 = vxpose.xlu0.b32.cont [3/16] %v2706, 128
    %3370 = vxpose.xlu0.b32.cont [4/16] %v2711, 128
    %3371 = vxpose.xlu0.b32.cont [5/16] %v2716, 128
    %3372 = vxpose.xlu0.b32.cont [6/16] %v2721, 128
    %3373 = vxpose.xlu0.b32.cont [7/16] %v2726, 128
    %3374 = vxpose.xlu0.b32.cont [8/16] %v2731, 128
    %3375 = vxpose.xlu0.b32.cont [9/16] %v2736, 128
    %3376 = vxpose.xlu0.b32.cont [10/16] %v2741, 128
    %3377 = vxpose.xlu0.b32.cont [11/16] %v2746, 128
    %3378 = vxpose.xlu0.b32.cont [12/16] %v2751, 128
    %3379 = vxpose.xlu0.b32.cont [13/16] %v2756, 128
    %3380 = vxpose.xlu0.b32.cont [14/16] %v2761, 128
    %3381 = vxpose.xlu0.b32.cont [15/16] %v2766, 128
    %3382 = vxpose.xlu0.b32.end [16/16] %v2771, 128
    %v3383 = vpop.trf.xlu0
    %v3384 = vpop.trf.xlu0
    %v3385 = vpop.trf.xlu0
    %v3386 = vpop.trf.xlu0
    %v3387 = vpop.trf.xlu0
    %v3388 = vpop.trf.xlu0
    %v3389 = vpop.trf.xlu0
    %v3390 = vpop.trf.xlu0
    %v3391 = vpop.trf.xlu0
    %v3392 = vpop.trf.xlu0
    %v3393 = vpop.trf.xlu0
    %v3394 = vpop.trf.xlu0
    %v3395 = vpop.trf.xlu0
    %v3396 = vpop.trf.xlu0
    %v3397 = vpop.trf.xlu0
    %v3398 = vpop.trf.xlu0
    %3399 = vxpose.xlu0.b32.start [1/16] %v2776, 128
    %3400 = vxpose.xlu0.b32.cont [2/16] %v2781, 128
    %3401 = vxpose.xlu0.b32.cont [3/16] %v2786, 128
    %3402 = vxpose.xlu0.b32.cont [4/16] %v2791, 128
    %3403 = vxpose.xlu0.b32.cont [5/16] %v2796, 128
    %3404 = vxpose.xlu0.b32.cont [6/16] %v2801, 128
    %3405 = vxpose.xlu0.b32.cont [7/16] %v2806, 128
    %3406 = vxpose.xlu0.b32.cont [8/16] %v2811, 128
    %3407 = vxpose.xlu0.b32.cont [9/16] %v2816, 128
    %3408 = vxpose.xlu0.b32.cont [10/16] %v2821, 128
    %3409 = vxpose.xlu0.b32.cont [11/16] %v2826, 128
    %3410 = vxpose.xlu0.b32.cont [12/16] %v2831, 128
    %3411 = vxpose.xlu0.b32.cont [13/16] %v2836, 128
    %3412 = vxpose.xlu0.b32.cont [14/16] %v2841, 128
    %3413 = vxpose.xlu0.b32.cont [15/16] %v2846, 128
    %3414 = vxpose.xlu0.b32.end [16/16] %v2851, 128
    %v3415 = vpop.trf.xlu0
    %v3416 = vpop.trf.xlu0
    %v3417 = vpop.trf.xlu0
    %v3418 = vpop.trf.xlu0
    %v3419 = vpop.trf.xlu0
    %v3420 = vpop.trf.xlu0
    %v3421 = vpop.trf.xlu0
    %v3422 = vpop.trf.xlu0
    %v3423 = vpop.trf.xlu0
    %v3424 = vpop.trf.xlu0
    %v3425 = vpop.trf.xlu0
    %v3426 = vpop.trf.xlu0
    %v3427 = vpop.trf.xlu0
    %v3428 = vpop.trf.xlu0
    %v3429 = vpop.trf.xlu0
    %v3430 = vpop.trf.xlu0
    %3431 = vxpose.xlu0.b32.start [1/16] %v3081, 128
    %3432 = vxpose.xlu0.b32.cont [2/16] %v3086, 128
    %3433 = vxpose.xlu0.b32.cont [3/16] %v3091, 128
    %3434 = vxpose.xlu0.b32.cont [4/16] %v3096, 128
    %3435 = vxpose.xlu0.b32.cont [5/16] %v3101, 128
    %3436 = vxpose.xlu0.b32.cont [6/16] %v3106, 128
    %3437 = vxpose.xlu0.b32.cont [7/16] %v3111, 128
    %3438 = vxpose.xlu0.b32.cont [8/16] %v3116, 128
    %3439 = vxpose.xlu0.b32.cont [9/16] %v3121, 128
    %3440 = vxpose.xlu0.b32.cont [10/16] %v3126, 128
    %3441 = vxpose.xlu0.b32.cont [11/16] %v3131, 128
    %3442 = vxpose.xlu0.b32.cont [12/16] %v3136, 128
    %3443 = vxpose.xlu0.b32.cont [13/16] %v3141, 128
    %3444 = vxpose.xlu0.b32.cont [14/16] %v3146, 128
    %3445 = vxpose.xlu0.b32.cont [15/16] %v3151, 128
    %3446 = vxpose.xlu0.b32.end [16/16] %v3156, 128
    %v3447 = vpop.trf.xlu0
    %v3448 = vpop.trf.xlu0
    %v3449 = vpop.trf.xlu0
    %v3450 = vpop.trf.xlu0
    %v3451 = vpop.trf.xlu0
    %v3452 = vpop.trf.xlu0
    %v3453 = vpop.trf.xlu0
    %v3454 = vpop.trf.xlu0
    %v3455 = vpop.trf.xlu0
    %v3456 = vpop.trf.xlu0
    %v3457 = vpop.trf.xlu0
    %v3458 = vpop.trf.xlu0
    %v3459 = vpop.trf.xlu0
    %v3460 = vpop.trf.xlu0
    %v3461 = vpop.trf.xlu0
    %v3462 = vpop.trf.xlu0
    %3463 = vxpose.xlu0.b32.start [1/16] %v3161, 128
    %3464 = vxpose.xlu0.b32.cont [2/16] %v3166, 128
    %3465 = vxpose.xlu0.b32.cont [3/16] %v3171, 128
    %3466 = vxpose.xlu0.b32.cont [4/16] %v3176, 128
    %3467 = vxpose.xlu0.b32.cont [5/16] %v3181, 128
    %3468 = vxpose.xlu0.b32.cont [6/16] %v3186, 128
    %3469 = vxpose.xlu0.b32.cont [7/16] %v3191, 128
    %3470 = vxpose.xlu0.b32.cont [8/16] %v3196, 128
    %3471 = vxpose.xlu0.b32.cont [9/16] %v3201, 128
    %3472 = vxpose.xlu0.b32.cont [10/16] %v3206, 128
    %3473 = vxpose.xlu0.b32.cont [11/16] %v3211, 128
    %3474 = vxpose.xlu0.b32.cont [12/16] %v3216, 128
    %3475 = vxpose.xlu0.b32.cont [13/16] %v3221, 128
    %3476 = vxpose.xlu0.b32.cont [14/16] %v3226, 128
    %3477 = vxpose.xlu0.b32.cont [15/16] %v3231, 128
    %3478 = vxpose.xlu0.b32.end [16/16] %v3236, 128
    %v3479 = vpop.trf.xlu0
    %v3480 = vpop.trf.xlu0
    %v3481 = vpop.trf.xlu0
    %v3482 = vpop.trf.xlu0
    %v3483 = vpop.trf.xlu0
    %v3484 = vpop.trf.xlu0
    %v3485 = vpop.trf.xlu0
    %v3486 = vpop.trf.xlu0
    %v3487 = vpop.trf.xlu0
    %v3488 = vpop.trf.xlu0
    %v3489 = vpop.trf.xlu0
    %v3490 = vpop.trf.xlu0
    %v3491 = vpop.trf.xlu0
    %v3492 = vpop.trf.xlu0
    %v3493 = vpop.trf.xlu0
    %v3494 = vpop.trf.xlu0
    %v3495 = vcombine.low %v3255, %v3383
    %v3497 = vunpack.c.l.s4 1983009808
    %v3498 = vunpack.c.0.s8 %v3497
    %v3499 = vlaneseq
    %v3500 = vshrl.u32 %v3499, 7
    %v3501 = vsub.s32 %v3498, %v3500
    %v3502 = vrot.slane %v3495, %v3501
    %v3503 = vcombine.low %v3319, %v3447
    %v3505 = vunpack.c.l.s4 1983009808
    %v3506 = vunpack.c.0.s8 %v3505
    %v3507 = vlaneseq
    %v3508 = vshrl.u32 %v3507, 7
    %v3509 = vsub.s32 %v3506, %v3508
    %v3510 = vrot.slane %v3503, %v3509
    %v3511 = vcombine.low %v3502, %v3510
    %v3513 = vunpack.c.l.s4 1934713408
    %v3514 = vunpack.c.0.s8 %v3513
    %v3515 = vlaneseq
    %v3516 = vshrl.u32 %v3515, 7
    %v3517 = vsub.s32 %v3514, %v3516
    %v3518 = vrot.slane %v3511, %v3517
    %v3519 = vcombine.high %v3518, 0.0
    %v3520 = vcombine.low %v3287, %v3415
    %v3522 = vunpack.c.l.s4 1983009808
    %v3523 = vunpack.c.0.s8 %v3522
    %v3524 = vlaneseq
    %v3525 = vshrl.u32 %v3524, 7
    %v3526 = vsub.s32 %v3523, %v3525
    %v3527 = vrot.slane %v3520, %v3526
    %v3528 = vcombine.low %v3351, %v3479
    %v3530 = vunpack.c.l.s4 1983009808
    %v3531 = vunpack.c.0.s8 %v3530
    %v3532 = vlaneseq
    %v3533 = vshrl.u32 %v3532, 7
    %v3534 = vsub.s32 %v3531, %v3533
    %v3535 = vrot.slane %v3528, %v3534
    %v3536 = vcombine.low %v3527, %v3535
    %v3538 = vunpack.c.l.s4 1934713408
    %v3539 = vunpack.c.0.s8 %v3538
    %v3540 = vlaneseq
    %v3541 = vshrl.u32 %v3540, 7
    %v3542 = vsub.s32 %v3539, %v3541
    %v3543 = vrot.slane %v3536, %v3542
    %v3544 = vcombine.high %v3543, 0.0
    %v3549 = vcombine.low %v3518, %v3543
    %v3550 = vcombine.low %v3519, %v3544
    %3553 = vst [vmem:[#allocation7] sm:$0xff] %v3549
    %3554 = vst [vmem:[#allocation7 + $0x8] sm:$0xff] %v3550
    // Predicated region
    $region18: #{tpu_custom_call.1} parent=1 // pred_check
      _
    $region19: #{tpu_custom_call.1} parent=1 // pred_check_branch
      %3556 = sbr.rel (0) target = $region21
    $region20: #{tpu_custom_call.1} parent=1 // pred_region
      %s3558 = ssub.s32 256, 256
      %3559 = vsyncadd [#allocation4], %s3558
      %s3560 = sshll.u32 [#allocation7], 4
      %s3561 = int_to_ptr.vmem [resolvable:$true] %s3560
      %3566 = dma.vmem_to_hbm [thread:$0]  %s3561, 256, %s2, [#allocation4], 128, 128, 8
    $region21: #{tpu_custom_call.1} parent=1 // pred_fallthru
      _
    // Predicated region
    $region22: #{tpu_custom_call.1} parent=1 // pred_check
      _
    $region23: #{tpu_custom_call.1} parent=1 // pred_check_branch
      %3568 = sbr.rel (0) target = $region25
    $region24: #{tpu_custom_call.1} parent=1 // pred_region
      %3569 = dma.done [#allocation4], 256
    $region25: #{tpu_custom_call.1} parent=1 // pred_fallthru
      _
    %3570 = vsyncpa [#allocation3], 1
    %3571 = vsyncpa [#allocation6], 1
    %3572 = vsyncpa [#allocation4], 1

</llo_original>
